<compile_context>
chip_gen: v5e
topology: v5e:2x2
jax: 0.10.0
libtpu: 0.0.40
codegen_flags: <defaults>
</compile_context>

<pallas_src>
import jax
import jax.numpy as jnp
from jax.experimental import pallas as pl
from jax.experimental.pallas import tpu as pltpu

LRELU_SLOPE = 0.2
BN_EPS = 1e-5


def _leaky_relu(x):
    return jnp.where(x >= 0, x, LRELU_SLOPE * x)


def _conv3x3_vpu(x, w):
    """Valid 3x3 conv for tiny Cin, done on the VPU (no reshapes, no MXU).

    x: (1, H, W, Cin) fp32, w: (3, 3, Cin, Cout) fp32 -> (1, H-2, W-2, Cout) fp32
    """
    _, H, W, Cin = x.shape
    Cout = w.shape[-1]
    Ho, Wo = H - 2, W - 2
    acc = jnp.zeros((1, Ho, Wo, Cout), jnp.float32)
    for di in range(3):
        for dj in range(3):
            window = x[:, di:di + Ho, dj:dj + Wo, :]          # (1, Ho, Wo, Cin)
            for ci in range(Cin):
                acc = acc + window[:, :, :, ci:ci + 1] * w[di, dj, ci].reshape(1, 1, 1, Cout)
    return acc


def _conv3x3_mxu(x, wmat):
    """Valid 3x3 conv as ONE bf16 im2col matmul with K = 9*Cin.

    x: (1, H, W, Cin) fp32/bf16, wmat: (9*Cin, Cout) bf16 (taps flattened in
    (di, dj, cin) order) -> (1, H-2, W-2, Cout) fp32.
    """
    _, H, W, Cin = x.shape
    Cout = wmat.shape[-1]
    Ho, Wo = H - 2, W - 2
    xb = x.astype(jnp.bfloat16)
    # One lane-axis concat of the 9 shifted windows, one collapse reshape,
    # one long-K MXU matmul (fp32 accumulation).
    cols = [xb[:, di:di + Ho, dj:dj + Wo, :] for di in range(3) for dj in range(3)]
    patches = jnp.concatenate(cols, axis=-1)                  # (1, Ho, Wo, 9*Cin)
    lhs = patches.reshape(Ho * Wo, 9 * Cin)
    out = jnp.dot(lhs, wmat, preferred_element_type=jnp.float32)   # (Ho*Wo, Cout) fp32
    return out.reshape(1, Ho, Wo, Cout)


# ------------- stage 1: conv1 + bias + lrelu, conv2, per-item BN stats -------------
def stage1_kernel(x_ref, w1_ref, b1_ref, w2_ref, h2_ref, sum_ref, sq_ref):
    x = x_ref[...].astype(jnp.float32)                        # (1, H, W, Cin)

    h1 = _conv3x3_vpu(x, w1_ref[...])                         # (1, H-2, W-2, 64) fp32
    h1 = _leaky_relu(h1 + b1_ref[...].reshape(1, 1, 1, -1))

    h2 = _conv3x3_mxu(h1, w2_ref[...])                        # (1, H-4, W-4, 128) fp32
    h2_ref[...] = h2.astype(h2_ref.dtype)

    # per-batch-item channel sums for the two-pass BatchNorm (kept in fp32)
    s = jnp.sum(h2, axis=(0, 1, 2), keepdims=True)            # (1, 1, 1, C2)
    ss = jnp.sum(h2 * h2, axis=(0, 1, 2), keepdims=True)
    sum_ref[...] = s.reshape(1, 1, -1)
    sq_ref[...] = ss.reshape(1, 1, -1)


# ------------- stage 2: BN affine + lrelu + conv3 (Cout = 1, VPU/XLU) -------------
def stage2_kernel(h2_ref, scale_ref, shift_ref, w3_ref, o_ref):
    y = h2_ref[...].astype(jnp.float32)                       # (1, H2, W2, C2)
    y = _leaky_relu(y * scale_ref[...].reshape(1, 1, 1, -1)
                    + shift_ref[...].reshape(1, 1, 1, -1))

    _, H2, W2, C2 = y.shape
    Ho, Wo = H2 - 2, W2 - 2
    w3 = w3_ref[...]                                          # (9, C2) fp32

    # Cout == 1: accumulate the 9 taps with VPU FMAs, reduce channels (lanes)
    # once at the end, store a lane-dense (1, Ho, Wo) block (no trailing 1).
    acc = y[:, 0:Ho, 0:Wo, :] * w3[0].reshape(1, 1, 1, C2)
    for di in range(3):
        for dj in range(3):
            if di == 0 and dj == 0:
                continue
            acc = acc + y[:, di:di + Ho, dj:dj + Wo, :] * w3[di * 3 + dj].reshape(1, 1, 1, C2)
    o_ref[...] = jnp.sum(acc, axis=-1).astype(o_ref.dtype)    # (1, Ho, Wo)


def discriminator_forward(x_nchw, params):
    """x_nchw: (N, Cin, H, W) fp32 -> (N, 1, H-6, W-6) fp32 (PyTorch NCHW)."""
    w1, b1, w2, gamma, beta, w3 = params
    N, Cin, H, W = x_nchw.shape
    C1 = w1.shape[-1]                       # 64
    C2 = w2.shape[-1]                       # 128
    Ho2, Wo2 = H - 4, W - 4                 # after conv1+conv2
    Ho3, Wo3 = H - 6, W - 6                 # after conv3

    x = jnp.transpose(x_nchw, (0, 2, 3, 1)).astype(jnp.float32)      # NHWC

    # Flatten conv2/conv3 weights to im2col / per-tap form once, outside the
    # kernels.  MXU weights in bf16; everything else stays fp32.
    w2m = w2.reshape(9 * C1, C2).astype(jnp.bfloat16)                 # (576, 128)
    w3m = w3.reshape(9, C2).astype(jnp.float32)                       # (9, 128)

    cparams = pltpu.CompilerParams(
        dimension_semantics=("parallel",),            # batch axis -> both TCs on v7x
        vmem_limit_bytes=48 * 1024 * 1024,
    )

    def per_batch(block_shape):
        nd = len(block_shape)
        return pl.BlockSpec(block_shape, lambda n, _nd=nd: (n,) + (0,) * (_nd - 1))

    def full(shape):
        nd = len(shape)
        return pl.BlockSpec(tuple(shape), lambda n, _nd=nd: (0,) * _nd)

    # ---- stage 1: conv1 -> lrelu -> conv2, plus per-item BN statistics ----
    h2, sums, sqs = pl.pallas_call(
        stage1_kernel,
        grid=(N,),
        in_specs=[per_batch((1, H, W, Cin)),
                  full(w1.shape), full(b1.shape), full(w2m.shape)],
        out_specs=(per_batch((1, Ho2, Wo2, C2)),
                   per_batch((1, 1, C2)),
                   per_batch((1, 1, C2))),
        out_shape=(jax.ShapeDtypeStruct((N, Ho2, Wo2, C2), jnp.float32),
                   jax.ShapeDtypeStruct((N, 1, C2), jnp.float32),
                   jax.ShapeDtypeStruct((N, 1, C2), jnp.float32)),
        compiler_params=cparams,
    )(x, w1, b1, w2m)

    # ---- batch statistics (training-mode BatchNorm: biased variance over N,H,W),
    #      folded into a per-channel scale/shift (tiny fp32 math, done host-side of
    #      the kernels so the spatial grid stays independent) ----
    cnt = jnp.float32(N * Ho2 * Wo2)
    mean = jnp.sum(sums, axis=(0, 1)) / cnt                            # (C2,)
    var = jnp.maximum(jnp.sum(sqs, axis=(0, 1)) / cnt - mean * mean, 0.0)
    inv = jax.lax.rsqrt(var + BN_EPS)
    scale = (gamma.reshape(-1) * inv).reshape(1, C2)
    shift = (beta.reshape(-1) - mean * gamma.reshape(-1) * inv).reshape(1, C2)

    # ---- stage 2: BN affine + lrelu + conv3 (Cout = 1), lane-dense output ----
    out = pl.pallas_call(
        stage2_kernel,
        grid=(N,),
        in_specs=[per_batch((1, Ho2, Wo2, C2)),
                  full(scale.shape), full(shift.shape), full(w3m.shape)],
        out_specs=per_batch((1, Ho3, Wo3)),
        out_shape=jax.ShapeDtypeStruct((N, Ho3, Wo3), jnp.float32),
        compiler_params=cparams,
    )(h2, scale, shift, w3m)

    return out[:, None, :, :]                                          # (N, 1, Ho3, Wo3)


def _reference_forward(x_nchw, params):
    """Pure-JAX fp32 reference (for a relaxed-tolerance self-check)."""
    w1, b1, w2, gamma, beta, w3 = params
    x = jnp.transpose(x_nchw, (0, 2, 3, 1)).astype(jnp.float32)

    def conv(v, w):
        return jax.lax.conv_general_dilated(
            v, w, window_strides=(1, 1), padding="VALID",
            dimension_numbers=("NHWC", "HWIO", "NHWC"),
            precision=jax.lax.Precision.HIGHEST,
            preferred_element_type=jnp.float32)

    h = conv(x, w1) + b1.reshape(1, 1, 1, -1)
    h = jnp.where(h >= 0, h, LRELU_SLOPE * h)
    h = conv(h, w2)
    m = jnp.mean(h, axis=(0, 1, 2), keepdims=True)
    v = jnp.mean((h - m) ** 2, axis=(0, 1, 2), keepdims=True)     # biased (training mode)
    h = (h - m) * jax.lax.rsqrt(v + BN_EPS)
    h = h * gamma.reshape(1, 1, 1, -1) + beta.reshape(1, 1, 1, -1)
    h = jnp.where(h >= 0, h, LRELU_SLOPE * h)
    h = conv(h, w3)
    return jnp.transpose(h, (0, 3, 1, 2))


def init_params(key, in_channels=2, ndf=64):
    """Deterministic synthetic parameters (shapes match the nn.Module, HWIO)."""
    k1, k2, k3, k4 = jax.random.split(key, 4)
    w1 = jax.random.normal(k1, (3, 3, in_channels, ndf), jnp.float32) * 0.1
    b1 = jax.random.normal(k2, (1, ndf), jnp.float32) * 0.1
    w2 = jax.random.normal(k3, (3, 3, ndf, ndf * 2), jnp.float32) * 0.05
    gamma = jnp.ones((1, ndf * 2), jnp.float32)     # BatchNorm weight init
    beta = jnp.zeros((1, ndf * 2), jnp.float32)     # BatchNorm bias init
    w3 = jax.random.normal(k4, (3, 3, ndf * 2, 1), jnp.float32) * 0.05
    return (w1, b1, w2, gamma, beta, w3)


if __name__ == "__main__":
    key = jax.random.PRNGKey(0)
    pkey, xkey = jax.random.split(key)
    params = init_params(pkey, in_channels=2, ndf=64)

    # small deterministic input: N=2, C=2, H=W=16 (PyTorch NCHW convention)
    x = jax.random.normal(xkey, (2, 2, 16, 16), jnp.float32)

    y = jax.jit(discriminator_forward)(x, params)
    y = jax.block_until_ready(y)
    assert y.shape == (2, 1, 10, 10), y.shape
    assert bool(jnp.all(jnp.isfinite(y)))

    # relaxed-tolerance check vs fp32 reference (conv2 runs in bf16 on the MXU)
    y_ref = _reference_forward(x, params)
    err = float(jnp.max(jnp.abs(y - y_ref)))
    assert err < 0.25, f"max abs error vs fp32 reference: {err}"

    print("KERNEL_OK")
</pallas_src>

<mosaic_0001>
module attributes {stable_mosaic.version = 11 : i64} {
  func.func @stage1_kernel(%arg0: i32, %arg1: memref<1x16x16x2xf32, #tpu.memory_space<vmem>>, %arg2: memref<3x3x2x64xf32, #tpu.memory_space<vmem>>, %arg3: memref<1x64xf32, #tpu.memory_space<vmem>>, %arg4: memref<576x128xbf16, #tpu.memory_space<vmem>>, %arg5: memref<1x12x12x128xf32, #tpu.memory_space<vmem>>, %arg6: memref<1x1x128xf32, #tpu.memory_space<vmem>>, %arg7: memref<1x1x128xf32, #tpu.memory_space<vmem>>) attributes {dimension_semantics = [#tpu.dimension_semantics<parallel>], iteration_bounds = array<i64: 2>, scalar_prefetch = 0 : i64, scratch_operands = 0 : i64, tpu.core_type = #tpu.core_type<tc>, window_params = [{transform_indices = @transform_0, window_bounds = array<i64: 1, 16, 16, 2>}, {pipeline_mode = #tpu.pipeline_mode<synchronous>, transform_indices = @transform_1, window_bounds = array<i64: 3, 3, 2, 64>}, {pipeline_mode = #tpu.pipeline_mode<synchronous>, transform_indices = @transform_2, window_bounds = array<i64: 1, 64>}, {pipeline_mode = #tpu.pipeline_mode<synchronous>, transform_indices = @transform_3, window_bounds = array<i64: 576, 128>}, {transform_indices = @transform_4, window_bounds = array<i64: 1, 12, 12, 128>}, {transform_indices = @transform_5, window_bounds = array<i64: 1, 1, 128>}, {transform_indices = @transform_6, window_bounds = array<i64: 1, 1, 128>}]} {
    %c0 = arith.constant 0 : index
    %c0_0 = arith.constant 0 : index
    %c0_1 = arith.constant 0 : index
    %c0_2 = arith.constant 0 : index
    %0 = vector.load %arg1[%c0, %c0_0, %c0_1, %c0_2] : memref<1x16x16x2xf32, #tpu.memory_space<vmem>>, vector<1x16x16x2xf32>
    %c0_3 = arith.constant 0 : index
    %c0_4 = arith.constant 0 : index
    %c0_5 = arith.constant 0 : index
    %c0_6 = arith.constant 0 : index
    %1 = vector.load %arg2[%c0_3, %c0_4, %c0_5, %c0_6] : memref<3x3x2x64xf32, #tpu.memory_space<vmem>>, vector<3x3x2x64xf32>
    %cst = arith.constant 0.000000e+00 : f32
    %2 = vector.broadcast %cst : f32 to vector<1x14x14x64xf32>
    %3 = vector.extract_strided_slice %0 {offsets = [0, 0, 0, 0], sizes = [1, 14, 14, 2], strides = [1, 1, 1, 1]} : vector<1x16x16x2xf32> to vector<1x14x14x2xf32>
    %4 = vector.extract_strided_slice %3 {offsets = [0, 0, 0, 0], sizes = [1, 14, 14, 1], strides = [1, 1, 1, 1]} : vector<1x14x14x2xf32> to vector<1x14x14x1xf32>
    %5 = vector.extract_strided_slice %1 {offsets = [0, 0, 0, 0], sizes = [1, 1, 1, 64], strides = [1, 1, 1, 1]} : vector<3x3x2x64xf32> to vector<1x1x1x64xf32>
    %6 = vector.shape_cast %5 : vector<1x1x1x64xf32> to vector<64xf32>
    %7 = vector.shape_cast %6 : vector<64xf32> to vector<1x1x1x64xf32>
    %8 = vector.broadcast %4 : vector<1x14x14x1xf32> to vector<1x14x14x64xf32>
    %9 = vector.broadcast %7 : vector<1x1x1x64xf32> to vector<1x14x14x64xf32>
    %10 = arith.mulf %8, %9 : vector<1x14x14x64xf32>
    %11 = arith.addf %2, %10 : vector<1x14x14x64xf32>
    %12 = vector.extract_strided_slice %3 {offsets = [0, 0, 0, 1], sizes = [1, 14, 14, 1], strides = [1, 1, 1, 1]} : vector<1x14x14x2xf32> to vector<1x14x14x1xf32>
    %13 = vector.extract_strided_slice %1 {offsets = [0, 0, 1, 0], sizes = [1, 1, 1, 64], strides = [1, 1, 1, 1]} : vector<3x3x2x64xf32> to vector<1x1x1x64xf32>
    %14 = vector.shape_cast %13 : vector<1x1x1x64xf32> to vector<64xf32>
    %15 = vector.shape_cast %14 : vector<64xf32> to vector<1x1x1x64xf32>
    %16 = vector.broadcast %12 : vector<1x14x14x1xf32> to vector<1x14x14x64xf32>
    %17 = vector.broadcast %15 : vector<1x1x1x64xf32> to vector<1x14x14x64xf32>
    %18 = arith.mulf %16, %17 : vector<1x14x14x64xf32>
    %19 = arith.addf %11, %18 : vector<1x14x14x64xf32>
    %20 = vector.extract_strided_slice %0 {offsets = [0, 0, 1, 0], sizes = [1, 14, 14, 2], strides = [1, 1, 1, 1]} : vector<1x16x16x2xf32> to vector<1x14x14x2xf32>
    %21 = vector.extract_strided_slice %20 {offsets = [0, 0, 0, 0], sizes = [1, 14, 14, 1], strides = [1, 1, 1, 1]} : vector<1x14x14x2xf32> to vector<1x14x14x1xf32>
    %22 = vector.extract_strided_slice %1 {offsets = [0, 1, 0, 0], sizes = [1, 1, 1, 64], strides = [1, 1, 1, 1]} : vector<3x3x2x64xf32> to vector<1x1x1x64xf32>
    %23 = vector.shape_cast %22 : vector<1x1x1x64xf32> to vector<64xf32>
    %24 = vector.shape_cast %23 : vector<64xf32> to vector<1x1x1x64xf32>
    %25 = vector.broadcast %21 : vector<1x14x14x1xf32> to vector<1x14x14x64xf32>
    %26 = vector.broadcast %24 : vector<1x1x1x64xf32> to vector<1x14x14x64xf32>
    %27 = arith.mulf %25, %26 : vector<1x14x14x64xf32>
    %28 = arith.addf %19, %27 : vector<1x14x14x64xf32>
    %29 = vector.extract_strided_slice %20 {offsets = [0, 0, 0, 1], sizes = [1, 14, 14, 1], strides = [1, 1, 1, 1]} : vector<1x14x14x2xf32> to vector<1x14x14x1xf32>
    %30 = vector.extract_strided_slice %1 {offsets = [0, 1, 1, 0], sizes = [1, 1, 1, 64], strides = [1, 1, 1, 1]} : vector<3x3x2x64xf32> to vector<1x1x1x64xf32>
    %31 = vector.shape_cast %30 : vector<1x1x1x64xf32> to vector<64xf32>
    %32 = vector.shape_cast %31 : vector<64xf32> to vector<1x1x1x64xf32>
    %33 = vector.broadcast %29 : vector<1x14x14x1xf32> to vector<1x14x14x64xf32>
    %34 = vector.broadcast %32 : vector<1x1x1x64xf32> to vector<1x14x14x64xf32>
    %35 = arith.mulf %33, %34 : vector<1x14x14x64xf32>
    %36 = arith.addf %28, %35 : vector<1x14x14x64xf32>
    %37 = vector.extract_strided_slice %0 {offsets = [0, 0, 2, 0], sizes = [1, 14, 14, 2], strides = [1, 1, 1, 1]} : vector<1x16x16x2xf32> to vector<1x14x14x2xf32>
    %38 = vector.extract_strided_slice %37 {offsets = [0, 0, 0, 0], sizes = [1, 14, 14, 1], strides = [1, 1, 1, 1]} : vector<1x14x14x2xf32> to vector<1x14x14x1xf32>
    %39 = vector.extract_strided_slice %1 {offsets = [0, 2, 0, 0], sizes = [1, 1, 1, 64], strides = [1, 1, 1, 1]} : vector<3x3x2x64xf32> to vector<1x1x1x64xf32>
    %40 = vector.shape_cast %39 : vector<1x1x1x64xf32> to vector<64xf32>
    %41 = vector.shape_cast %40 : vector<64xf32> to vector<1x1x1x64xf32>
    %42 = vector.broadcast %38 : vector<1x14x14x1xf32> to vector<1x14x14x64xf32>
    %43 = vector.broadcast %41 : vector<1x1x1x64xf32> to vector<1x14x14x64xf32>
    %44 = arith.mulf %42, %43 : vector<1x14x14x64xf32>
    %45 = arith.addf %36, %44 : vector<1x14x14x64xf32>
    %46 = vector.extract_strided_slice %37 {offsets = [0, 0, 0, 1], sizes = [1, 14, 14, 1], strides = [1, 1, 1, 1]} : vector<1x14x14x2xf32> to vector<1x14x14x1xf32>
    %47 = vector.extract_strided_slice %1 {offsets = [0, 2, 1, 0], sizes = [1, 1, 1, 64], strides = [1, 1, 1, 1]} : vector<3x3x2x64xf32> to vector<1x1x1x64xf32>
    %48 = vector.shape_cast %47 : vector<1x1x1x64xf32> to vector<64xf32>
    %49 = vector.shape_cast %48 : vector<64xf32> to vector<1x1x1x64xf32>
    %50 = vector.broadcast %46 : vector<1x14x14x1xf32> to vector<1x14x14x64xf32>
    %51 = vector.broadcast %49 : vector<1x1x1x64xf32> to vector<1x14x14x64xf32>
    %52 = arith.mulf %50, %51 : vector<1x14x14x64xf32>
    %53 = arith.addf %45, %52 : vector<1x14x14x64xf32>
    %54 = vector.extract_strided_slice %0 {offsets = [0, 1, 0, 0], sizes = [1, 14, 14, 2], strides = [1, 1, 1, 1]} : vector<1x16x16x2xf32> to vector<1x14x14x2xf32>
    %55 = vector.extract_strided_slice %54 {offsets = [0, 0, 0, 0], sizes = [1, 14, 14, 1], strides = [1, 1, 1, 1]} : vector<1x14x14x2xf32> to vector<1x14x14x1xf32>
    %56 = vector.extract_strided_slice %1 {offsets = [1, 0, 0, 0], sizes = [1, 1, 1, 64], strides = [1, 1, 1, 1]} : vector<3x3x2x64xf32> to vector<1x1x1x64xf32>
    %57 = vector.shape_cast %56 : vector<1x1x1x64xf32> to vector<64xf32>
    %58 = vector.shape_cast %57 : vector<64xf32> to vector<1x1x1x64xf32>
    %59 = vector.broadcast %55 : vector<1x14x14x1xf32> to vector<1x14x14x64xf32>
    %60 = vector.broadcast %58 : vector<1x1x1x64xf32> to vector<1x14x14x64xf32>
    %61 = arith.mulf %59, %60 : vector<1x14x14x64xf32>
    %62 = arith.addf %53, %61 : vector<1x14x14x64xf32>
    %63 = vector.extract_strided_slice %54 {offsets = [0, 0, 0, 1], sizes = [1, 14, 14, 1], strides = [1, 1, 1, 1]} : vector<1x14x14x2xf32> to vector<1x14x14x1xf32>
    %64 = vector.extract_strided_slice %1 {offsets = [1, 0, 1, 0], sizes = [1, 1, 1, 64], strides = [1, 1, 1, 1]} : vector<3x3x2x64xf32> to vector<1x1x1x64xf32>
    %65 = vector.shape_cast %64 : vector<1x1x1x64xf32> to vector<64xf32>
    %66 = vector.shape_cast %65 : vector<64xf32> to vector<1x1x1x64xf32>
    %67 = vector.broadcast %63 : vector<1x14x14x1xf32> to vector<1x14x14x64xf32>
    %68 = vector.broadcast %66 : vector<1x1x1x64xf32> to vector<1x14x14x64xf32>
    %69 = arith.mulf %67, %68 : vector<1x14x14x64xf32>
    %70 = arith.addf %62, %69 : vector<1x14x14x64xf32>
    %71 = vector.extract_strided_slice %0 {offsets = [0, 1, 1, 0], sizes = [1, 14, 14, 2], strides = [1, 1, 1, 1]} : vector<1x16x16x2xf32> to vector<1x14x14x2xf32>
    %72 = vector.extract_strided_slice %71 {offsets = [0, 0, 0, 0], sizes = [1, 14, 14, 1], strides = [1, 1, 1, 1]} : vector<1x14x14x2xf32> to vector<1x14x14x1xf32>
    %73 = vector.extract_strided_slice %1 {offsets = [1, 1, 0, 0], sizes = [1, 1, 1, 64], strides = [1, 1, 1, 1]} : vector<3x3x2x64xf32> to vector<1x1x1x64xf32>
    %74 = vector.shape_cast %73 : vector<1x1x1x64xf32> to vector<64xf32>
    %75 = vector.shape_cast %74 : vector<64xf32> to vector<1x1x1x64xf32>
    %76 = vector.broadcast %72 : vector<1x14x14x1xf32> to vector<1x14x14x64xf32>
    %77 = vector.broadcast %75 : vector<1x1x1x64xf32> to vector<1x14x14x64xf32>
    %78 = arith.mulf %76, %77 : vector<1x14x14x64xf32>
    %79 = arith.addf %70, %78 : vector<1x14x14x64xf32>
    %80 = vector.extract_strided_slice %71 {offsets = [0, 0, 0, 1], sizes = [1, 14, 14, 1], strides = [1, 1, 1, 1]} : vector<1x14x14x2xf32> to vector<1x14x14x1xf32>
    %81 = vector.extract_strided_slice %1 {offsets = [1, 1, 1, 0], sizes = [1, 1, 1, 64], strides = [1, 1, 1, 1]} : vector<3x3x2x64xf32> to vector<1x1x1x64xf32>
    %82 = vector.shape_cast %81 : vector<1x1x1x64xf32> to vector<64xf32>
    %83 = vector.shape_cast %82 : vector<64xf32> to vector<1x1x1x64xf32>
    %84 = vector.broadcast %80 : vector<1x14x14x1xf32> to vector<1x14x14x64xf32>
    %85 = vector.broadcast %83 : vector<1x1x1x64xf32> to vector<1x14x14x64xf32>
    %86 = arith.mulf %84, %85 : vector<1x14x14x64xf32>
    %87 = arith.addf %79, %86 : vector<1x14x14x64xf32>
    %88 = vector.extract_strided_slice %0 {offsets = [0, 1, 2, 0], sizes = [1, 14, 14, 2], strides = [1, 1, 1, 1]} : vector<1x16x16x2xf32> to vector<1x14x14x2xf32>
    %89 = vector.extract_strided_slice %88 {offsets = [0, 0, 0, 0], sizes = [1, 14, 14, 1], strides = [1, 1, 1, 1]} : vector<1x14x14x2xf32> to vector<1x14x14x1xf32>
    %90 = vector.extract_strided_slice %1 {offsets = [1, 2, 0, 0], sizes = [1, 1, 1, 64], strides = [1, 1, 1, 1]} : vector<3x3x2x64xf32> to vector<1x1x1x64xf32>
    %91 = vector.shape_cast %90 : vector<1x1x1x64xf32> to vector<64xf32>
    %92 = vector.shape_cast %91 : vector<64xf32> to vector<1x1x1x64xf32>
    %93 = vector.broadcast %89 : vector<1x14x14x1xf32> to vector<1x14x14x64xf32>
    %94 = vector.broadcast %92 : vector<1x1x1x64xf32> to vector<1x14x14x64xf32>
    %95 = arith.mulf %93, %94 : vector<1x14x14x64xf32>
    %96 = arith.addf %87, %95 : vector<1x14x14x64xf32>
    %97 = vector.extract_strided_slice %88 {offsets = [0, 0, 0, 1], sizes = [1, 14, 14, 1], strides = [1, 1, 1, 1]} : vector<1x14x14x2xf32> to vector<1x14x14x1xf32>
    %98 = vector.extract_strided_slice %1 {offsets = [1, 2, 1, 0], sizes = [1, 1, 1, 64], strides = [1, 1, 1, 1]} : vector<3x3x2x64xf32> to vector<1x1x1x64xf32>
    %99 = vector.shape_cast %98 : vector<1x1x1x64xf32> to vector<64xf32>
    %100 = vector.shape_cast %99 : vector<64xf32> to vector<1x1x1x64xf32>
    %101 = vector.broadcast %97 : vector<1x14x14x1xf32> to vector<1x14x14x64xf32>
    %102 = vector.broadcast %100 : vector<1x1x1x64xf32> to vector<1x14x14x64xf32>
    %103 = arith.mulf %101, %102 : vector<1x14x14x64xf32>
    %104 = arith.addf %96, %103 : vector<1x14x14x64xf32>
    %105 = vector.extract_strided_slice %0 {offsets = [0, 2, 0, 0], sizes = [1, 14, 14, 2], strides = [1, 1, 1, 1]} : vector<1x16x16x2xf32> to vector<1x14x14x2xf32>
    %106 = vector.extract_strided_slice %105 {offsets = [0, 0, 0, 0], sizes = [1, 14, 14, 1], strides = [1, 1, 1, 1]} : vector<1x14x14x2xf32> to vector<1x14x14x1xf32>
    %107 = vector.extract_strided_slice %1 {offsets = [2, 0, 0, 0], sizes = [1, 1, 1, 64], strides = [1, 1, 1, 1]} : vector<3x3x2x64xf32> to vector<1x1x1x64xf32>
    %108 = vector.shape_cast %107 : vector<1x1x1x64xf32> to vector<64xf32>
    %109 = vector.shape_cast %108 : vector<64xf32> to vector<1x1x1x64xf32>
    %110 = vector.broadcast %106 : vector<1x14x14x1xf32> to vector<1x14x14x64xf32>
    %111 = vector.broadcast %109 : vector<1x1x1x64xf32> to vector<1x14x14x64xf32>
    %112 = arith.mulf %110, %111 : vector<1x14x14x64xf32>
    %113 = arith.addf %104, %112 : vector<1x14x14x64xf32>
    %114 = vector.extract_strided_slice %105 {offsets = [0, 0, 0, 1], sizes = [1, 14, 14, 1], strides = [1, 1, 1, 1]} : vector<1x14x14x2xf32> to vector<1x14x14x1xf32>
    %115 = vector.extract_strided_slice %1 {offsets = [2, 0, 1, 0], sizes = [1, 1, 1, 64], strides = [1, 1, 1, 1]} : vector<3x3x2x64xf32> to vector<1x1x1x64xf32>
    %116 = vector.shape_cast %115 : vector<1x1x1x64xf32> to vector<64xf32>
    %117 = vector.shape_cast %116 : vector<64xf32> to vector<1x1x1x64xf32>
    %118 = vector.broadcast %114 : vector<1x14x14x1xf32> to vector<1x14x14x64xf32>
    %119 = vector.broadcast %117 : vector<1x1x1x64xf32> to vector<1x14x14x64xf32>
    %120 = arith.mulf %118, %119 : vector<1x14x14x64xf32>
    %121 = arith.addf %113, %120 : vector<1x14x14x64xf32>
    %122 = vector.extract_strided_slice %0 {offsets = [0, 2, 1, 0], sizes = [1, 14, 14, 2], strides = [1, 1, 1, 1]} : vector<1x16x16x2xf32> to vector<1x14x14x2xf32>
    %123 = vector.extract_strided_slice %122 {offsets = [0, 0, 0, 0], sizes = [1, 14, 14, 1], strides = [1, 1, 1, 1]} : vector<1x14x14x2xf32> to vector<1x14x14x1xf32>
    %124 = vector.extract_strided_slice %1 {offsets = [2, 1, 0, 0], sizes = [1, 1, 1, 64], strides = [1, 1, 1, 1]} : vector<3x3x2x64xf32> to vector<1x1x1x64xf32>
    %125 = vector.shape_cast %124 : vector<1x1x1x64xf32> to vector<64xf32>
    %126 = vector.shape_cast %125 : vector<64xf32> to vector<1x1x1x64xf32>
    %127 = vector.broadcast %123 : vector<1x14x14x1xf32> to vector<1x14x14x64xf32>
    %128 = vector.broadcast %126 : vector<1x1x1x64xf32> to vector<1x14x14x64xf32>
    %129 = arith.mulf %127, %128 : vector<1x14x14x64xf32>
    %130 = arith.addf %121, %129 : vector<1x14x14x64xf32>
    %131 = vector.extract_strided_slice %122 {offsets = [0, 0, 0, 1], sizes = [1, 14, 14, 1], strides = [1, 1, 1, 1]} : vector<1x14x14x2xf32> to vector<1x14x14x1xf32>
    %132 = vector.extract_strided_slice %1 {offsets = [2, 1, 1, 0], sizes = [1, 1, 1, 64], strides = [1, 1, 1, 1]} : vector<3x3x2x64xf32> to vector<1x1x1x64xf32>
    %133 = vector.shape_cast %132 : vector<1x1x1x64xf32> to vector<64xf32>
    %134 = vector.shape_cast %133 : vector<64xf32> to vector<1x1x1x64xf32>
    %135 = vector.broadcast %131 : vector<1x14x14x1xf32> to vector<1x14x14x64xf32>
    %136 = vector.broadcast %134 : vector<1x1x1x64xf32> to vector<1x14x14x64xf32>
    %137 = arith.mulf %135, %136 : vector<1x14x14x64xf32>
    %138 = arith.addf %130, %137 : vector<1x14x14x64xf32>
    %139 = vector.extract_strided_slice %0 {offsets = [0, 2, 2, 0], sizes = [1, 14, 14, 2], strides = [1, 1, 1, 1]} : vector<1x16x16x2xf32> to vector<1x14x14x2xf32>
    %140 = vector.extract_strided_slice %139 {offsets = [0, 0, 0, 0], sizes = [1, 14, 14, 1], strides = [1, 1, 1, 1]} : vector<1x14x14x2xf32> to vector<1x14x14x1xf32>
    %141 = vector.extract_strided_slice %1 {offsets = [2, 2, 0, 0], sizes = [1, 1, 1, 64], strides = [1, 1, 1, 1]} : vector<3x3x2x64xf32> to vector<1x1x1x64xf32>
    %142 = vector.shape_cast %141 : vector<1x1x1x64xf32> to vector<64xf32>
    %143 = vector.shape_cast %142 : vector<64xf32> to vector<1x1x1x64xf32>
    %144 = vector.broadcast %140 : vector<1x14x14x1xf32> to vector<1x14x14x64xf32>
    %145 = vector.broadcast %143 : vector<1x1x1x64xf32> to vector<1x14x14x64xf32>
    %146 = arith.mulf %144, %145 : vector<1x14x14x64xf32>
    %147 = arith.addf %138, %146 : vector<1x14x14x64xf32>
    %148 = vector.extract_strided_slice %139 {offsets = [0, 0, 0, 1], sizes = [1, 14, 14, 1], strides = [1, 1, 1, 1]} : vector<1x14x14x2xf32> to vector<1x14x14x1xf32>
    %149 = vector.extract_strided_slice %1 {offsets = [2, 2, 1, 0], sizes = [1, 1, 1, 64], strides = [1, 1, 1, 1]} : vector<3x3x2x64xf32> to vector<1x1x1x64xf32>
    %150 = vector.shape_cast %149 : vector<1x1x1x64xf32> to vector<64xf32>
    %151 = vector.shape_cast %150 : vector<64xf32> to vector<1x1x1x64xf32>
    %152 = vector.broadcast %148 : vector<1x14x14x1xf32> to vector<1x14x14x64xf32>
    %153 = vector.broadcast %151 : vector<1x1x1x64xf32> to vector<1x14x14x64xf32>
    %154 = arith.mulf %152, %153 : vector<1x14x14x64xf32>
    %155 = arith.addf %147, %154 : vector<1x14x14x64xf32>
    %c0_7 = arith.constant 0 : index
    %c0_8 = arith.constant 0 : index
    %156 = vector.load %arg3[%c0_7, %c0_8] : memref<1x64xf32, #tpu.memory_space<vmem>>, vector<1x64xf32>
    %157 = vector.shape_cast %156 : vector<1x64xf32> to vector<1x1x1x64xf32>
    %158 = vector.broadcast %157 : vector<1x1x1x64xf32> to vector<1x14x14x64xf32>
    %159 = arith.addf %155, %158 : vector<1x14x14x64xf32>
    %cst_9 = arith.constant 0.000000e+00 : f32
    %160 = vector.broadcast %cst_9 : f32 to vector<1x14x14x64xf32>
    %161 = arith.cmpf oge, %159, %160 : vector<1x14x14x64xf32>
    %cst_10 = arith.constant 2.000000e-01 : f32
    %162 = vector.broadcast %cst_10 : f32 to vector<1x14x14x64xf32>
    %163 = arith.mulf %162, %159 : vector<1x14x14x64xf32>
    %164 = arith.select %161, %159, %163 : vector<1x14x14x64xi1>, vector<1x14x14x64xf32>
    %c0_11 = arith.constant 0 : index
    %c0_12 = arith.constant 0 : index
    %165 = vector.load %arg4[%c0_11, %c0_12] : memref<576x128xbf16, #tpu.memory_space<vmem>>, vector<576x128xbf16>
    %166 = arith.truncf %164 : vector<1x14x14x64xf32> to vector<1x14x14x64xbf16>
    %167 = vector.extract_strided_slice %166 {offsets = [0, 0, 0, 0], sizes = [1, 12, 12, 64], strides = [1, 1, 1, 1]} : vector<1x14x14x64xbf16> to vector<1x12x12x64xbf16>
    %168 = vector.extract_strided_slice %166 {offsets = [0, 0, 1, 0], sizes = [1, 12, 12, 64], strides = [1, 1, 1, 1]} : vector<1x14x14x64xbf16> to vector<1x12x12x64xbf16>
    %169 = vector.extract_strided_slice %166 {offsets = [0, 0, 2, 0], sizes = [1, 12, 12, 64], strides = [1, 1, 1, 1]} : vector<1x14x14x64xbf16> to vector<1x12x12x64xbf16>
    %170 = vector.extract_strided_slice %166 {offsets = [0, 1, 0, 0], sizes = [1, 12, 12, 64], strides = [1, 1, 1, 1]} : vector<1x14x14x64xbf16> to vector<1x12x12x64xbf16>
    %171 = vector.extract_strided_slice %166 {offsets = [0, 1, 1, 0], sizes = [1, 12, 12, 64], strides = [1, 1, 1, 1]} : vector<1x14x14x64xbf16> to vector<1x12x12x64xbf16>
    %172 = vector.extract_strided_slice %166 {offsets = [0, 1, 2, 0], sizes = [1, 12, 12, 64], strides = [1, 1, 1, 1]} : vector<1x14x14x64xbf16> to vector<1x12x12x64xbf16>
    %173 = vector.extract_strided_slice %166 {offsets = [0, 2, 0, 0], sizes = [1, 12, 12, 64], strides = [1, 1, 1, 1]} : vector<1x14x14x64xbf16> to vector<1x12x12x64xbf16>
    %174 = vector.extract_strided_slice %166 {offsets = [0, 2, 1, 0], sizes = [1, 12, 12, 64], strides = [1, 1, 1, 1]} : vector<1x14x14x64xbf16> to vector<1x12x12x64xbf16>
    %175 = vector.extract_strided_slice %166 {offsets = [0, 2, 2, 0], sizes = [1, 12, 12, 64], strides = [1, 1, 1, 1]} : vector<1x14x14x64xbf16> to vector<1x12x12x64xbf16>
    %176 = tpu.concatenate %167, %168, %169, %170, %171, %172, %173, %174, %175 in 3 : vector<1x12x12x64xbf16>, vector<1x12x12x64xbf16>, vector<1x12x12x64xbf16>, vector<1x12x12x64xbf16>, vector<1x12x12x64xbf16>, vector<1x12x12x64xbf16>, vector<1x12x12x64xbf16>, vector<1x12x12x64xbf16>, vector<1x12x12x64xbf16> -> vector<1x12x12x576xbf16>
    %177 = vector.shape_cast %176 : vector<1x12x12x576xbf16> to vector<144x576xbf16>
    %cst_13 = arith.constant dense<0.000000e+00> : vector<144x128xf32>
    %178 = tpu.matmul %177, %165, %cst_13 {dimension_numbers = #tpu.dot_dimension_numbers<[1], [0], [0], [1], [0, 0, 1, 1], [], []>} : vector<144x576xbf16>, vector<576x128xbf16>, vector<144x128xf32> -> vector<144x128xf32>
    %179 = vector.shape_cast %178 : vector<144x128xf32> to vector<1x12x12x128xf32>
    %c0_14 = arith.constant 0 : index
    %c0_15 = arith.constant 0 : index
    %c0_16 = arith.constant 0 : index
    %c0_17 = arith.constant 0 : index
    %180 = vector.load %arg5[%c0_14, %c0_15, %c0_16, %c0_17] : memref<1x12x12x128xf32, #tpu.memory_space<vmem>>, vector<1x12x12x128xf32>
    tpu.vector_store %arg5[%c0_14, %c0_15, %c0_16, %c0_17], %179 {strides = array<i32>} : memref<1x12x12x128xf32, #tpu.memory_space<vmem>>, vector<1x12x12x128xf32>,
    %cst_18 = arith.constant dense<0.000000e+00> : vector<128xf32>
    %181 = vector.multi_reduction <add>, %179, %cst_18 [0, 1, 2] : vector<1x12x12x128xf32> to vector<128xf32>
    %182 = vector.shape_cast %181 : vector<128xf32> to vector<1x1x1x128xf32>
    %183 = arith.mulf %179, %179 : vector<1x12x12x128xf32>
    %cst_19 = arith.constant dense<0.000000e+00> : vector<128xf32>
    %184 = vector.multi_reduction <add>, %183, %cst_19 [0, 1, 2] : vector<1x12x12x128xf32> to vector<128xf32>
    %185 = vector.shape_cast %184 : vector<128xf32> to vector<1x1x1x128xf32>
    %186 = vector.shape_cast %182 : vector<1x1x1x128xf32> to vector<1x1x128xf32>
    %c0_20 = arith.constant 0 : index
    %c0_21 = arith.constant 0 : index
    %c0_22 = arith.constant 0 : index
    %187 = vector.load %arg6[%c0_20, %c0_21, %c0_22] : memref<1x1x128xf32, #tpu.memory_space<vmem>>, vector<1x1x128xf32>
    tpu.vector_store %arg6[%c0_20, %c0_21, %c0_22], %186 {strides = array<i32>} : memref<1x1x128xf32, #tpu.memory_space<vmem>>, vector<1x1x128xf32>,
    %188 = vector.shape_cast %185 : vector<1x1x1x128xf32> to vector<1x1x128xf32>
    %c0_23 = arith.constant 0 : index
    %c0_24 = arith.constant 0 : index
    %c0_25 = arith.constant 0 : index
    %189 = vector.load %arg7[%c0_23, %c0_24, %c0_25] : memref<1x1x128xf32, #tpu.memory_space<vmem>>, vector<1x1x128xf32>
    tpu.vector_store %arg7[%c0_23, %c0_24, %c0_25], %188 {strides = array<i32>} : memref<1x1x128xf32, #tpu.memory_space<vmem>>, vector<1x1x128xf32>,
    return
  }
  func.func @transform_0(%arg0: i32) -> (i32, i32, i32, i32) {
    %c0_i32 = arith.constant 0 : i32
    %c0_i32_0 = arith.constant 0 : i32
    %c0_i32_1 = arith.constant 0 : i32
    %c0_i32_2 = arith.constant 0 : i32
    return %arg0, %c0_i32, %c0_i32_0, %c0_i32_1 : i32, i32, i32, i32
  }
  func.func @transform_1(%arg0: i32) -> (i32, i32, i32, i32) {
    %c0_i32 = arith.constant 0 : i32
    %c0_i32_0 = arith.constant 0 : i32
    %c0_i32_1 = arith.constant 0 : i32
    %c0_i32_2 = arith.constant 0 : i32
    %c0_i32_3 = arith.constant 0 : i32
    return %c0_i32, %c0_i32_0, %c0_i32_1, %c0_i32_2 : i32, i32, i32, i32
  }
  func.func @transform_2(%arg0: i32) -> (i32, i32) {
    %c0_i32 = arith.constant 0 : i32
    %c0_i32_0 = arith.constant 0 : i32
    %c0_i32_1 = arith.constant 0 : i32
    return %c0_i32, %c0_i32_0 : i32, i32
  }
  func.func @transform_3(%arg0: i32) -> (i32, i32) {
    %c0_i32 = arith.constant 0 : i32
    %c0_i32_0 = arith.constant 0 : i32
    %c0_i32_1 = arith.constant 0 : i32
    return %c0_i32, %c0_i32_0 : i32, i32
  }
  func.func @transform_4(%arg0: i32) -> (i32, i32, i32, i32) {
    %c0_i32 = arith.constant 0 : i32
    %c0_i32_0 = arith.constant 0 : i32
    %c0_i32_1 = arith.constant 0 : i32
    %c0_i32_2 = arith.constant 0 : i32
    return %arg0, %c0_i32, %c0_i32_0, %c0_i32_1 : i32, i32, i32, i32
  }
  func.func @transform_5(%arg0: i32) -> (i32, i32, i32) {
    %c0_i32 = arith.constant 0 : i32
    %c0_i32_0 = arith.constant 0 : i32
    %c0_i32_1 = arith.constant 0 : i32
    return %arg0, %c0_i32, %c0_i32_0 : i32, i32, i32
  }
  func.func @transform_6(%arg0: i32) -> (i32, i32, i32) {
    %c0_i32 = arith.constant 0 : i32
    %c0_i32_0 = arith.constant 0 : i32
    %c0_i32_1 = arith.constant 0 : i32
    return %arg0, %c0_i32, %c0_i32_0 : i32, i32, i32
  }
}

module attributes {stable_mosaic.version = 11 : i64} {
  func.func @stage2_kernel(%arg0: i32, %arg1: memref<1x12x12x128xf32, #tpu.memory_space<vmem>>, %arg2: memref<1x128xf32, #tpu.memory_space<vmem>>, %arg3: memref<1x128xf32, #tpu.memory_space<vmem>>, %arg4: memref<9x128xf32, #tpu.memory_space<vmem>>, %arg5: memref<1x10x10xf32, #tpu.memory_space<vmem>>) attributes {dimension_semantics = [#tpu.dimension_semantics<parallel>], iteration_bounds = array<i64: 2>, scalar_prefetch = 0 : i64, scratch_operands = 0 : i64, tpu.core_type = #tpu.core_type<tc>, window_params = [{transform_indices = @transform_0, window_bounds = array<i64: 1, 12, 12, 128>}, {pipeline_mode = #tpu.pipeline_mode<synchronous>, transform_indices = @transform_1, window_bounds = array<i64: 1, 128>}, {pipeline_mode = #tpu.pipeline_mode<synchronous>, transform_indices = @transform_2, window_bounds = array<i64: 1, 128>}, {pipeline_mode = #tpu.pipeline_mode<synchronous>, transform_indices = @transform_3, window_bounds = array<i64: 9, 128>}, {transform_indices = @transform_4, window_bounds = array<i64: 1, 10, 10>}]} {
    %c0 = arith.constant 0 : index
    %c0_0 = arith.constant 0 : index
    %c0_1 = arith.constant 0 : index
    %c0_2 = arith.constant 0 : index
    %0 = vector.load %arg1[%c0, %c0_0, %c0_1, %c0_2] : memref<1x12x12x128xf32, #tpu.memory_space<vmem>>, vector<1x12x12x128xf32>
    %c0_3 = arith.constant 0 : index
    %c0_4 = arith.constant 0 : index
    %1 = vector.load %arg2[%c0_3, %c0_4] : memref<1x128xf32, #tpu.memory_space<vmem>>, vector<1x128xf32>
    %2 = vector.shape_cast %1 : vector<1x128xf32> to vector<1x1x1x128xf32>
    %3 = vector.broadcast %2 : vector<1x1x1x128xf32> to vector<1x12x12x128xf32>
    %4 = arith.mulf %0, %3 : vector<1x12x12x128xf32>
    %c0_5 = arith.constant 0 : index
    %c0_6 = arith.constant 0 : index
    %5 = vector.load %arg3[%c0_5, %c0_6] : memref<1x128xf32, #tpu.memory_space<vmem>>, vector<1x128xf32>
    %6 = vector.shape_cast %5 : vector<1x128xf32> to vector<1x1x1x128xf32>
    %7 = vector.broadcast %6 : vector<1x1x1x128xf32> to vector<1x12x12x128xf32>
    %8 = arith.addf %4, %7 : vector<1x12x12x128xf32>
    %cst = arith.constant 0.000000e+00 : f32
    %9 = vector.broadcast %cst : f32 to vector<1x12x12x128xf32>
    %10 = arith.cmpf oge, %8, %9 : vector<1x12x12x128xf32>
    %cst_7 = arith.constant 2.000000e-01 : f32
    %11 = vector.broadcast %cst_7 : f32 to vector<1x12x12x128xf32>
    %12 = arith.mulf %11, %8 : vector<1x12x12x128xf32>
    %13 = arith.select %10, %8, %12 : vector<1x12x12x128xi1>, vector<1x12x12x128xf32>
    %c0_8 = arith.constant 0 : index
    %c0_9 = arith.constant 0 : index
    %14 = vector.load %arg4[%c0_8, %c0_9] : memref<9x128xf32, #tpu.memory_space<vmem>>, vector<9x128xf32>
    %15 = vector.extract_strided_slice %13 {offsets = [0, 0, 0, 0], sizes = [1, 10, 10, 128], strides = [1, 1, 1, 1]} : vector<1x12x12x128xf32> to vector<1x10x10x128xf32>
    %16 = vector.extract_strided_slice %14 {offsets = [0, 0], sizes = [1, 128], strides = [1, 1]} : vector<9x128xf32> to vector<1x128xf32>
    %17 = vector.shape_cast %16 : vector<1x128xf32> to vector<128xf32>
    %18 = vector.shape_cast %17 : vector<128xf32> to vector<1x1x1x128xf32>
    %19 = vector.broadcast %18 : vector<1x1x1x128xf32> to vector<1x10x10x128xf32>
    %20 = arith.mulf %15, %19 : vector<1x10x10x128xf32>
    %21 = vector.extract_strided_slice %13 {offsets = [0, 0, 1, 0], sizes = [1, 10, 10, 128], strides = [1, 1, 1, 1]} : vector<1x12x12x128xf32> to vector<1x10x10x128xf32>
    %22 = vector.extract_strided_slice %14 {offsets = [1, 0], sizes = [1, 128], strides = [1, 1]} : vector<9x128xf32> to vector<1x128xf32>
    %23 = vector.shape_cast %22 : vector<1x128xf32> to vector<128xf32>
    %24 = vector.shape_cast %23 : vector<128xf32> to vector<1x1x1x128xf32>
    %25 = vector.broadcast %24 : vector<1x1x1x128xf32> to vector<1x10x10x128xf32>
    %26 = arith.mulf %21, %25 : vector<1x10x10x128xf32>
    %27 = arith.addf %20, %26 : vector<1x10x10x128xf32>
    %28 = vector.extract_strided_slice %13 {offsets = [0, 0, 2, 0], sizes = [1, 10, 10, 128], strides = [1, 1, 1, 1]} : vector<1x12x12x128xf32> to vector<1x10x10x128xf32>
    %29 = vector.extract_strided_slice %14 {offsets = [2, 0], sizes = [1, 128], strides = [1, 1]} : vector<9x128xf32> to vector<1x128xf32>
    %30 = vector.shape_cast %29 : vector<1x128xf32> to vector<128xf32>
    %31 = vector.shape_cast %30 : vector<128xf32> to vector<1x1x1x128xf32>
    %32 = vector.broadcast %31 : vector<1x1x1x128xf32> to vector<1x10x10x128xf32>
    %33 = arith.mulf %28, %32 : vector<1x10x10x128xf32>
    %34 = arith.addf %27, %33 : vector<1x10x10x128xf32>
    %35 = vector.extract_strided_slice %13 {offsets = [0, 1, 0, 0], sizes = [1, 10, 10, 128], strides = [1, 1, 1, 1]} : vector<1x12x12x128xf32> to vector<1x10x10x128xf32>
    %36 = vector.extract_strided_slice %14 {offsets = [3, 0], sizes = [1, 128], strides = [1, 1]} : vector<9x128xf32> to vector<1x128xf32>
    %37 = vector.shape_cast %36 : vector<1x128xf32> to vector<128xf32>
    %38 = vector.shape_cast %37 : vector<128xf32> to vector<1x1x1x128xf32>
    %39 = vector.broadcast %38 : vector<1x1x1x128xf32> to vector<1x10x10x128xf32>
    %40 = arith.mulf %35, %39 : vector<1x10x10x128xf32>
    %41 = arith.addf %34, %40 : vector<1x10x10x128xf32>
    %42 = vector.extract_strided_slice %13 {offsets = [0, 1, 1, 0], sizes = [1, 10, 10, 128], strides = [1, 1, 1, 1]} : vector<1x12x12x128xf32> to vector<1x10x10x128xf32>
    %43 = vector.extract_strided_slice %14 {offsets = [4, 0], sizes = [1, 128], strides = [1, 1]} : vector<9x128xf32> to vector<1x128xf32>
    %44 = vector.shape_cast %43 : vector<1x128xf32> to vector<128xf32>
    %45 = vector.shape_cast %44 : vector<128xf32> to vector<1x1x1x128xf32>
    %46 = vector.broadcast %45 : vector<1x1x1x128xf32> to vector<1x10x10x128xf32>
    %47 = arith.mulf %42, %46 : vector<1x10x10x128xf32>
    %48 = arith.addf %41, %47 : vector<1x10x10x128xf32>
    %49 = vector.extract_strided_slice %13 {offsets = [0, 1, 2, 0], sizes = [1, 10, 10, 128], strides = [1, 1, 1, 1]} : vector<1x12x12x128xf32> to vector<1x10x10x128xf32>
    %50 = vector.extract_strided_slice %14 {offsets = [5, 0], sizes = [1, 128], strides = [1, 1]} : vector<9x128xf32> to vector<1x128xf32>
    %51 = vector.shape_cast %50 : vector<1x128xf32> to vector<128xf32>
    %52 = vector.shape_cast %51 : vector<128xf32> to vector<1x1x1x128xf32>
    %53 = vector.broadcast %52 : vector<1x1x1x128xf32> to vector<1x10x10x128xf32>
    %54 = arith.mulf %49, %53 : vector<1x10x10x128xf32>
    %55 = arith.addf %48, %54 : vector<1x10x10x128xf32>
    %56 = vector.extract_strided_slice %13 {offsets = [0, 2, 0, 0], sizes = [1, 10, 10, 128], strides = [1, 1, 1, 1]} : vector<1x12x12x128xf32> to vector<1x10x10x128xf32>
    %57 = vector.extract_strided_slice %14 {offsets = [6, 0], sizes = [1, 128], strides = [1, 1]} : vector<9x128xf32> to vector<1x128xf32>
    %58 = vector.shape_cast %57 : vector<1x128xf32> to vector<128xf32>
    %59 = vector.shape_cast %58 : vector<128xf32> to vector<1x1x1x128xf32>
    %60 = vector.broadcast %59 : vector<1x1x1x128xf32> to vector<1x10x10x128xf32>
    %61 = arith.mulf %56, %60 : vector<1x10x10x128xf32>
    %62 = arith.addf %55, %61 : vector<1x10x10x128xf32>
    %63 = vector.extract_strided_slice %13 {offsets = [0, 2, 1, 0], sizes = [1, 10, 10, 128], strides = [1, 1, 1, 1]} : vector<1x12x12x128xf32> to vector<1x10x10x128xf32>
    %64 = vector.extract_strided_slice %14 {offsets = [7, 0], sizes = [1, 128], strides = [1, 1]} : vector<9x128xf32> to vector<1x128xf32>
    %65 = vector.shape_cast %64 : vector<1x128xf32> to vector<128xf32>
    %66 = vector.shape_cast %65 : vector<128xf32> to vector<1x1x1x128xf32>
    %67 = vector.broadcast %66 : vector<1x1x1x128xf32> to vector<1x10x10x128xf32>
    %68 = arith.mulf %63, %67 : vector<1x10x10x128xf32>
    %69 = arith.addf %62, %68 : vector<1x10x10x128xf32>
    %70 = vector.extract_strided_slice %13 {offsets = [0, 2, 2, 0], sizes = [1, 10, 10, 128], strides = [1, 1, 1, 1]} : vector<1x12x12x128xf32> to vector<1x10x10x128xf32>
    %71 = vector.extract_strided_slice %14 {offsets = [8, 0], sizes = [1, 128], strides = [1, 1]} : vector<9x128xf32> to vector<1x128xf32>
    %72 = vector.shape_cast %71 : vector<1x128xf32> to vector<128xf32>
    %73 = vector.shape_cast %72 : vector<128xf32> to vector<1x1x1x128xf32>
    %74 = vector.broadcast %73 : vector<1x1x1x128xf32> to vector<1x10x10x128xf32>
    %75 = arith.mulf %70, %74 : vector<1x10x10x128xf32>
    %76 = arith.addf %69, %75 : vector<1x10x10x128xf32>
    %cst_10 = arith.constant dense<0.000000e+00> : vector<1x10x10xf32>
    %77 = vector.multi_reduction <add>, %76, %cst_10 [3] : vector<1x10x10x128xf32> to vector<1x10x10xf32>
    %c0_11 = arith.constant 0 : index
    %c0_12 = arith.constant 0 : index
    %c0_13 = arith.constant 0 : index
    %78 = vector.load %arg5[%c0_11, %c0_12, %c0_13] : memref<1x10x10xf32, #tpu.memory_space<vmem>>, vector<1x10x10xf32>
    tpu.vector_store %arg5[%c0_11, %c0_12, %c0_13], %77 {strides = array<i32>} : memref<1x10x10xf32, #tpu.memory_space<vmem>>, vector<1x10x10xf32>,
    return
  }
  func.func @transform_0(%arg0: i32) -> (i32, i32, i32, i32) {
    %c0_i32 = arith.constant 0 : i32
    %c0_i32_0 = arith.constant 0 : i32
    %c0_i32_1 = arith.constant 0 : i32
    %c0_i32_2 = arith.constant 0 : i32
    return %arg0, %c0_i32, %c0_i32_0, %c0_i32_1 : i32, i32, i32, i32
  }
  func.func @transform_1(%arg0: i32) -> (i32, i32) {
    %c0_i32 = arith.constant 0 : i32
    %c0_i32_0 = arith.constant 0 : i32
    %c0_i32_1 = arith.constant 0 : i32
    return %c0_i32, %c0_i32_0 : i32, i32
  }
  func.func @transform_2(%arg0: i32) -> (i32, i32) {
    %c0_i32 = arith.constant 0 : i32
    %c0_i32_0 = arith.constant 0 : i32
    %c0_i32_1 = arith.constant 0 : i32
    return %c0_i32, %c0_i32_0 : i32, i32
  }
  func.func @transform_3(%arg0: i32) -> (i32, i32) {
    %c0_i32 = arith.constant 0 : i32
    %c0_i32_0 = arith.constant 0 : i32
    %c0_i32_1 = arith.constant 0 : i32
    return %c0_i32, %c0_i32_0 : i32, i32
  }
  func.func @transform_4(%arg0: i32) -> (i32, i32, i32) {
    %c0_i32 = arith.constant 0 : i32
    %c0_i32_0 = arith.constant 0 : i32
    %c0_i32_1 = arith.constant 0 : i32
    return %arg0, %c0_i32, %c0_i32_0 : i32, i32, i32
  }
}

</mosaic_0001>

<llo_original>
// kernel: discriminator_forward.3
$region0: #{discriminator_forward.3}
  #allocation0 [shape = 'u32[]', space=smem, size = 0x4, offset = 0x4, fixed_abs, tag = 'smem constant byte address 0x4 - core index']
  #allocation1 [shape = 'u32[72,128]{1,0:T(1,128)}', space=vmem, size = 0x9000, scoped, tag = 'internal scratch']
  %s0 = inlined_call_operand.vmem [shape: f32[2,12,12,128], index: 0, kind: input, shape index: {}]
  %s1 = inlined_call_operand.vmem [shape: f32[1,128], index: 1, kind: input, shape index: {}]
  %s2 = inlined_call_operand.vmem [shape: f32[1,128], index: 2, kind: input, shape index: {}]
  %s3 = inlined_call_operand.vmem [shape: f32[9,128], index: 3, kind: input, shape index: {}]
  %s4 = inlined_call_operand.vmem [shape: f32[2,10,10], index: 4, kind: output, shape index: {}]
  %s5 = sld [smem:[#allocation0]]
  $region49: #{discriminator_forward.3} parent=0
    _
  %s7 = ssub.s32 1, %s5
  %s8 = scalar_select 0, %s7, %s5
  loop: start=0, step=1, limit=4
  $region2: #{discriminator_forward.3} parent=0 // loop_pre_header
    _
  $region3: #{discriminator_forward.3} parent=0 // loop_header
    %s10 = sphi 0, %s14
    %p11 = scmp.ge.s32.totalorder %s10, 4
    %s20 = sphi 0, %s22
    %s23 = sphi 0, %s20
    %s24 = sphi 0, %s23
    %s40 = sphi 0, %s24
    %s44 = sphi 0, %s44
    %s46 = sphi 0, %s44
    %s47 = sphi 0, %s46
    %s61 = sphi 0, %s47
    %s65 = sphi 0, %s65
    %s67 = sphi 0, %s65
    %s68 = sphi 0, %s67
    %s82 = sphi 0, %s68
    %s86 = sphi 0, %s86
    %s88 = sphi 0, %s86
    %s89 = sphi 0, %s88
    %s103 = sphi 0, %s89
    %s109 = sphi 0, %s111
    %s112 = sphi 0, %s109
    %s113 = sphi 0, %s112
    %s129 = sphi 0, %s113
  $region4: #{discriminator_forward.3} parent=0 // loop_header_branch
    %13 = sbr.rel (%p11) target = $region8
  $region5: #{discriminator_forward.3} parent=0 // loop_body
    %s15 = ssub.s32 %s10, 1
    %s16 = ssub.s32 %s10, 2
    %s17 = sadd.s32 %s10, 1
    %s18 = ssub.s32 %s10, %s17
    %p19 = scmp.eq.s32.totalorder %s18, 0
    %s21 = sadd.s32 %s20, 1
    %s22 = scalar_select %p19, %s20, %s21
    %p25 = pneg %p19
    %p26 = scmp.eq.s32.totalorder %s10, 1
    %p27 = por %p25, %p26
    %p28 = scmp.ne.s32.totalorder %s20, %s23
    %p29 = scmp.eq.s32.totalorder %s10, 0
    %p30 = por %p28, %p29
    %p31 = scmp.ne.s32.totalorder %s20, %s23
    %p32 = scmp.eq.s32.totalorder %s15, 1
    %p33 = por %p31, %p32
    %p34 = scmp.ne.s32.totalorder %s23, %s24
    %p35 = scmp.eq.s32.totalorder %s15, 0
    %p36 = por %p34, %p35
    %p37 = scmp.ne.s32.totalorder %s23, %s24
    %p38 = scmp.eq.s32.totalorder %s16, 1
    %p39 = por %p37, %p38
    %p41 = scmp.ne.s32.totalorder %s24, %s40
    %p42 = scmp.eq.s32.totalorder %s16, 0
    %p43 = por %p41, %p42
    %s45 = sadd.s32 %s44, 1
    %p48 = scmp.eq.s32.totalorder %s10, 1
    %p49 = scmp.ne.s32.totalorder %s44, %s46
    %p50 = scmp.eq.s32.totalorder %s10, 0
    %p51 = por %p49, %p50
    %p52 = scmp.ne.s32.totalorder %s44, %s46
    %p53 = scmp.eq.s32.totalorder %s15, 1
    %p54 = por %p52, %p53
    %p55 = scmp.ne.s32.totalorder %s46, %s47
    %p56 = scmp.eq.s32.totalorder %s15, 0
    %p57 = por %p55, %p56
    %p58 = scmp.ne.s32.totalorder %s46, %s47
    %p59 = scmp.eq.s32.totalorder %s16, 1
    %p60 = por %p58, %p59
    %p62 = scmp.ne.s32.totalorder %s47, %s61
    %p63 = scmp.eq.s32.totalorder %s16, 0
    %p64 = por %p62, %p63
    %s66 = sadd.s32 %s65, 1
    %p69 = scmp.eq.s32.totalorder %s10, 1
    %p70 = scmp.ne.s32.totalorder %s65, %s67
    %p71 = scmp.eq.s32.totalorder %s10, 0
    %p72 = por %p70, %p71
    %p73 = scmp.ne.s32.totalorder %s65, %s67
    %p74 = scmp.eq.s32.totalorder %s15, 1
    %p75 = por %p73, %p74
    %p76 = scmp.ne.s32.totalorder %s67, %s68
    %p77 = scmp.eq.s32.totalorder %s15, 0
    %p78 = por %p76, %p77
    %p79 = scmp.ne.s32.totalorder %s67, %s68
    %p80 = scmp.eq.s32.totalorder %s16, 1
    %p81 = por %p79, %p80
    %p83 = scmp.ne.s32.totalorder %s68, %s82
    %p84 = scmp.eq.s32.totalorder %s16, 0
    %p85 = por %p83, %p84
    %s87 = sadd.s32 %s86, 1
    %p90 = scmp.eq.s32.totalorder %s10, 1
    %p91 = scmp.ne.s32.totalorder %s86, %s88
    %p92 = scmp.eq.s32.totalorder %s10, 0
    %p93 = por %p91, %p92
    %p94 = scmp.ne.s32.totalorder %s86, %s88
    %p95 = scmp.eq.s32.totalorder %s15, 1
    %p96 = por %p94, %p95
    %p97 = scmp.ne.s32.totalorder %s88, %s89
    %p98 = scmp.eq.s32.totalorder %s15, 0
    %p99 = por %p97, %p98
    %p100 = scmp.ne.s32.totalorder %s88, %s89
    %p101 = scmp.eq.s32.totalorder %s16, 1
    %p102 = por %p100, %p101
    %p104 = scmp.ne.s32.totalorder %s89, %s103
    %p105 = scmp.eq.s32.totalorder %s16, 0
    %p106 = por %p104, %p105
    %s107 = ssub.s32 %s10, %s17
    %p108 = scmp.eq.s32.totalorder %s107, 0
    %s110 = sadd.s32 %s109, 1
    %s111 = scalar_select %p108, %s109, %s110
    %p114 = pneg %p108
    %p115 = scmp.eq.s32.totalorder %s10, 1
    %p116 = por %p114, %p115
    %p117 = scmp.ne.s32.totalorder %s109, %s112
    %p118 = scmp.eq.s32.totalorder %s10, 0
    %p119 = por %p117, %p118
    %p120 = scmp.ne.s32.totalorder %s109, %s112
    %p121 = scmp.eq.s32.totalorder %s15, 1
    %p122 = por %p120, %p121
    %p123 = scmp.ne.s32.totalorder %s112, %s113
    %p124 = scmp.eq.s32.totalorder %s15, 0
    %p125 = por %p123, %p124
    %p126 = scmp.ne.s32.totalorder %s112, %s113
    %p127 = scmp.eq.s32.totalorder %s16, 1
    %p128 = por %p126, %p127
    %p130 = scmp.ne.s32.totalorder %s113, %s129
    %p131 = scmp.eq.s32.totalorder %s16, 0
    %p132 = por %p130, %p131
    %p133 = scmp.le.s32.totalorder 1, %s10
    %p134 = scmp.lt.s32.totalorder %s10, 3
    %p135 = pnand %p133, %p134
    %p136 = pneg %p135
    // Predicated region
    $region9: #{discriminator_forward.3} parent=5 // pred_check
      _
    $region10: #{discriminator_forward.3} parent=5 // pred_check_branch
      %138 = sbr.rel (%p135) target = $region12
    $region11: #{discriminator_forward.3} parent=5 // pred_region
      %s139 = ssub.s32 %s10, 1
      // Predicated region
      $region13: #{discriminator_forward.3} parent=11 // pred_check
        %p140 = pneg %p57
      $region14: #{discriminator_forward.3} parent=11 // pred_check_branch
        %142 = sbr.rel (%p140) target = $region16
      $region15: #{discriminator_forward.3} parent=11 // pred_region
        _
      $region16: #{discriminator_forward.3} parent=11 // pred_fallthru
        _
      // Predicated region
      $region17: #{discriminator_forward.3} parent=11 // pred_check
        %p143 = pneg %p78
      $region18: #{discriminator_forward.3} parent=11 // pred_check_branch
        %145 = sbr.rel (%p143) target = $region20
      $region19: #{discriminator_forward.3} parent=11 // pred_region
        _
      $region20: #{discriminator_forward.3} parent=11 // pred_fallthru
        _
      // Predicated region
      $region21: #{discriminator_forward.3} parent=11 // pred_check
        %p146 = pneg %p99
      $region22: #{discriminator_forward.3} parent=11 // pred_check_branch
        %148 = sbr.rel (%p146) target = $region24
      $region23: #{discriminator_forward.3} parent=11 // pred_region
        _
      $region24: #{discriminator_forward.3} parent=11 // pred_fallthru
        _
    $region12: #{discriminator_forward.3} parent=5 // pred_fallthru
      _
    %p149 = scmp.lt.s32.totalorder %s10, 2
    // Predicated region
    $region25: #{discriminator_forward.3} parent=5 // pred_check
      %p150 = pneg %p149
    $region26: #{discriminator_forward.3} parent=5 // pred_check_branch
      %152 = sbr.rel (%p150) target = $region28
    $region27: #{discriminator_forward.3} parent=5 // pred_region
      // Predicated region
      $region29: #{discriminator_forward.3} parent=27 // pred_check
        %p153 = pneg %p30
      $region30: #{discriminator_forward.3} parent=27 // pred_check_branch
        %155 = sbr.rel (%p153) target = $region32
      $region31: #{discriminator_forward.3} parent=27 // pred_region
        %p156 = scmp.lt.s32.totalorder %s10, 1
        %s157 = scalar_select %p156, %s10, 1
        %s158 = smul.addr %s157, 24
        %s159 = smul.addr %s158, 8
        %s160 = scalar_lea.vmem %s0, %s159
      $region32: #{discriminator_forward.3} parent=27 // pred_fallthru
        _
    $region28: #{discriminator_forward.3} parent=5 // pred_fallthru
      _
    %p161 = scmp.le.s32.totalorder 1, %s10
    %p162 = scmp.lt.s32.totalorder %s10, 3
    %p163 = pnand %p161, %p162
    %p164 = pneg %p163
    // Predicated region
    $region33: #{discriminator_forward.3} parent=5 // pred_check
      _
    $region34: #{discriminator_forward.3} parent=5 // pred_check_branch
      %166 = sbr.rel (%p163) target = $region36
    $region35: #{discriminator_forward.3} parent=5 // pred_region
      %s167 = ssub.s32 %s10, 1
      %p168 = scmp.lt.s32.totalorder %s15, 1
      %s169 = scalar_select %p168, %s15, 1
      %s170 = smul.addr %s169, 24
      %s171 = smul.addr %s170, 8
      %s172 = scalar_lea.vmem %s0, %s171
      %p173 = pneg %p36
      %p174 = pneg %p33
      %p175 = pneg %p57
      %p176 = pneg %p54
      %p177 = pneg %p78
      %p178 = pneg %p75
      %p179 = pneg %p99
      %p180 = pneg %p96
      %p181 = pneg %p125
      %p182 = pneg %p122
      %p183 = scmp.lt.s32.totalorder %s15, 1
      %s184 = scalar_select %p183, %s15, 1
      %s185 = smul.addr %s184, 2
      %s186 = smul.addr %s185, 8
      %s187 = scalar_lea.vmem %s4, %s186
      %p188 = scmp.lt.s32.totalorder %s15, 1
      %s189 = scalar_select %p188, %s15, 1
      %s190 = smul.addr %s189, 24
      %s191 = smul.addr %s190, 8
      %s192 = scalar_lea.vmem %s0, %s191
      %p193 = scmp.lt.s32.totalorder %s15, 1
      %s194 = scalar_select %p193, %s15, 1
      %s195 = smul.addr %s194, 2
      %s196 = smul.addr %s195, 8
      %s197 = scalar_lea.vmem %s4, %s196
      %v198 = vld [vmem:[%s192] sm:$0xff]
      %v199 = vld [vmem:[%s192 + $0x8] sm:$0xf]
      %v200 = vld [vmem:[%s192 + $0x10] sm:$0xff]
      %v201 = vld [vmem:[%s192 + $0x18] sm:$0xf]
      %v202 = vld [vmem:[%s192 + $0x20] sm:$0xff]
      %v203 = vld [vmem:[%s192 + $0x28] sm:$0xf]
      %v204 = vld [vmem:[%s192 + $0x30] sm:$0xff]
      %v205 = vld [vmem:[%s192 + $0x38] sm:$0xf]
      %v206 = vld [vmem:[%s192 + $0x40] sm:$0xff]
      %v207 = vld [vmem:[%s192 + $0x48] sm:$0xf]
      %v208 = vld [vmem:[%s192 + $0x50] sm:$0xff]
      %v209 = vld [vmem:[%s192 + $0x58] sm:$0xf]
      %v210 = vld [vmem:[%s192 + $0x60] sm:$0xff]
      %v211 = vld [vmem:[%s192 + $0x68] sm:$0xf]
      %v212 = vld [vmem:[%s192 + $0x70] sm:$0xff]
      %v213 = vld [vmem:[%s192 + $0x78] sm:$0xf]
      %v214 = vld [vmem:[%s192 + $0x80] sm:$0xff]
      %v215 = vld [vmem:[%s192 + $0x88] sm:$0xf]
      %v216 = vld [vmem:[%s192 + $0x90] sm:$0xff]
      %v217 = vld [vmem:[%s192 + $0x98] sm:$0xf]
      %v218 = vld [vmem:[%s192 + $0xa0] sm:$0xff]
      %v219 = vld [vmem:[%s192 + $0xa8] sm:$0xf]
      %v220 = vld [vmem:[%s192 + $0xb0] sm:$0xff]
      %v221 = vld [vmem:[%s192 + $0xb8] sm:$0xf]
      %v222 = vld [vmem:[%s1] sm:$0x1]
      %v224 = vperm.slane %v222, 0
      %v226 = vmul.f32 %v198, %v224
      %v227 = vmul.f32 %v199, %v224
      %v228 = vmul.f32 %v200, %v224
      %v229 = vmul.f32 %v201, %v224
      %v230 = vmul.f32 %v202, %v224
      %v231 = vmul.f32 %v203, %v224
      %v232 = vmul.f32 %v204, %v224
      %v233 = vmul.f32 %v205, %v224
      %v234 = vmul.f32 %v206, %v224
      %v235 = vmul.f32 %v207, %v224
      %v236 = vmul.f32 %v208, %v224
      %v237 = vmul.f32 %v209, %v224
      %v238 = vmul.f32 %v210, %v224
      %v239 = vmul.f32 %v211, %v224
      %v240 = vmul.f32 %v212, %v224
      %v241 = vmul.f32 %v213, %v224
      %v242 = vmul.f32 %v214, %v224
      %v243 = vmul.f32 %v215, %v224
      %v244 = vmul.f32 %v216, %v224
      %v245 = vmul.f32 %v217, %v224
      %v246 = vmul.f32 %v218, %v224
      %v247 = vmul.f32 %v219, %v224
      %v248 = vmul.f32 %v220, %v224
      %v249 = vmul.f32 %v221, %v224
      %v250 = vld [vmem:[%s2] sm:$0x1]
      %v252 = vperm.slane %v250, 0
      %v254 = vadd.f32 %v226, %v252
      %v255 = vadd.f32 %v227, %v252
      %v256 = vadd.f32 %v228, %v252
      %v257 = vadd.f32 %v229, %v252
      %v258 = vadd.f32 %v230, %v252
      %v259 = vadd.f32 %v231, %v252
      %v260 = vadd.f32 %v232, %v252
      %v261 = vadd.f32 %v233, %v252
      %v262 = vadd.f32 %v234, %v252
      %v263 = vadd.f32 %v235, %v252
      %v264 = vadd.f32 %v236, %v252
      %v265 = vadd.f32 %v237, %v252
      %v266 = vadd.f32 %v238, %v252
      %v267 = vadd.f32 %v239, %v252
      %v268 = vadd.f32 %v240, %v252
      %v269 = vadd.f32 %v241, %v252
      %v270 = vadd.f32 %v242, %v252
      %v271 = vadd.f32 %v243, %v252
      %v272 = vadd.f32 %v244, %v252
      %v273 = vadd.f32 %v245, %v252
      %v274 = vadd.f32 %v246, %v252
      %v275 = vadd.f32 %v247, %v252
      %v276 = vadd.f32 %v248, %v252
      %v277 = vadd.f32 %v249, %v252
      %vm278 = vcmp.ge.f32.partialorder %v254, 0.0
      %vm279 = vcmp.ge.f32.partialorder %v255, 0.0
      %vm280 = vcmp.ge.f32.partialorder %v256, 0.0
      %vm281 = vcmp.ge.f32.partialorder %v257, 0.0
      %vm282 = vcmp.ge.f32.partialorder %v258, 0.0
      %vm283 = vcmp.ge.f32.partialorder %v259, 0.0
      %vm284 = vcmp.ge.f32.partialorder %v260, 0.0
      %vm285 = vcmp.ge.f32.partialorder %v261, 0.0
      %vm286 = vcmp.ge.f32.partialorder %v262, 0.0
      %vm287 = vcmp.ge.f32.partialorder %v263, 0.0
      %vm288 = vcmp.ge.f32.partialorder %v264, 0.0
      %vm289 = vcmp.ge.f32.partialorder %v265, 0.0
      %vm290 = vcmp.ge.f32.partialorder %v266, 0.0
      %vm291 = vcmp.ge.f32.partialorder %v267, 0.0
      %vm292 = vcmp.ge.f32.partialorder %v268, 0.0
      %vm293 = vcmp.ge.f32.partialorder %v269, 0.0
      %vm294 = vcmp.ge.f32.partialorder %v270, 0.0
      %vm295 = vcmp.ge.f32.partialorder %v271, 0.0
      %vm296 = vcmp.ge.f32.partialorder %v272, 0.0
      %vm297 = vcmp.ge.f32.partialorder %v273, 0.0
      %vm298 = vcmp.ge.f32.partialorder %v274, 0.0
      %vm299 = vcmp.ge.f32.partialorder %v275, 0.0
      %vm300 = vcmp.ge.f32.partialorder %v276, 0.0
      %vm301 = vcmp.ge.f32.partialorder %v277, 0.0
      %v302 = vmul.f32 %v254, 0.2
      %v303 = vmul.f32 %v255, 0.2
      %v304 = vmul.f32 %v256, 0.2
      %v305 = vmul.f32 %v257, 0.2
      %v306 = vmul.f32 %v258, 0.2
      %v307 = vmul.f32 %v259, 0.2
      %v308 = vmul.f32 %v260, 0.2
      %v309 = vmul.f32 %v261, 0.2
      %v310 = vmul.f32 %v262, 0.2
      %v311 = vmul.f32 %v263, 0.2
      %v312 = vmul.f32 %v264, 0.2
      %v313 = vmul.f32 %v265, 0.2
      %v314 = vmul.f32 %v266, 0.2
      %v315 = vmul.f32 %v267, 0.2
      %v316 = vmul.f32 %v268, 0.2
      %v317 = vmul.f32 %v269, 0.2
      %v318 = vmul.f32 %v270, 0.2
      %v319 = vmul.f32 %v271, 0.2
      %v320 = vmul.f32 %v272, 0.2
      %v321 = vmul.f32 %v273, 0.2
      %v322 = vmul.f32 %v274, 0.2
      %v323 = vmul.f32 %v275, 0.2
      %v324 = vmul.f32 %v276, 0.2
      %v325 = vmul.f32 %v277, 0.2
      %v326 = vsel %vm278, %v254, %v302
      %v327 = vsel %vm279, %v255, %v303
      %v328 = vsel %vm280, %v256, %v304
      %v329 = vsel %vm281, %v257, %v305
      %v330 = vsel %vm282, %v258, %v306
      %v331 = vsel %vm283, %v259, %v307
      %v332 = vsel %vm284, %v260, %v308
      %v333 = vsel %vm285, %v261, %v309
      %v334 = vsel %vm286, %v262, %v310
      %v335 = vsel %vm287, %v263, %v311
      %v336 = vsel %vm288, %v264, %v312
      %v337 = vsel %vm289, %v265, %v313
      %v338 = vsel %vm290, %v266, %v314
      %v339 = vsel %vm291, %v267, %v315
      %v340 = vsel %vm292, %v268, %v316
      %v341 = vsel %vm293, %v269, %v317
      %v342 = vsel %vm294, %v270, %v318
      %v343 = vsel %vm295, %v271, %v319
      %v344 = vsel %vm296, %v272, %v320
      %v345 = vsel %vm297, %v273, %v321
      %v346 = vsel %vm298, %v274, %v322
      %v347 = vsel %vm299, %v275, %v323
      %v348 = vsel %vm300, %v276, %v324
      %v349 = vsel %vm301, %v277, %v325
      %v350 = vld [vmem:[%s3] sm:$0xff]
      %v351 = vld [vmem:[%s3 + $0x8] sm:$0x1]
      %v352 = vperm.slane %v350, 0
      %v353 = vmul.f32 %v326, %v352
      %v354 = vmul.f32 %v327, %v352
      %v355 = vmul.f32 %v328, %v352
      %v356 = vmul.f32 %v329, %v352
      %v357 = vmul.f32 %v330, %v352
      %v358 = vmul.f32 %v331, %v352
      %v359 = vmul.f32 %v332, %v352
      %v360 = vmul.f32 %v333, %v352
      %v361 = vmul.f32 %v334, %v352
      %v362 = vmul.f32 %v335, %v352
      %v363 = vmul.f32 %v336, %v352
      %v364 = vmul.f32 %v337, %v352
      %v365 = vmul.f32 %v338, %v352
      %v366 = vmul.f32 %v339, %v352
      %v367 = vmul.f32 %v340, %v352
      %v368 = vmul.f32 %v341, %v352
      %v369 = vmul.f32 %v342, %v352
      %v370 = vmul.f32 %v343, %v352
      %v371 = vmul.f32 %v344, %v352
      %v372 = vmul.f32 %v345, %v352
      %v373 = vperm.slane %v350, 1
      %v374 = vmul.f32 %v326, %v373
      %v375 = vmul.f32 %v327, %v373
      %v376 = vmul.f32 %v328, %v373
      %v377 = vmul.f32 %v329, %v373
      %v378 = vmul.f32 %v330, %v373
      %v379 = vmul.f32 %v331, %v373
      %v380 = vmul.f32 %v332, %v373
      %v381 = vmul.f32 %v333, %v373
      %v382 = vmul.f32 %v334, %v373
      %v383 = vmul.f32 %v335, %v373
      %v384 = vmul.f32 %v336, %v373
      %v385 = vmul.f32 %v337, %v373
      %v386 = vmul.f32 %v338, %v373
      %v387 = vmul.f32 %v339, %v373
      %v388 = vmul.f32 %v340, %v373
      %v389 = vmul.f32 %v341, %v373
      %v390 = vmul.f32 %v342, %v373
      %v391 = vmul.f32 %v343, %v373
      %v392 = vmul.f32 %v344, %v373
      %v393 = vmul.f32 %v345, %v373
      %vm414 = vcmask 1046528
      %v415 = vrot.slane %v374, 1
      %v416 = vrot.slane %v375, 1
      %v417 = vsel %vm414, %v415, %v416
      %v418 = vrot.slane %v376, 1
      %v419 = vrot.slane %v377, 1
      %v420 = vsel %vm414, %v418, %v419
      %v421 = vrot.slane %v378, 1
      %v422 = vrot.slane %v379, 1
      %v423 = vsel %vm414, %v421, %v422
      %v424 = vrot.slane %v380, 1
      %v425 = vrot.slane %v381, 1
      %v426 = vsel %vm414, %v424, %v425
      %v427 = vrot.slane %v382, 1
      %v428 = vrot.slane %v383, 1
      %v429 = vsel %vm414, %v427, %v428
      %v430 = vrot.slane %v384, 1
      %v431 = vrot.slane %v385, 1
      %v432 = vsel %vm414, %v430, %v431
      %v433 = vrot.slane %v386, 1
      %v434 = vrot.slane %v387, 1
      %v435 = vsel %vm414, %v433, %v434
      %v436 = vrot.slane %v388, 1
      %v437 = vrot.slane %v389, 1
      %v438 = vsel %vm414, %v436, %v437
      %v439 = vrot.slane %v390, 1
      %v440 = vrot.slane %v391, 1
      %v441 = vsel %vm414, %v439, %v440
      %v442 = vrot.slane %v392, 1
      %v443 = vrot.slane %v393, 1
      %v444 = vsel %vm414, %v442, %v443
      %v465 = vadd.f32 %v353, %v417
      %v466 = vadd.f32 %v354, %v416
      %v467 = vadd.f32 %v355, %v420
      %v468 = vadd.f32 %v356, %v419
      %v469 = vadd.f32 %v357, %v423
      %v470 = vadd.f32 %v358, %v422
      %v471 = vadd.f32 %v359, %v426
      %v472 = vadd.f32 %v360, %v425
      %v473 = vadd.f32 %v361, %v429
      %v474 = vadd.f32 %v362, %v428
      %v475 = vadd.f32 %v363, %v432
      %v476 = vadd.f32 %v364, %v431
      %v477 = vadd.f32 %v365, %v435
      %v478 = vadd.f32 %v366, %v434
      %v479 = vadd.f32 %v367, %v438
      %v480 = vadd.f32 %v368, %v437
      %v481 = vadd.f32 %v369, %v441
      %v482 = vadd.f32 %v370, %v440
      %v483 = vadd.f32 %v371, %v444
      %v484 = vadd.f32 %v372, %v443
      %v485 = vperm.slane %v350, 2
      %v486 = vmul.f32 %v326, %v485
      %v487 = vmul.f32 %v327, %v485
      %v488 = vmul.f32 %v328, %v485
      %v489 = vmul.f32 %v329, %v485
      %v490 = vmul.f32 %v330, %v485
      %v491 = vmul.f32 %v331, %v485
      %v492 = vmul.f32 %v332, %v485
      %v493 = vmul.f32 %v333, %v485
      %v494 = vmul.f32 %v334, %v485
      %v495 = vmul.f32 %v335, %v485
      %v496 = vmul.f32 %v336, %v485
      %v497 = vmul.f32 %v337, %v485
      %v498 = vmul.f32 %v338, %v485
      %v499 = vmul.f32 %v339, %v485
      %v500 = vmul.f32 %v340, %v485
      %v501 = vmul.f32 %v341, %v485
      %v502 = vmul.f32 %v342, %v485
      %v503 = vmul.f32 %v343, %v485
      %v504 = vmul.f32 %v344, %v485
      %v505 = vmul.f32 %v345, %v485
      %vm526 = vcmask 1045504
      %v527 = vrot.slane %v486, 2
      %v528 = vrot.slane %v487, 2
      %v529 = vsel %vm526, %v527, %v528
      %v530 = vrot.slane %v488, 2
      %v531 = vrot.slane %v489, 2
      %v532 = vsel %vm526, %v530, %v531
      %v533 = vrot.slane %v490, 2
      %v534 = vrot.slane %v491, 2
      %v535 = vsel %vm526, %v533, %v534
      %v536 = vrot.slane %v492, 2
      %v537 = vrot.slane %v493, 2
      %v538 = vsel %vm526, %v536, %v537
      %v539 = vrot.slane %v494, 2
      %v540 = vrot.slane %v495, 2
      %v541 = vsel %vm526, %v539, %v540
      %v542 = vrot.slane %v496, 2
      %v543 = vrot.slane %v497, 2
      %v544 = vsel %vm526, %v542, %v543
      %v545 = vrot.slane %v498, 2
      %v546 = vrot.slane %v499, 2
      %v547 = vsel %vm526, %v545, %v546
      %v548 = vrot.slane %v500, 2
      %v549 = vrot.slane %v501, 2
      %v550 = vsel %vm526, %v548, %v549
      %v551 = vrot.slane %v502, 2
      %v552 = vrot.slane %v503, 2
      %v553 = vsel %vm526, %v551, %v552
      %v554 = vrot.slane %v504, 2
      %v555 = vrot.slane %v505, 2
      %v556 = vsel %vm526, %v554, %v555
      %v577 = vadd.f32 %v465, %v529
      %v578 = vadd.f32 %v466, %v528
      %v579 = vadd.f32 %v467, %v532
      %v580 = vadd.f32 %v468, %v531
      %v581 = vadd.f32 %v469, %v535
      %v582 = vadd.f32 %v470, %v534
      %v583 = vadd.f32 %v471, %v538
      %v584 = vadd.f32 %v472, %v537
      %v585 = vadd.f32 %v473, %v541
      %v586 = vadd.f32 %v474, %v540
      %v587 = vadd.f32 %v475, %v544
      %v588 = vadd.f32 %v476, %v543
      %v589 = vadd.f32 %v477, %v547
      %v590 = vadd.f32 %v478, %v546
      %v591 = vadd.f32 %v479, %v550
      %v592 = vadd.f32 %v480, %v549
      %v593 = vadd.f32 %v481, %v553
      %v594 = vadd.f32 %v482, %v552
      %v595 = vadd.f32 %v483, %v556
      %v596 = vadd.f32 %v484, %v555
      %v597 = vperm.slane %v350, 3
      %v598 = vmul.f32 %v328, %v597
      %v599 = vmul.f32 %v329, %v597
      %v600 = vmul.f32 %v330, %v597
      %v601 = vmul.f32 %v331, %v597
      %v602 = vmul.f32 %v332, %v597
      %v603 = vmul.f32 %v333, %v597
      %v604 = vmul.f32 %v334, %v597
      %v605 = vmul.f32 %v335, %v597
      %v606 = vmul.f32 %v336, %v597
      %v607 = vmul.f32 %v337, %v597
      %v608 = vmul.f32 %v338, %v597
      %v609 = vmul.f32 %v339, %v597
      %v610 = vmul.f32 %v340, %v597
      %v611 = vmul.f32 %v341, %v597
      %v612 = vmul.f32 %v342, %v597
      %v613 = vmul.f32 %v343, %v597
      %v614 = vmul.f32 %v344, %v597
      %v615 = vmul.f32 %v345, %v597
      %v616 = vmul.f32 %v346, %v597
      %v617 = vmul.f32 %v347, %v597
      %v618 = vadd.f32 %v577, %v598
      %v619 = vadd.f32 %v578, %v599
      %v620 = vadd.f32 %v579, %v600
      %v621 = vadd.f32 %v580, %v601
      %v622 = vadd.f32 %v581, %v602
      %v623 = vadd.f32 %v582, %v603
      %v624 = vadd.f32 %v583, %v604
      %v625 = vadd.f32 %v584, %v605
      %v626 = vadd.f32 %v585, %v606
      %v627 = vadd.f32 %v586, %v607
      %v628 = vadd.f32 %v587, %v608
      %v629 = vadd.f32 %v588, %v609
      %v630 = vadd.f32 %v589, %v610
      %v631 = vadd.f32 %v590, %v611
      %v632 = vadd.f32 %v591, %v612
      %v633 = vadd.f32 %v592, %v613
      %v634 = vadd.f32 %v593, %v614
      %v635 = vadd.f32 %v594, %v615
      %v636 = vadd.f32 %v595, %v616
      %v637 = vadd.f32 %v596, %v617
      %v638 = vperm.slane %v350, 4
      %v639 = vmul.f32 %v328, %v638
      %v640 = vmul.f32 %v329, %v638
      %v641 = vmul.f32 %v330, %v638
      %v642 = vmul.f32 %v331, %v638
      %v643 = vmul.f32 %v332, %v638
      %v644 = vmul.f32 %v333, %v638
      %v645 = vmul.f32 %v334, %v638
      %v646 = vmul.f32 %v335, %v638
      %v647 = vmul.f32 %v336, %v638
      %v648 = vmul.f32 %v337, %v638
      %v649 = vmul.f32 %v338, %v638
      %v650 = vmul.f32 %v339, %v638
      %v651 = vmul.f32 %v340, %v638
      %v652 = vmul.f32 %v341, %v638
      %v653 = vmul.f32 %v342, %v638
      %v654 = vmul.f32 %v343, %v638
      %v655 = vmul.f32 %v344, %v638
      %v656 = vmul.f32 %v345, %v638
      %v657 = vmul.f32 %v346, %v638
      %v658 = vmul.f32 %v347, %v638
      %v679 = vrot.slane %v639, 1
      %v680 = vrot.slane %v640, 1
      %v681 = vsel %vm414, %v679, %v680
      %v682 = vrot.slane %v641, 1
      %v683 = vrot.slane %v642, 1
      %v684 = vsel %vm414, %v682, %v683
      %v685 = vrot.slane %v643, 1
      %v686 = vrot.slane %v644, 1
      %v687 = vsel %vm414, %v685, %v686
      %v688 = vrot.slane %v645, 1
      %v689 = vrot.slane %v646, 1
      %v690 = vsel %vm414, %v688, %v689
      %v691 = vrot.slane %v647, 1
      %v692 = vrot.slane %v648, 1
      %v693 = vsel %vm414, %v691, %v692
      %v694 = vrot.slane %v649, 1
      %v695 = vrot.slane %v650, 1
      %v696 = vsel %vm414, %v694, %v695
      %v697 = vrot.slane %v651, 1
      %v698 = vrot.slane %v652, 1
      %v699 = vsel %vm414, %v697, %v698
      %v700 = vrot.slane %v653, 1
      %v701 = vrot.slane %v654, 1
      %v702 = vsel %vm414, %v700, %v701
      %v703 = vrot.slane %v655, 1
      %v704 = vrot.slane %v656, 1
      %v705 = vsel %vm414, %v703, %v704
      %v706 = vrot.slane %v657, 1
      %v707 = vrot.slane %v658, 1
      %v708 = vsel %vm414, %v706, %v707
      %v729 = vadd.f32 %v618, %v681
      %v730 = vadd.f32 %v619, %v680
      %v731 = vadd.f32 %v620, %v684
      %v732 = vadd.f32 %v621, %v683
      %v733 = vadd.f32 %v622, %v687
      %v734 = vadd.f32 %v623, %v686
      %v735 = vadd.f32 %v624, %v690
      %v736 = vadd.f32 %v625, %v689
      %v737 = vadd.f32 %v626, %v693
      %v738 = vadd.f32 %v627, %v692
      %v739 = vadd.f32 %v628, %v696
      %v740 = vadd.f32 %v629, %v695
      %v741 = vadd.f32 %v630, %v699
      %v742 = vadd.f32 %v631, %v698
      %v743 = vadd.f32 %v632, %v702
      %v744 = vadd.f32 %v633, %v701
      %v745 = vadd.f32 %v634, %v705
      %v746 = vadd.f32 %v635, %v704
      %v747 = vadd.f32 %v636, %v708
      %v748 = vadd.f32 %v637, %v707
      %v749 = vperm.slane %v350, 5
      %v750 = vmul.f32 %v328, %v749
      %v751 = vmul.f32 %v329, %v749
      %v752 = vmul.f32 %v330, %v749
      %v753 = vmul.f32 %v331, %v749
      %v754 = vmul.f32 %v332, %v749
      %v755 = vmul.f32 %v333, %v749
      %v756 = vmul.f32 %v334, %v749
      %v757 = vmul.f32 %v335, %v749
      %v758 = vmul.f32 %v336, %v749
      %v759 = vmul.f32 %v337, %v749
      %v760 = vmul.f32 %v338, %v749
      %v761 = vmul.f32 %v339, %v749
      %v762 = vmul.f32 %v340, %v749
      %v763 = vmul.f32 %v341, %v749
      %v764 = vmul.f32 %v342, %v749
      %v765 = vmul.f32 %v343, %v749
      %v766 = vmul.f32 %v344, %v749
      %v767 = vmul.f32 %v345, %v749
      %v768 = vmul.f32 %v346, %v749
      %v769 = vmul.f32 %v347, %v749
      %v790 = vrot.slane %v750, 2
      %v791 = vrot.slane %v751, 2
      %v792 = vsel %vm526, %v790, %v791
      %v793 = vrot.slane %v752, 2
      %v794 = vrot.slane %v753, 2
      %v795 = vsel %vm526, %v793, %v794
      %v796 = vrot.slane %v754, 2
      %v797 = vrot.slane %v755, 2
      %v798 = vsel %vm526, %v796, %v797
      %v799 = vrot.slane %v756, 2
      %v800 = vrot.slane %v757, 2
      %v801 = vsel %vm526, %v799, %v800
      %v802 = vrot.slane %v758, 2
      %v803 = vrot.slane %v759, 2
      %v804 = vsel %vm526, %v802, %v803
      %v805 = vrot.slane %v760, 2
      %v806 = vrot.slane %v761, 2
      %v807 = vsel %vm526, %v805, %v806
      %v808 = vrot.slane %v762, 2
      %v809 = vrot.slane %v763, 2
      %v810 = vsel %vm526, %v808, %v809
      %v811 = vrot.slane %v764, 2
      %v812 = vrot.slane %v765, 2
      %v813 = vsel %vm526, %v811, %v812
      %v814 = vrot.slane %v766, 2
      %v815 = vrot.slane %v767, 2
      %v816 = vsel %vm526, %v814, %v815
      %v817 = vrot.slane %v768, 2
      %v818 = vrot.slane %v769, 2
      %v819 = vsel %vm526, %v817, %v818
      %v840 = vadd.f32 %v729, %v792
      %v841 = vadd.f32 %v730, %v791
      %v842 = vadd.f32 %v731, %v795
      %v843 = vadd.f32 %v732, %v794
      %v844 = vadd.f32 %v733, %v798
      %v845 = vadd.f32 %v734, %v797
      %v846 = vadd.f32 %v735, %v801
      %v847 = vadd.f32 %v736, %v800
      %v848 = vadd.f32 %v737, %v804
      %v849 = vadd.f32 %v738, %v803
      %v850 = vadd.f32 %v739, %v807
      %v851 = vadd.f32 %v740, %v806
      %v852 = vadd.f32 %v741, %v810
      %v853 = vadd.f32 %v742, %v809
      %v854 = vadd.f32 %v743, %v813
      %v855 = vadd.f32 %v744, %v812
      %v856 = vadd.f32 %v745, %v816
      %v857 = vadd.f32 %v746, %v815
      %v858 = vadd.f32 %v747, %v819
      %v859 = vadd.f32 %v748, %v818
      %v860 = vperm.slane %v350, 6
      %v861 = vmul.f32 %v330, %v860
      %v862 = vmul.f32 %v331, %v860
      %v863 = vmul.f32 %v332, %v860
      %v864 = vmul.f32 %v333, %v860
      %v865 = vmul.f32 %v334, %v860
      %v866 = vmul.f32 %v335, %v860
      %v867 = vmul.f32 %v336, %v860
      %v868 = vmul.f32 %v337, %v860
      %v869 = vmul.f32 %v338, %v860
      %v870 = vmul.f32 %v339, %v860
      %v871 = vmul.f32 %v340, %v860
      %v872 = vmul.f32 %v341, %v860
      %v873 = vmul.f32 %v342, %v860
      %v874 = vmul.f32 %v343, %v860
      %v875 = vmul.f32 %v344, %v860
      %v876 = vmul.f32 %v345, %v860
      %v877 = vmul.f32 %v346, %v860
      %v878 = vmul.f32 %v347, %v860
      %v879 = vmul.f32 %v348, %v860
      %v880 = vmul.f32 %v349, %v860
      %v881 = vadd.f32 %v840, %v861
      %v882 = vadd.f32 %v841, %v862
      %v883 = vadd.f32 %v842, %v863
      %v884 = vadd.f32 %v843, %v864
      %v885 = vadd.f32 %v844, %v865
      %v886 = vadd.f32 %v845, %v866
      %v887 = vadd.f32 %v846, %v867
      %v888 = vadd.f32 %v847, %v868
      %v889 = vadd.f32 %v848, %v869
      %v890 = vadd.f32 %v849, %v870
      %v891 = vadd.f32 %v850, %v871
      %v892 = vadd.f32 %v851, %v872
      %v893 = vadd.f32 %v852, %v873
      %v894 = vadd.f32 %v853, %v874
      %v895 = vadd.f32 %v854, %v875
      %v896 = vadd.f32 %v855, %v876
      %v897 = vadd.f32 %v856, %v877
      %v898 = vadd.f32 %v857, %v878
      %v899 = vadd.f32 %v858, %v879
      %v900 = vadd.f32 %v859, %v880
      %v901 = vperm.slane %v350, 7
      %v902 = vmul.f32 %v330, %v901
      %v903 = vmul.f32 %v331, %v901
      %v904 = vmul.f32 %v332, %v901
      %v905 = vmul.f32 %v333, %v901
      %v906 = vmul.f32 %v334, %v901
      %v907 = vmul.f32 %v335, %v901
      %v908 = vmul.f32 %v336, %v901
      %v909 = vmul.f32 %v337, %v901
      %v910 = vmul.f32 %v338, %v901
      %v911 = vmul.f32 %v339, %v901
      %v912 = vmul.f32 %v340, %v901
      %v913 = vmul.f32 %v341, %v901
      %v914 = vmul.f32 %v342, %v901
      %v915 = vmul.f32 %v343, %v901
      %v916 = vmul.f32 %v344, %v901
      %v917 = vmul.f32 %v345, %v901
      %v918 = vmul.f32 %v346, %v901
      %v919 = vmul.f32 %v347, %v901
      %v920 = vmul.f32 %v348, %v901
      %v921 = vmul.f32 %v349, %v901
      %v942 = vrot.slane %v902, 1
      %v943 = vrot.slane %v903, 1
      %v944 = vsel %vm414, %v942, %v943
      %v945 = vrot.slane %v904, 1
      %v946 = vrot.slane %v905, 1
      %v947 = vsel %vm414, %v945, %v946
      %v948 = vrot.slane %v906, 1
      %v949 = vrot.slane %v907, 1
      %v950 = vsel %vm414, %v948, %v949
      %v951 = vrot.slane %v908, 1
      %v952 = vrot.slane %v909, 1
      %v953 = vsel %vm414, %v951, %v952
      %v954 = vrot.slane %v910, 1
      %v955 = vrot.slane %v911, 1
      %v956 = vsel %vm414, %v954, %v955
      %v957 = vrot.slane %v912, 1
      %v958 = vrot.slane %v913, 1
      %v959 = vsel %vm414, %v957, %v958
      %v960 = vrot.slane %v914, 1
      %v961 = vrot.slane %v915, 1
      %v962 = vsel %vm414, %v960, %v961
      %v963 = vrot.slane %v916, 1
      %v964 = vrot.slane %v917, 1
      %v965 = vsel %vm414, %v963, %v964
      %v966 = vrot.slane %v918, 1
      %v967 = vrot.slane %v919, 1
      %v968 = vsel %vm414, %v966, %v967
      %v969 = vrot.slane %v920, 1
      %v970 = vrot.slane %v921, 1
      %v971 = vsel %vm414, %v969, %v970
      %v992 = vadd.f32 %v881, %v944
      %v993 = vadd.f32 %v882, %v943
      %v994 = vadd.f32 %v883, %v947
      %v995 = vadd.f32 %v884, %v946
      %v996 = vadd.f32 %v885, %v950
      %v997 = vadd.f32 %v886, %v949
      %v998 = vadd.f32 %v887, %v953
      %v999 = vadd.f32 %v888, %v952
      %v1000 = vadd.f32 %v889, %v956
      %v1001 = vadd.f32 %v890, %v955
      %v1002 = vadd.f32 %v891, %v959
      %v1003 = vadd.f32 %v892, %v958
      %v1004 = vadd.f32 %v893, %v962
      %v1005 = vadd.f32 %v894, %v961
      %v1006 = vadd.f32 %v895, %v965
      %v1007 = vadd.f32 %v896, %v964
      %v1008 = vadd.f32 %v897, %v968
      %v1009 = vadd.f32 %v898, %v967
      %v1010 = vadd.f32 %v899, %v971
      %v1011 = vadd.f32 %v900, %v970
      %v1012 = vperm.slane %v351, 0
      %v1013 = vmul.f32 %v330, %v1012
      %v1014 = vmul.f32 %v331, %v1012
      %v1015 = vmul.f32 %v332, %v1012
      %v1016 = vmul.f32 %v333, %v1012
      %v1017 = vmul.f32 %v334, %v1012
      %v1018 = vmul.f32 %v335, %v1012
      %v1019 = vmul.f32 %v336, %v1012
      %v1020 = vmul.f32 %v337, %v1012
      %v1021 = vmul.f32 %v338, %v1012
      %v1022 = vmul.f32 %v339, %v1012
      %v1023 = vmul.f32 %v340, %v1012
      %v1024 = vmul.f32 %v341, %v1012
      %v1025 = vmul.f32 %v342, %v1012
      %v1026 = vmul.f32 %v343, %v1012
      %v1027 = vmul.f32 %v344, %v1012
      %v1028 = vmul.f32 %v345, %v1012
      %v1029 = vmul.f32 %v346, %v1012
      %v1030 = vmul.f32 %v347, %v1012
      %v1031 = vmul.f32 %v348, %v1012
      %v1032 = vmul.f32 %v349, %v1012
      %v1053 = vrot.slane %v1013, 2
      %v1054 = vrot.slane %v1014, 2
      %v1055 = vsel %vm526, %v1053, %v1054
      %v1056 = vrot.slane %v1015, 2
      %v1057 = vrot.slane %v1016, 2
      %v1058 = vsel %vm526, %v1056, %v1057
      %v1059 = vrot.slane %v1017, 2
      %v1060 = vrot.slane %v1018, 2
      %v1061 = vsel %vm526, %v1059, %v1060
      %v1062 = vrot.slane %v1019, 2
      %v1063 = vrot.slane %v1020, 2
      %v1064 = vsel %vm526, %v1062, %v1063
      %v1065 = vrot.slane %v1021, 2
      %v1066 = vrot.slane %v1022, 2
      %v1067 = vsel %vm526, %v1065, %v1066
      %v1068 = vrot.slane %v1023, 2
      %v1069 = vrot.slane %v1024, 2
      %v1070 = vsel %vm526, %v1068, %v1069
      %v1071 = vrot.slane %v1025, 2
      %v1072 = vrot.slane %v1026, 2
      %v1073 = vsel %vm526, %v1071, %v1072
      %v1074 = vrot.slane %v1027, 2
      %v1075 = vrot.slane %v1028, 2
      %v1076 = vsel %vm526, %v1074, %v1075
      %v1077 = vrot.slane %v1029, 2
      %v1078 = vrot.slane %v1030, 2
      %v1079 = vsel %vm526, %v1077, %v1078
      %v1080 = vrot.slane %v1031, 2
      %v1081 = vrot.slane %v1032, 2
      %v1082 = vsel %vm526, %v1080, %v1081
      %v1103 = vadd.f32 %v992, %v1055
      %v1104 = vadd.f32 %v993, %v1054
      %v1105 = vadd.f32 %v994, %v1058
      %v1106 = vadd.f32 %v995, %v1057
      %v1107 = vadd.f32 %v996, %v1061
      %v1108 = vadd.f32 %v997, %v1060
      %v1109 = vadd.f32 %v998, %v1064
      %v1110 = vadd.f32 %v999, %v1063
      %v1111 = vadd.f32 %v1000, %v1067
      %v1112 = vadd.f32 %v1001, %v1066
      %v1113 = vadd.f32 %v1002, %v1070
      %v1114 = vadd.f32 %v1003, %v1069
      %v1115 = vadd.f32 %v1004, %v1073
      %v1116 = vadd.f32 %v1005, %v1072
      %v1117 = vadd.f32 %v1006, %v1076
      %v1118 = vadd.f32 %v1007, %v1075
      %v1119 = vadd.f32 %v1008, %v1079
      %v1120 = vadd.f32 %v1009, %v1078
      %v1121 = vadd.f32 %v1010, %v1082
      %v1122 = vadd.f32 %v1011, %v1081
      %1123 = vadd.xlane.f32.xlu0 %v1103
      %v1124 = vpop.xlane.xlu0 %1123
      %vm1125 = vcmask 1041408
      %v1126 = vsel %vm1125, %v1104, 0.0
      %1127 = vadd.xlane.f32.xlu0 %v1126
      %v1128 = vpop.xlane.xlu0 %1127
      %1129 = vadd.xlane.f32.xlu0 %v1105
      %v1130 = vpop.xlane.xlu0 %1129
      %v1131 = vsel %vm1125, %v1106, 0.0
      %1132 = vadd.xlane.f32.xlu0 %v1131
      %v1133 = vpop.xlane.xlu0 %1132
      %1134 = vadd.xlane.f32.xlu0 %v1107
      %v1135 = vpop.xlane.xlu0 %1134
      %v1136 = vsel %vm1125, %v1108, 0.0
      %1137 = vadd.xlane.f32.xlu0 %v1136
      %v1138 = vpop.xlane.xlu0 %1137
      %1139 = vadd.xlane.f32.xlu0 %v1109
      %v1140 = vpop.xlane.xlu0 %1139
      %v1141 = vsel %vm1125, %v1110, 0.0
      %1142 = vadd.xlane.f32.xlu0 %v1141
      %v1143 = vpop.xlane.xlu0 %1142
      %1144 = vadd.xlane.f32.xlu0 %v1111
      %v1145 = vpop.xlane.xlu0 %1144
      %v1146 = vsel %vm1125, %v1112, 0.0
      %1147 = vadd.xlane.f32.xlu0 %v1146
      %v1148 = vpop.xlane.xlu0 %1147
      %1149 = vadd.xlane.f32.xlu0 %v1113
      %v1150 = vpop.xlane.xlu0 %1149
      %v1151 = vsel %vm1125, %v1114, 0.0
      %1152 = vadd.xlane.f32.xlu0 %v1151
      %v1153 = vpop.xlane.xlu0 %1152
      %1154 = vadd.xlane.f32.xlu0 %v1115
      %v1155 = vpop.xlane.xlu0 %1154
      %v1156 = vsel %vm1125, %v1116, 0.0
      %1157 = vadd.xlane.f32.xlu0 %v1156
      %v1158 = vpop.xlane.xlu0 %1157
      %1159 = vadd.xlane.f32.xlu0 %v1117
      %v1160 = vpop.xlane.xlu0 %1159
      %v1161 = vsel %vm1125, %v1118, 0.0
      %1162 = vadd.xlane.f32.xlu0 %v1161
      %v1163 = vpop.xlane.xlu0 %1162
      %1164 = vadd.xlane.f32.xlu0 %v1119
      %v1165 = vpop.xlane.xlu0 %1164
      %v1166 = vsel %vm1125, %v1120, 0.0
      %1167 = vadd.xlane.f32.xlu0 %v1166
      %v1168 = vpop.xlane.xlu0 %1167
      %1169 = vadd.xlane.f32.xlu0 %v1121
      %v1170 = vpop.xlane.xlu0 %1169
      %v1171 = vsel %vm1125, %v1122, 0.0
      %1172 = vadd.xlane.f32.xlu0 %v1171
      %v1173 = vpop.xlane.xlu0 %1172
      %v1194 = vlaneseq
      %v1195 = vand.u32 %v1194, 127
      %v1196 = vperm.slane %v1124, %v1195
      %v1197 = vadd.s32 %v1195, 4294967288
      %v1198 = vperm.slane %v1128, %v1197
      %vm1199 = vcmask 130112
      %v1200 = vsel %vm1199, %v1198, %v1196
      %v1201 = vperm.slane %v1130, %v1195
      %v1202 = vperm.slane %v1133, %v1197
      %v1203 = vsel %vm1199, %v1202, %v1201
      %v1204 = vperm.slane %v1135, %v1195
      %v1205 = vperm.slane %v1138, %v1197
      %v1206 = vsel %vm1199, %v1205, %v1204
      %v1207 = vperm.slane %v1140, %v1195
      %v1208 = vperm.slane %v1143, %v1197
      %v1209 = vsel %vm1199, %v1208, %v1207
      %v1210 = vperm.slane %v1145, %v1195
      %v1211 = vperm.slane %v1148, %v1197
      %v1212 = vsel %vm1199, %v1211, %v1210
      %v1213 = vperm.slane %v1150, %v1195
      %v1214 = vperm.slane %v1153, %v1197
      %v1215 = vsel %vm1199, %v1214, %v1213
      %v1216 = vperm.slane %v1155, %v1195
      %v1217 = vperm.slane %v1158, %v1197
      %v1218 = vsel %vm1199, %v1217, %v1216
      %v1219 = vperm.slane %v1160, %v1195
      %v1220 = vperm.slane %v1163, %v1197
      %v1221 = vsel %vm1199, %v1220, %v1219
      %v1222 = vperm.slane %v1165, %v1195
      %v1223 = vperm.slane %v1168, %v1197
      %v1224 = vsel %vm1199, %v1223, %v1222
      %v1225 = vperm.slane %v1170, %v1195
      %v1226 = vperm.slane %v1173, %v1197
      %v1227 = vsel %vm1199, %v1226, %v1225
      %vm1228 = vcmask 1041409
      %v1229 = vsel %vm1228, %v1203, %v1200
      %vm1230 = vcmask 1042434
      %v1231 = vsel %vm1230, %v1206, %v1229
      %vm1232 = vcmask 1043459
      %v1233 = vsel %vm1232, %v1209, %v1231
      %vm1234 = vcmask 1044484
      %v1235 = vsel %vm1234, %v1212, %v1233
      %vm1236 = vcmask 1045509
      %v1237 = vsel %vm1236, %v1215, %v1235
      %vm1238 = vcmask 1046534
      %v1239 = vsel %vm1238, %v1218, %v1237
      %vm1240 = vcmask 1047559
      %v1241 = vsel %vm1240, %v1221, %v1239
      %v1242 = vsel %vm1228, %v1227, %v1224
      %vm1245 = vcmask 80896
      %1246 = vst.msk [vmem:[%s197] sm:$0xff] %vm1245, %v1241
      %vm1247 = vcmask 74752
      %1248 = vst.msk [vmem:[%s197 + $0x8] sm:$0x3] %vm1247, %v1242
      %p1249 = scmp.lt.s32.totalorder %s15, 1
      %s1250 = scalar_select %p1249, %s15, 1
      %s1251 = smul.addr %s1250, 2
      %s1252 = smul.addr %s1251, 8
      %s1253 = scalar_lea.vmem %s4, %s1252
      // Predicated region
      $region37: #{discriminator_forward.3} parent=35 // pred_check
        %p1254 = pneg %p122
      $region38: #{discriminator_forward.3} parent=35 // pred_check_branch
        %1256 = sbr.rel (%p1254) target = $region40
      $region39: #{discriminator_forward.3} parent=35 // pred_region
        _
      $region40: #{discriminator_forward.3} parent=35 // pred_fallthru
        _
    $region36: #{discriminator_forward.3} parent=5 // pred_fallthru
      _
    %p1257 = scmp.le.s32.totalorder 2, %s10
    // Predicated region
    $region41: #{discriminator_forward.3} parent=5 // pred_check
      %p1258 = pneg %p1257
    $region42: #{discriminator_forward.3} parent=5 // pred_check_branch
      %1260 = sbr.rel (%p1258) target = $region44
    $region43: #{discriminator_forward.3} parent=5 // pred_region
      %s1261 = ssub.s32 %s10, 2
      // Predicated region
      $region45: #{discriminator_forward.3} parent=43 // pred_check
        %p1262 = pneg %p128
      $region46: #{discriminator_forward.3} parent=43 // pred_check_branch
        %1264 = sbr.rel (%p1262) target = $region48
      $region47: #{discriminator_forward.3} parent=43 // pred_region
        %p1265 = scmp.lt.s32.totalorder %s16, 1
        %s1266 = scalar_select %p1265, %s16, 1
        %s1267 = smul.addr %s1266, 2
        %s1268 = smul.addr %s1267, 8
        %s1269 = scalar_lea.vmem %s4, %s1268
      $region48: #{discriminator_forward.3} parent=43 // pred_fallthru
        _
    $region44: #{discriminator_forward.3} parent=5 // pred_fallthru
      _
  $region6: #{discriminator_forward.3} parent=0 // loop_footer
    %s14 = sadd.s32 1, %s10
  $region7: #{discriminator_forward.3} parent=0 // loop_footer_branch
    %9 = sbr.rel target = $region3
  $region8: #{discriminator_forward.3} parent=0 // loop_exit
    _

// kernel: discriminator_forward.2
$region0: #{discriminator_forward.2}
  #allocation0 [shape = 'u32[]', space=smem, size = 0x4, offset = 0x4, fixed_abs, tag = 'smem constant byte address 0x4 - core index']
  #allocation1 [shape = 'u32[72,128]{1,0:T(1,128)}', space=vmem, size = 0x9000, scoped, tag = 'internal scratch']
  %s0 = inlined_call_operand.vmem [shape: f32[2,16,16,2], index: 0, kind: input, shape index: {}]
  %s1 = inlined_call_operand.vmem [shape: f32[3,3,2,64], index: 1, kind: input, shape index: {}]
  %s2 = inlined_call_operand.vmem [shape: f32[1,64], index: 2, kind: input, shape index: {}]
  %s3 = inlined_call_operand.vmem [shape: bf16[576,128], index: 3, kind: input, shape index: {}]
  %s4 = inlined_call_operand.vmem [shape: f32[2,12,12,128], index: 4, kind: output, shape index: {0}]
  %s5 = inlined_call_operand.vmem [shape: f32[2,1,128], index: 5, kind: output, shape index: {1}]
  %s6 = inlined_call_operand.vmem [shape: f32[2,1,128], index: 6, kind: output, shape index: {2}]
  %7 = xla_tuple %s4, %s5, %s6
  %s8 = sld [smem:[#allocation0]]
  $region65: #{discriminator_forward.2} parent=0
    _
  %s10 = ssub.s32 1, %s8
  %s11 = scalar_select 0, %s10, %s8
  loop: start=0, step=1, limit=4
  $region2: #{discriminator_forward.2} parent=0 // loop_pre_header
    _
  $region3: #{discriminator_forward.2} parent=0 // loop_header
    %s13 = sphi 0, %s17
    %p14 = scmp.ge.s32.totalorder %s13, 4
    %s23 = sphi 0, %s25
    %s26 = sphi 0, %s23
    %s27 = sphi 0, %s26
    %s43 = sphi 0, %s27
    %s47 = sphi 0, %s47
    %s49 = sphi 0, %s47
    %s50 = sphi 0, %s49
    %s64 = sphi 0, %s50
    %s68 = sphi 0, %s68
    %s70 = sphi 0, %s68
    %s71 = sphi 0, %s70
    %s85 = sphi 0, %s71
    %s89 = sphi 0, %s89
    %s91 = sphi 0, %s89
    %s92 = sphi 0, %s91
    %s106 = sphi 0, %s92
    %s112 = sphi 0, %s114
    %s115 = sphi 0, %s112
    %s116 = sphi 0, %s115
    %s132 = sphi 0, %s116
    %s138 = sphi 0, %s140
    %s141 = sphi 0, %s138
    %s142 = sphi 0, %s141
    %s158 = sphi 0, %s142
    %s164 = sphi 0, %s166
    %s167 = sphi 0, %s164
    %s168 = sphi 0, %s167
    %s184 = sphi 0, %s168
  $region4: #{discriminator_forward.2} parent=0 // loop_header_branch
    %16 = sbr.rel (%p14) target = $region8
  $region5: #{discriminator_forward.2} parent=0 // loop_body
    %s18 = ssub.s32 %s13, 1
    %s19 = ssub.s32 %s13, 2
    %s20 = sadd.s32 %s13, 1
    %s21 = ssub.s32 %s13, %s20
    %p22 = scmp.eq.s32.totalorder %s21, 0
    %s24 = sadd.s32 %s23, 1
    %s25 = scalar_select %p22, %s23, %s24
    %p28 = pneg %p22
    %p29 = scmp.eq.s32.totalorder %s13, 1
    %p30 = por %p28, %p29
    %p31 = scmp.ne.s32.totalorder %s23, %s26
    %p32 = scmp.eq.s32.totalorder %s13, 0
    %p33 = por %p31, %p32
    %p34 = scmp.ne.s32.totalorder %s23, %s26
    %p35 = scmp.eq.s32.totalorder %s18, 1
    %p36 = por %p34, %p35
    %p37 = scmp.ne.s32.totalorder %s26, %s27
    %p38 = scmp.eq.s32.totalorder %s18, 0
    %p39 = por %p37, %p38
    %p40 = scmp.ne.s32.totalorder %s26, %s27
    %p41 = scmp.eq.s32.totalorder %s19, 1
    %p42 = por %p40, %p41
    %p44 = scmp.ne.s32.totalorder %s27, %s43
    %p45 = scmp.eq.s32.totalorder %s19, 0
    %p46 = por %p44, %p45
    %s48 = sadd.s32 %s47, 1
    %p51 = scmp.eq.s32.totalorder %s13, 1
    %p52 = scmp.ne.s32.totalorder %s47, %s49
    %p53 = scmp.eq.s32.totalorder %s13, 0
    %p54 = por %p52, %p53
    %p55 = scmp.ne.s32.totalorder %s47, %s49
    %p56 = scmp.eq.s32.totalorder %s18, 1
    %p57 = por %p55, %p56
    %p58 = scmp.ne.s32.totalorder %s49, %s50
    %p59 = scmp.eq.s32.totalorder %s18, 0
    %p60 = por %p58, %p59
    %p61 = scmp.ne.s32.totalorder %s49, %s50
    %p62 = scmp.eq.s32.totalorder %s19, 1
    %p63 = por %p61, %p62
    %p65 = scmp.ne.s32.totalorder %s50, %s64
    %p66 = scmp.eq.s32.totalorder %s19, 0
    %p67 = por %p65, %p66
    %s69 = sadd.s32 %s68, 1
    %p72 = scmp.eq.s32.totalorder %s13, 1
    %p73 = scmp.ne.s32.totalorder %s68, %s70
    %p74 = scmp.eq.s32.totalorder %s13, 0
    %p75 = por %p73, %p74
    %p76 = scmp.ne.s32.totalorder %s68, %s70
    %p77 = scmp.eq.s32.totalorder %s18, 1
    %p78 = por %p76, %p77
    %p79 = scmp.ne.s32.totalorder %s70, %s71
    %p80 = scmp.eq.s32.totalorder %s18, 0
    %p81 = por %p79, %p80
    %p82 = scmp.ne.s32.totalorder %s70, %s71
    %p83 = scmp.eq.s32.totalorder %s19, 1
    %p84 = por %p82, %p83
    %p86 = scmp.ne.s32.totalorder %s71, %s85
    %p87 = scmp.eq.s32.totalorder %s19, 0
    %p88 = por %p86, %p87
    %s90 = sadd.s32 %s89, 1
    %p93 = scmp.eq.s32.totalorder %s13, 1
    %p94 = scmp.ne.s32.totalorder %s89, %s91
    %p95 = scmp.eq.s32.totalorder %s13, 0
    %p96 = por %p94, %p95
    %p97 = scmp.ne.s32.totalorder %s89, %s91
    %p98 = scmp.eq.s32.totalorder %s18, 1
    %p99 = por %p97, %p98
    %p100 = scmp.ne.s32.totalorder %s91, %s92
    %p101 = scmp.eq.s32.totalorder %s18, 0
    %p102 = por %p100, %p101
    %p103 = scmp.ne.s32.totalorder %s91, %s92
    %p104 = scmp.eq.s32.totalorder %s19, 1
    %p105 = por %p103, %p104
    %p107 = scmp.ne.s32.totalorder %s92, %s106
    %p108 = scmp.eq.s32.totalorder %s19, 0
    %p109 = por %p107, %p108
    %s110 = ssub.s32 %s13, %s20
    %p111 = scmp.eq.s32.totalorder %s110, 0
    %s113 = sadd.s32 %s112, 1
    %s114 = scalar_select %p111, %s112, %s113
    %p117 = pneg %p111
    %p118 = scmp.eq.s32.totalorder %s13, 1
    %p119 = por %p117, %p118
    %p120 = scmp.ne.s32.totalorder %s112, %s115
    %p121 = scmp.eq.s32.totalorder %s13, 0
    %p122 = por %p120, %p121
    %p123 = scmp.ne.s32.totalorder %s112, %s115
    %p124 = scmp.eq.s32.totalorder %s18, 1
    %p125 = por %p123, %p124
    %p126 = scmp.ne.s32.totalorder %s115, %s116
    %p127 = scmp.eq.s32.totalorder %s18, 0
    %p128 = por %p126, %p127
    %p129 = scmp.ne.s32.totalorder %s115, %s116
    %p130 = scmp.eq.s32.totalorder %s19, 1
    %p131 = por %p129, %p130
    %p133 = scmp.ne.s32.totalorder %s116, %s132
    %p134 = scmp.eq.s32.totalorder %s19, 0
    %p135 = por %p133, %p134
    %s136 = ssub.s32 %s13, %s20
    %p137 = scmp.eq.s32.totalorder %s136, 0
    %s139 = sadd.s32 %s138, 1
    %s140 = scalar_select %p137, %s138, %s139
    %p143 = pneg %p137
    %p144 = scmp.eq.s32.totalorder %s13, 1
    %p145 = por %p143, %p144
    %p146 = scmp.ne.s32.totalorder %s138, %s141
    %p147 = scmp.eq.s32.totalorder %s13, 0
    %p148 = por %p146, %p147
    %p149 = scmp.ne.s32.totalorder %s138, %s141
    %p150 = scmp.eq.s32.totalorder %s18, 1
    %p151 = por %p149, %p150
    %p152 = scmp.ne.s32.totalorder %s141, %s142
    %p153 = scmp.eq.s32.totalorder %s18, 0
    %p154 = por %p152, %p153
    %p155 = scmp.ne.s32.totalorder %s141, %s142
    %p156 = scmp.eq.s32.totalorder %s19, 1
    %p157 = por %p155, %p156
    %p159 = scmp.ne.s32.totalorder %s142, %s158
    %p160 = scmp.eq.s32.totalorder %s19, 0
    %p161 = por %p159, %p160
    %s162 = ssub.s32 %s13, %s20
    %p163 = scmp.eq.s32.totalorder %s162, 0
    %s165 = sadd.s32 %s164, 1
    %s166 = scalar_select %p163, %s164, %s165
    %p169 = pneg %p163
    %p170 = scmp.eq.s32.totalorder %s13, 1
    %p171 = por %p169, %p170
    %p172 = scmp.ne.s32.totalorder %s164, %s167
    %p173 = scmp.eq.s32.totalorder %s13, 0
    %p174 = por %p172, %p173
    %p175 = scmp.ne.s32.totalorder %s164, %s167
    %p176 = scmp.eq.s32.totalorder %s18, 1
    %p177 = por %p175, %p176
    %p178 = scmp.ne.s32.totalorder %s167, %s168
    %p179 = scmp.eq.s32.totalorder %s18, 0
    %p180 = por %p178, %p179
    %p181 = scmp.ne.s32.totalorder %s167, %s168
    %p182 = scmp.eq.s32.totalorder %s19, 1
    %p183 = por %p181, %p182
    %p185 = scmp.ne.s32.totalorder %s168, %s184
    %p186 = scmp.eq.s32.totalorder %s19, 0
    %p187 = por %p185, %p186
    %p188 = scmp.le.s32.totalorder 1, %s13
    %p189 = scmp.lt.s32.totalorder %s13, 3
    %p190 = pnand %p188, %p189
    %p191 = pneg %p190
    // Predicated region
    $region9: #{discriminator_forward.2} parent=5 // pred_check
      _
    $region10: #{discriminator_forward.2} parent=5 // pred_check_branch
      %193 = sbr.rel (%p190) target = $region12
    $region11: #{discriminator_forward.2} parent=5 // pred_region
      %s194 = ssub.s32 %s13, 1
      // Predicated region
      $region13: #{discriminator_forward.2} parent=11 // pred_check
        %p195 = pneg %p60
      $region14: #{discriminator_forward.2} parent=11 // pred_check_branch
        %197 = sbr.rel (%p195) target = $region16
      $region15: #{discriminator_forward.2} parent=11 // pred_region
        _
      $region16: #{discriminator_forward.2} parent=11 // pred_fallthru
        _
      // Predicated region
      $region17: #{discriminator_forward.2} parent=11 // pred_check
        %p198 = pneg %p81
      $region18: #{discriminator_forward.2} parent=11 // pred_check_branch
        %200 = sbr.rel (%p198) target = $region20
      $region19: #{discriminator_forward.2} parent=11 // pred_region
        _
      $region20: #{discriminator_forward.2} parent=11 // pred_fallthru
        _
      // Predicated region
      $region21: #{discriminator_forward.2} parent=11 // pred_check
        %p201 = pneg %p102
      $region22: #{discriminator_forward.2} parent=11 // pred_check_branch
        %203 = sbr.rel (%p201) target = $region24
      $region23: #{discriminator_forward.2} parent=11 // pred_region
        _
      $region24: #{discriminator_forward.2} parent=11 // pred_fallthru
        _
    $region12: #{discriminator_forward.2} parent=5 // pred_fallthru
      _
    %p204 = scmp.lt.s32.totalorder %s13, 2
    // Predicated region
    $region25: #{discriminator_forward.2} parent=5 // pred_check
      %p205 = pneg %p204
    $region26: #{discriminator_forward.2} parent=5 // pred_check_branch
      %207 = sbr.rel (%p205) target = $region28
    $region27: #{discriminator_forward.2} parent=5 // pred_region
      // Predicated region
      $region29: #{discriminator_forward.2} parent=27 // pred_check
        %p208 = pneg %p33
      $region30: #{discriminator_forward.2} parent=27 // pred_check_branch
        %210 = sbr.rel (%p208) target = $region32
      $region31: #{discriminator_forward.2} parent=27 // pred_region
        %p211 = scmp.lt.s32.totalorder %s13, 1
        %s212 = scalar_select %p211, %s13, 1
        %s213 = smul.addr %s212, 32
        %s214 = smul.addr %s213, 8
        %s215 = scalar_lea.vmem %s0, %s214
      $region32: #{discriminator_forward.2} parent=27 // pred_fallthru
        _
    $region28: #{discriminator_forward.2} parent=5 // pred_fallthru
      _
    %p216 = scmp.le.s32.totalorder 1, %s13
    %p217 = scmp.lt.s32.totalorder %s13, 3
    %p218 = pnand %p216, %p217
    %p219 = pneg %p218
    // Predicated region
    $region33: #{discriminator_forward.2} parent=5 // pred_check
      _
    $region34: #{discriminator_forward.2} parent=5 // pred_check_branch
      %221 = sbr.rel (%p218) target = $region36
    $region35: #{discriminator_forward.2} parent=5 // pred_region
      %s222 = ssub.s32 %s13, 1
      %p223 = scmp.lt.s32.totalorder %s18, 1
      %s224 = scalar_select %p223, %s18, 1
      %s225 = smul.addr %s224, 32
      %s226 = smul.addr %s225, 8
      %s227 = scalar_lea.vmem %s0, %s226
      %p228 = pneg %p39
      %p229 = pneg %p36
      %p230 = pneg %p60
      %p231 = pneg %p57
      %p232 = pneg %p81
      %p233 = pneg %p78
      %p234 = pneg %p102
      %p235 = pneg %p99
      %p236 = pneg %p128
      %p237 = pneg %p125
      %p238 = scmp.lt.s32.totalorder %s18, 1
      %s239 = scalar_select %p238, %s18, 1
      %s240 = smul.addr %s239, 24
      %s241 = smul.addr %s240, 8
      %s242 = scalar_lea.vmem %s4, %s241
      %p243 = pneg %p154
      %p244 = pneg %p151
      %p245 = scmp.lt.s32.totalorder %s18, 1
      %s246 = scalar_select %p245, %s18, 1
      %s247 = scalar_lea.vmem %s5, %s246
      %p248 = pneg %p180
      %p249 = pneg %p177
      %p250 = scmp.lt.s32.totalorder %s18, 1
      %s251 = scalar_select %p250, %s18, 1
      %s252 = scalar_lea.vmem %s6, %s251
      %p253 = scmp.lt.s32.totalorder %s18, 1
      %s254 = scalar_select %p253, %s18, 1
      %s255 = smul.addr %s254, 32
      %s256 = smul.addr %s255, 8
      %s257 = scalar_lea.vmem %s0, %s256
      %p258 = scmp.lt.s32.totalorder %s18, 1
      %s259 = scalar_select %p258, %s18, 1
      %s260 = smul.addr %s259, 24
      %s261 = smul.addr %s260, 8
      %s262 = scalar_lea.vmem %s4, %s261
      %p263 = scmp.lt.s32.totalorder %s18, 1
      %s264 = scalar_select %p263, %s18, 1
      %s265 = scalar_lea.vmem %s5, %s264
      %p266 = scmp.lt.s32.totalorder %s18, 1
      %s267 = scalar_select %p266, %s18, 1
      %s268 = scalar_lea.vmem %s6, %s267
      %v270 = vld [vmem:[%s257] sm:$0xff]
      %v271 = vld [vmem:[%s257 + $0x8] sm:$0xff]
      %v272 = vld [vmem:[%s257 + $0x10] sm:$0xff]
      %v273 = vld [vmem:[%s257 + $0x18] sm:$0xff]
      %v274 = vld [vmem:[%s257 + $0x20] sm:$0xff]
      %v275 = vld [vmem:[%s257 + $0x28] sm:$0xff]
      %v276 = vld [vmem:[%s257 + $0x30] sm:$0xff]
      %v277 = vld [vmem:[%s257 + $0x38] sm:$0xff]
      %v278 = vld [vmem:[%s257 + $0x40] sm:$0xff]
      %v279 = vld [vmem:[%s257 + $0x48] sm:$0xff]
      %v280 = vld [vmem:[%s257 + $0x50] sm:$0xff]
      %v281 = vld [vmem:[%s257 + $0x58] sm:$0xff]
      %v282 = vld [vmem:[%s257 + $0x60] sm:$0xff]
      %v283 = vld [vmem:[%s257 + $0x68] sm:$0xff]
      %v284 = vld [vmem:[%s257 + $0x70] sm:$0xff]
      %v285 = vld [vmem:[%s257 + $0x78] sm:$0xff]
      %v286 = vld [vmem:[%s257 + $0x80] sm:$0xff]
      %v287 = vld [vmem:[%s257 + $0x88] sm:$0xff]
      %v288 = vld [vmem:[%s257 + $0x90] sm:$0xff]
      %v289 = vld [vmem:[%s257 + $0x98] sm:$0xff]
      %v290 = vld [vmem:[%s257 + $0xa0] sm:$0xff]
      %v291 = vld [vmem:[%s257 + $0xa8] sm:$0xff]
      %v292 = vld [vmem:[%s257 + $0xb0] sm:$0xff]
      %v293 = vld [vmem:[%s257 + $0xb8] sm:$0xff]
      %v294 = vld [vmem:[%s257 + $0xc0] sm:$0xff]
      %v295 = vld [vmem:[%s257 + $0xc8] sm:$0xff]
      %v296 = vld [vmem:[%s257 + $0xd0] sm:$0xff]
      %v297 = vld [vmem:[%s257 + $0xd8] sm:$0xff]
      %v298 = vld [vmem:[%s257 + $0xe0] sm:$0xff]
      %v299 = vld [vmem:[%s257 + $0xe8] sm:$0xff]
      %v300 = vld [vmem:[%s257 + $0xf0] sm:$0xff]
      %v301 = vld [vmem:[%s257 + $0xf8] sm:$0xff]
      %v302 = vld [vmem:[%s1] sm:$0x3]
      %v303 = vld [vmem:[%s1 + $0x2] sm:$0x3]
      %v304 = vld [vmem:[%s1 + $0x4] sm:$0x3]
      %v305 = vld [vmem:[%s1 + $0x6] sm:$0x3]
      %v306 = vld [vmem:[%s1 + $0x8] sm:$0x3]
      %v307 = vld [vmem:[%s1 + $0xa] sm:$0x3]
      %v308 = vld [vmem:[%s1 + $0xc] sm:$0x3]
      %v309 = vld [vmem:[%s1 + $0xe] sm:$0x3]
      %v310 = vld [vmem:[%s1 + $0x10] sm:$0x3]
      %312 = vset.pattern.permute.xlu0 0
      %313 = vperm.xlu0 %312, %v270
      %v314 = vpop.permute.xlu0 %313
      %317 = vset.pattern.permute.xlu0 0
      %318 = vperm.xlu0 %317, %v271
      %v319 = vpop.permute.xlu0 %318
      %322 = vset.pattern.permute.xlu0 0
      %323 = vperm.xlu0 %322, %v272
      %v324 = vpop.permute.xlu0 %323
      %327 = vset.pattern.permute.xlu0 0
      %328 = vperm.xlu0 %327, %v273
      %v329 = vpop.permute.xlu0 %328
      %332 = vset.pattern.permute.xlu0 0
      %333 = vperm.xlu0 %332, %v274
      %v334 = vpop.permute.xlu0 %333
      %337 = vset.pattern.permute.xlu0 0
      %338 = vperm.xlu0 %337, %v275
      %v339 = vpop.permute.xlu0 %338
      %342 = vset.pattern.permute.xlu0 0
      %343 = vperm.xlu0 %342, %v276
      %v344 = vpop.permute.xlu0 %343
      %347 = vset.pattern.permute.xlu0 0
      %348 = vperm.xlu0 %347, %v277
      %v349 = vpop.permute.xlu0 %348
      %352 = vset.pattern.permute.xlu0 0
      %353 = vperm.xlu0 %352, %v278
      %v354 = vpop.permute.xlu0 %353
      %357 = vset.pattern.permute.xlu0 0
      %358 = vperm.xlu0 %357, %v279
      %v359 = vpop.permute.xlu0 %358
      %362 = vset.pattern.permute.xlu0 0
      %363 = vperm.xlu0 %362, %v280
      %v364 = vpop.permute.xlu0 %363
      %367 = vset.pattern.permute.xlu0 0
      %368 = vperm.xlu0 %367, %v281
      %v369 = vpop.permute.xlu0 %368
      %372 = vset.pattern.permute.xlu0 0
      %373 = vperm.xlu0 %372, %v282
      %v374 = vpop.permute.xlu0 %373
      %377 = vset.pattern.permute.xlu0 0
      %378 = vperm.xlu0 %377, %v283
      %v379 = vpop.permute.xlu0 %378
      %382 = vset.pattern.permute.xlu0 0
      %383 = vperm.xlu0 %382, %v284
      %v384 = vpop.permute.xlu0 %383
      %387 = vset.pattern.permute.xlu0 0
      %388 = vperm.xlu0 %387, %v285
      %v389 = vpop.permute.xlu0 %388
      %392 = vset.pattern.permute.xlu0 0
      %393 = vperm.xlu0 %392, %v286
      %v394 = vpop.permute.xlu0 %393
      %397 = vset.pattern.permute.xlu0 0
      %398 = vperm.xlu0 %397, %v287
      %v399 = vpop.permute.xlu0 %398
      %402 = vset.pattern.permute.xlu0 0
      %403 = vperm.xlu0 %402, %v288
      %v404 = vpop.permute.xlu0 %403
      %407 = vset.pattern.permute.xlu0 0
      %408 = vperm.xlu0 %407, %v289
      %v409 = vpop.permute.xlu0 %408
      %412 = vset.pattern.permute.xlu0 0
      %413 = vperm.xlu0 %412, %v290
      %v414 = vpop.permute.xlu0 %413
      %417 = vset.pattern.permute.xlu0 0
      %418 = vperm.xlu0 %417, %v291
      %v419 = vpop.permute.xlu0 %418
      %422 = vset.pattern.permute.xlu0 0
      %423 = vperm.xlu0 %422, %v292
      %v424 = vpop.permute.xlu0 %423
      %427 = vset.pattern.permute.xlu0 0
      %428 = vperm.xlu0 %427, %v293
      %v429 = vpop.permute.xlu0 %428
      %432 = vset.pattern.permute.xlu0 0
      %433 = vperm.xlu0 %432, %v294
      %v434 = vpop.permute.xlu0 %433
      %437 = vset.pattern.permute.xlu0 0
      %438 = vperm.xlu0 %437, %v295
      %v439 = vpop.permute.xlu0 %438
      %442 = vset.pattern.permute.xlu0 0
      %443 = vperm.xlu0 %442, %v296
      %v444 = vpop.permute.xlu0 %443
      %447 = vset.pattern.permute.xlu0 0
      %448 = vperm.xlu0 %447, %v297
      %v449 = vpop.permute.xlu0 %448
      %v451 = vperm.slane %v302, 0
      %v452 = vmul.f32 %v314, %v451
      %v453 = vmul.f32 %v319, %v451
      %v454 = vmul.f32 %v324, %v451
      %v455 = vmul.f32 %v329, %v451
      %v456 = vmul.f32 %v334, %v451
      %v457 = vmul.f32 %v339, %v451
      %v458 = vmul.f32 %v344, %v451
      %v459 = vmul.f32 %v349, %v451
      %v460 = vmul.f32 %v354, %v451
      %v461 = vmul.f32 %v359, %v451
      %v462 = vmul.f32 %v364, %v451
      %v463 = vmul.f32 %v369, %v451
      %v464 = vmul.f32 %v374, %v451
      %v465 = vmul.f32 %v379, %v451
      %v466 = vmul.f32 %v384, %v451
      %v467 = vmul.f32 %v389, %v451
      %v468 = vmul.f32 %v394, %v451
      %v469 = vmul.f32 %v399, %v451
      %v470 = vmul.f32 %v404, %v451
      %v471 = vmul.f32 %v409, %v451
      %v472 = vmul.f32 %v414, %v451
      %v473 = vmul.f32 %v419, %v451
      %v474 = vmul.f32 %v424, %v451
      %v475 = vmul.f32 %v429, %v451
      %v476 = vmul.f32 %v434, %v451
      %v477 = vmul.f32 %v439, %v451
      %v478 = vmul.f32 %v444, %v451
      %v479 = vmul.f32 %v449, %v451
      %v480 = vadd.f32 %v452, 0.0
      %v481 = vadd.f32 %v453, 0.0
      %v482 = vadd.f32 %v454, 0.0
      %v483 = vadd.f32 %v455, 0.0
      %v484 = vadd.f32 %v456, 0.0
      %v485 = vadd.f32 %v457, 0.0
      %v486 = vadd.f32 %v458, 0.0
      %v487 = vadd.f32 %v459, 0.0
      %v488 = vadd.f32 %v460, 0.0
      %v489 = vadd.f32 %v461, 0.0
      %v490 = vadd.f32 %v462, 0.0
      %v491 = vadd.f32 %v463, 0.0
      %v492 = vadd.f32 %v464, 0.0
      %v493 = vadd.f32 %v465, 0.0
      %v494 = vadd.f32 %v466, 0.0
      %v495 = vadd.f32 %v467, 0.0
      %v496 = vadd.f32 %v468, 0.0
      %v497 = vadd.f32 %v469, 0.0
      %v498 = vadd.f32 %v470, 0.0
      %v499 = vadd.f32 %v471, 0.0
      %v500 = vadd.f32 %v472, 0.0
      %v501 = vadd.f32 %v473, 0.0
      %v502 = vadd.f32 %v474, 0.0
      %v503 = vadd.f32 %v475, 0.0
      %v504 = vadd.f32 %v476, 0.0
      %v505 = vadd.f32 %v477, 0.0
      %v506 = vadd.f32 %v478, 0.0
      %v507 = vadd.f32 %v479, 0.0
      %508 = vset.pattern.permute.xlu0 1
      %509 = vperm.xlu0 %508, %v270
      %v510 = vpop.permute.xlu0 %509
      %512 = vset.pattern.permute.xlu0 1
      %513 = vperm.xlu0 %512, %v271
      %v514 = vpop.permute.xlu0 %513
      %516 = vset.pattern.permute.xlu0 1
      %517 = vperm.xlu0 %516, %v272
      %v518 = vpop.permute.xlu0 %517
      %520 = vset.pattern.permute.xlu0 1
      %521 = vperm.xlu0 %520, %v273
      %v522 = vpop.permute.xlu0 %521
      %524 = vset.pattern.permute.xlu0 1
      %525 = vperm.xlu0 %524, %v274
      %v526 = vpop.permute.xlu0 %525
      %528 = vset.pattern.permute.xlu0 1
      %529 = vperm.xlu0 %528, %v275
      %v530 = vpop.permute.xlu0 %529
      %532 = vset.pattern.permute.xlu0 1
      %533 = vperm.xlu0 %532, %v276
      %v534 = vpop.permute.xlu0 %533
      %536 = vset.pattern.permute.xlu0 1
      %537 = vperm.xlu0 %536, %v277
      %v538 = vpop.permute.xlu0 %537
      %540 = vset.pattern.permute.xlu0 1
      %541 = vperm.xlu0 %540, %v278
      %v542 = vpop.permute.xlu0 %541
      %544 = vset.pattern.permute.xlu0 1
      %545 = vperm.xlu0 %544, %v279
      %v546 = vpop.permute.xlu0 %545
      %548 = vset.pattern.permute.xlu0 1
      %549 = vperm.xlu0 %548, %v280
      %v550 = vpop.permute.xlu0 %549
      %552 = vset.pattern.permute.xlu0 1
      %553 = vperm.xlu0 %552, %v281
      %v554 = vpop.permute.xlu0 %553
      %556 = vset.pattern.permute.xlu0 1
      %557 = vperm.xlu0 %556, %v282
      %v558 = vpop.permute.xlu0 %557
      %560 = vset.pattern.permute.xlu0 1
      %561 = vperm.xlu0 %560, %v283
      %v562 = vpop.permute.xlu0 %561
      %564 = vset.pattern.permute.xlu0 1
      %565 = vperm.xlu0 %564, %v284
      %v566 = vpop.permute.xlu0 %565
      %568 = vset.pattern.permute.xlu0 1
      %569 = vperm.xlu0 %568, %v285
      %v570 = vpop.permute.xlu0 %569
      %572 = vset.pattern.permute.xlu0 1
      %573 = vperm.xlu0 %572, %v286
      %v574 = vpop.permute.xlu0 %573
      %576 = vset.pattern.permute.xlu0 1
      %577 = vperm.xlu0 %576, %v287
      %v578 = vpop.permute.xlu0 %577
      %580 = vset.pattern.permute.xlu0 1
      %581 = vperm.xlu0 %580, %v288
      %v582 = vpop.permute.xlu0 %581
      %584 = vset.pattern.permute.xlu0 1
      %585 = vperm.xlu0 %584, %v289
      %v586 = vpop.permute.xlu0 %585
      %588 = vset.pattern.permute.xlu0 1
      %589 = vperm.xlu0 %588, %v290
      %v590 = vpop.permute.xlu0 %589
      %592 = vset.pattern.permute.xlu0 1
      %593 = vperm.xlu0 %592, %v291
      %v594 = vpop.permute.xlu0 %593
      %596 = vset.pattern.permute.xlu0 1
      %597 = vperm.xlu0 %596, %v292
      %v598 = vpop.permute.xlu0 %597
      %600 = vset.pattern.permute.xlu0 1
      %601 = vperm.xlu0 %600, %v293
      %v602 = vpop.permute.xlu0 %601
      %604 = vset.pattern.permute.xlu0 1
      %605 = vperm.xlu0 %604, %v294
      %v606 = vpop.permute.xlu0 %605
      %608 = vset.pattern.permute.xlu0 1
      %609 = vperm.xlu0 %608, %v295
      %v610 = vpop.permute.xlu0 %609
      %612 = vset.pattern.permute.xlu0 1
      %613 = vperm.xlu0 %612, %v296
      %v614 = vpop.permute.xlu0 %613
      %616 = vset.pattern.permute.xlu0 1
      %617 = vperm.xlu0 %616, %v297
      %v618 = vpop.permute.xlu0 %617
      %v620 = vperm.slane %v302, 1
      %v621 = vmul.f32 %v510, %v620
      %v622 = vmul.f32 %v514, %v620
      %v623 = vmul.f32 %v518, %v620
      %v624 = vmul.f32 %v522, %v620
      %v625 = vmul.f32 %v526, %v620
      %v626 = vmul.f32 %v530, %v620
      %v627 = vmul.f32 %v534, %v620
      %v628 = vmul.f32 %v538, %v620
      %v629 = vmul.f32 %v542, %v620
      %v630 = vmul.f32 %v546, %v620
      %v631 = vmul.f32 %v550, %v620
      %v632 = vmul.f32 %v554, %v620
      %v633 = vmul.f32 %v558, %v620
      %v634 = vmul.f32 %v562, %v620
      %v635 = vmul.f32 %v566, %v620
      %v636 = vmul.f32 %v570, %v620
      %v637 = vmul.f32 %v574, %v620
      %v638 = vmul.f32 %v578, %v620
      %v639 = vmul.f32 %v582, %v620
      %v640 = vmul.f32 %v586, %v620
      %v641 = vmul.f32 %v590, %v620
      %v642 = vmul.f32 %v594, %v620
      %v643 = vmul.f32 %v598, %v620
      %v644 = vmul.f32 %v602, %v620
      %v645 = vmul.f32 %v606, %v620
      %v646 = vmul.f32 %v610, %v620
      %v647 = vmul.f32 %v614, %v620
      %v648 = vmul.f32 %v618, %v620
      %v649 = vadd.f32 %v480, %v621
      %v650 = vadd.f32 %v481, %v622
      %v651 = vadd.f32 %v482, %v623
      %v652 = vadd.f32 %v483, %v624
      %v653 = vadd.f32 %v484, %v625
      %v654 = vadd.f32 %v485, %v626
      %v655 = vadd.f32 %v486, %v627
      %v656 = vadd.f32 %v487, %v628
      %v657 = vadd.f32 %v488, %v629
      %v658 = vadd.f32 %v489, %v630
      %v659 = vadd.f32 %v490, %v631
      %v660 = vadd.f32 %v491, %v632
      %v661 = vadd.f32 %v492, %v633
      %v662 = vadd.f32 %v493, %v634
      %v663 = vadd.f32 %v494, %v635
      %v664 = vadd.f32 %v495, %v636
      %v665 = vadd.f32 %v496, %v637
      %v666 = vadd.f32 %v497, %v638
      %v667 = vadd.f32 %v498, %v639
      %v668 = vadd.f32 %v499, %v640
      %v669 = vadd.f32 %v500, %v641
      %v670 = vadd.f32 %v501, %v642
      %v671 = vadd.f32 %v502, %v643
      %v672 = vadd.f32 %v503, %v644
      %v673 = vadd.f32 %v504, %v645
      %v674 = vadd.f32 %v505, %v646
      %v675 = vadd.f32 %v506, %v647
      %v676 = vadd.f32 %v507, %v648
      %v677 = vperm.slane %v303, 0
      %v678 = vmul.f32 %v314, %v677
      %v679 = vmul.f32 %v319, %v677
      %v680 = vmul.f32 %v324, %v677
      %v681 = vmul.f32 %v329, %v677
      %v682 = vmul.f32 %v334, %v677
      %v683 = vmul.f32 %v339, %v677
      %v684 = vmul.f32 %v344, %v677
      %v685 = vmul.f32 %v349, %v677
      %v686 = vmul.f32 %v354, %v677
      %v687 = vmul.f32 %v359, %v677
      %v688 = vmul.f32 %v364, %v677
      %v689 = vmul.f32 %v369, %v677
      %v690 = vmul.f32 %v374, %v677
      %v691 = vmul.f32 %v379, %v677
      %v692 = vmul.f32 %v384, %v677
      %v693 = vmul.f32 %v389, %v677
      %v694 = vmul.f32 %v394, %v677
      %v695 = vmul.f32 %v399, %v677
      %v696 = vmul.f32 %v404, %v677
      %v697 = vmul.f32 %v409, %v677
      %v698 = vmul.f32 %v414, %v677
      %v699 = vmul.f32 %v419, %v677
      %v700 = vmul.f32 %v424, %v677
      %v701 = vmul.f32 %v429, %v677
      %v702 = vmul.f32 %v434, %v677
      %v703 = vmul.f32 %v439, %v677
      %v704 = vmul.f32 %v444, %v677
      %v705 = vmul.f32 %v449, %v677
      %vm734 = vcmask 1046528
      %v735 = vrot.slane %v678, 1
      %v736 = vrot.slane %v679, 1
      %v737 = vsel %vm734, %v735, %v736
      %v738 = vrot.slane %v680, 1
      %v739 = vrot.slane %v681, 1
      %v740 = vsel %vm734, %v738, %v739
      %v741 = vrot.slane %v682, 1
      %v742 = vrot.slane %v683, 1
      %v743 = vsel %vm734, %v741, %v742
      %v744 = vrot.slane %v684, 1
      %v745 = vrot.slane %v685, 1
      %v746 = vsel %vm734, %v744, %v745
      %v747 = vrot.slane %v686, 1
      %v748 = vrot.slane %v687, 1
      %v749 = vsel %vm734, %v747, %v748
      %v750 = vrot.slane %v688, 1
      %v751 = vrot.slane %v689, 1
      %v752 = vsel %vm734, %v750, %v751
      %v753 = vrot.slane %v690, 1
      %v754 = vrot.slane %v691, 1
      %v755 = vsel %vm734, %v753, %v754
      %v756 = vrot.slane %v692, 1
      %v757 = vrot.slane %v693, 1
      %v758 = vsel %vm734, %v756, %v757
      %v759 = vrot.slane %v694, 1
      %v760 = vrot.slane %v695, 1
      %v761 = vsel %vm734, %v759, %v760
      %v762 = vrot.slane %v696, 1
      %v763 = vrot.slane %v697, 1
      %v764 = vsel %vm734, %v762, %v763
      %v765 = vrot.slane %v698, 1
      %v766 = vrot.slane %v699, 1
      %v767 = vsel %vm734, %v765, %v766
      %v768 = vrot.slane %v700, 1
      %v769 = vrot.slane %v701, 1
      %v770 = vsel %vm734, %v768, %v769
      %v771 = vrot.slane %v702, 1
      %v772 = vrot.slane %v703, 1
      %v773 = vsel %vm734, %v771, %v772
      %v774 = vrot.slane %v704, 1
      %v775 = vrot.slane %v705, 1
      %v776 = vsel %vm734, %v774, %v775
      %v805 = vadd.f32 %v649, %v737
      %v806 = vadd.f32 %v650, %v736
      %v807 = vadd.f32 %v651, %v740
      %v808 = vadd.f32 %v652, %v739
      %v809 = vadd.f32 %v653, %v743
      %v810 = vadd.f32 %v654, %v742
      %v811 = vadd.f32 %v655, %v746
      %v812 = vadd.f32 %v656, %v745
      %v813 = vadd.f32 %v657, %v749
      %v814 = vadd.f32 %v658, %v748
      %v815 = vadd.f32 %v659, %v752
      %v816 = vadd.f32 %v660, %v751
      %v817 = vadd.f32 %v661, %v755
      %v818 = vadd.f32 %v662, %v754
      %v819 = vadd.f32 %v663, %v758
      %v820 = vadd.f32 %v664, %v757
      %v821 = vadd.f32 %v665, %v761
      %v822 = vadd.f32 %v666, %v760
      %v823 = vadd.f32 %v667, %v764
      %v824 = vadd.f32 %v668, %v763
      %v825 = vadd.f32 %v669, %v767
      %v826 = vadd.f32 %v670, %v766
      %v827 = vadd.f32 %v671, %v770
      %v828 = vadd.f32 %v672, %v769
      %v829 = vadd.f32 %v673, %v773
      %v830 = vadd.f32 %v674, %v772
      %v831 = vadd.f32 %v675, %v776
      %v832 = vadd.f32 %v676, %v775
      %v833 = vperm.slane %v303, 1
      %v834 = vmul.f32 %v510, %v833
      %v835 = vmul.f32 %v514, %v833
      %v836 = vmul.f32 %v518, %v833
      %v837 = vmul.f32 %v522, %v833
      %v838 = vmul.f32 %v526, %v833
      %v839 = vmul.f32 %v530, %v833
      %v840 = vmul.f32 %v534, %v833
      %v841 = vmul.f32 %v538, %v833
      %v842 = vmul.f32 %v542, %v833
      %v843 = vmul.f32 %v546, %v833
      %v844 = vmul.f32 %v550, %v833
      %v845 = vmul.f32 %v554, %v833
      %v846 = vmul.f32 %v558, %v833
      %v847 = vmul.f32 %v562, %v833
      %v848 = vmul.f32 %v566, %v833
      %v849 = vmul.f32 %v570, %v833
      %v850 = vmul.f32 %v574, %v833
      %v851 = vmul.f32 %v578, %v833
      %v852 = vmul.f32 %v582, %v833
      %v853 = vmul.f32 %v586, %v833
      %v854 = vmul.f32 %v590, %v833
      %v855 = vmul.f32 %v594, %v833
      %v856 = vmul.f32 %v598, %v833
      %v857 = vmul.f32 %v602, %v833
      %v858 = vmul.f32 %v606, %v833
      %v859 = vmul.f32 %v610, %v833
      %v860 = vmul.f32 %v614, %v833
      %v861 = vmul.f32 %v618, %v833
      %v890 = vrot.slane %v834, 1
      %v891 = vrot.slane %v835, 1
      %v892 = vsel %vm734, %v890, %v891
      %v893 = vrot.slane %v836, 1
      %v894 = vrot.slane %v837, 1
      %v895 = vsel %vm734, %v893, %v894
      %v896 = vrot.slane %v838, 1
      %v897 = vrot.slane %v839, 1
      %v898 = vsel %vm734, %v896, %v897
      %v899 = vrot.slane %v840, 1
      %v900 = vrot.slane %v841, 1
      %v901 = vsel %vm734, %v899, %v900
      %v902 = vrot.slane %v842, 1
      %v903 = vrot.slane %v843, 1
      %v904 = vsel %vm734, %v902, %v903
      %v905 = vrot.slane %v844, 1
      %v906 = vrot.slane %v845, 1
      %v907 = vsel %vm734, %v905, %v906
      %v908 = vrot.slane %v846, 1
      %v909 = vrot.slane %v847, 1
      %v910 = vsel %vm734, %v908, %v909
      %v911 = vrot.slane %v848, 1
      %v912 = vrot.slane %v849, 1
      %v913 = vsel %vm734, %v911, %v912
      %v914 = vrot.slane %v850, 1
      %v915 = vrot.slane %v851, 1
      %v916 = vsel %vm734, %v914, %v915
      %v917 = vrot.slane %v852, 1
      %v918 = vrot.slane %v853, 1
      %v919 = vsel %vm734, %v917, %v918
      %v920 = vrot.slane %v854, 1
      %v921 = vrot.slane %v855, 1
      %v922 = vsel %vm734, %v920, %v921
      %v923 = vrot.slane %v856, 1
      %v924 = vrot.slane %v857, 1
      %v925 = vsel %vm734, %v923, %v924
      %v926 = vrot.slane %v858, 1
      %v927 = vrot.slane %v859, 1
      %v928 = vsel %vm734, %v926, %v927
      %v929 = vrot.slane %v860, 1
      %v930 = vrot.slane %v861, 1
      %v931 = vsel %vm734, %v929, %v930
      %v960 = vadd.f32 %v805, %v892
      %v961 = vadd.f32 %v806, %v891
      %v962 = vadd.f32 %v807, %v895
      %v963 = vadd.f32 %v808, %v894
      %v964 = vadd.f32 %v809, %v898
      %v965 = vadd.f32 %v810, %v897
      %v966 = vadd.f32 %v811, %v901
      %v967 = vadd.f32 %v812, %v900
      %v968 = vadd.f32 %v813, %v904
      %v969 = vadd.f32 %v814, %v903
      %v970 = vadd.f32 %v815, %v907
      %v971 = vadd.f32 %v816, %v906
      %v972 = vadd.f32 %v817, %v910
      %v973 = vadd.f32 %v818, %v909
      %v974 = vadd.f32 %v819, %v913
      %v975 = vadd.f32 %v820, %v912
      %v976 = vadd.f32 %v821, %v916
      %v977 = vadd.f32 %v822, %v915
      %v978 = vadd.f32 %v823, %v919
      %v979 = vadd.f32 %v824, %v918
      %v980 = vadd.f32 %v825, %v922
      %v981 = vadd.f32 %v826, %v921
      %v982 = vadd.f32 %v827, %v925
      %v983 = vadd.f32 %v828, %v924
      %v984 = vadd.f32 %v829, %v928
      %v985 = vadd.f32 %v830, %v927
      %v986 = vadd.f32 %v831, %v931
      %v987 = vadd.f32 %v832, %v930
      %v988 = vperm.slane %v304, 0
      %v989 = vmul.f32 %v314, %v988
      %v990 = vmul.f32 %v319, %v988
      %v991 = vmul.f32 %v324, %v988
      %v992 = vmul.f32 %v329, %v988
      %v993 = vmul.f32 %v334, %v988
      %v994 = vmul.f32 %v339, %v988
      %v995 = vmul.f32 %v344, %v988
      %v996 = vmul.f32 %v349, %v988
      %v997 = vmul.f32 %v354, %v988
      %v998 = vmul.f32 %v359, %v988
      %v999 = vmul.f32 %v364, %v988
      %v1000 = vmul.f32 %v369, %v988
      %v1001 = vmul.f32 %v374, %v988
      %v1002 = vmul.f32 %v379, %v988
      %v1003 = vmul.f32 %v384, %v988
      %v1004 = vmul.f32 %v389, %v988
      %v1005 = vmul.f32 %v394, %v988
      %v1006 = vmul.f32 %v399, %v988
      %v1007 = vmul.f32 %v404, %v988
      %v1008 = vmul.f32 %v409, %v988
      %v1009 = vmul.f32 %v414, %v988
      %v1010 = vmul.f32 %v419, %v988
      %v1011 = vmul.f32 %v424, %v988
      %v1012 = vmul.f32 %v429, %v988
      %v1013 = vmul.f32 %v434, %v988
      %v1014 = vmul.f32 %v439, %v988
      %v1015 = vmul.f32 %v444, %v988
      %v1016 = vmul.f32 %v449, %v988
      %vm1045 = vcmask 1045504
      %v1046 = vrot.slane %v989, 2
      %v1047 = vrot.slane %v990, 2
      %v1048 = vsel %vm1045, %v1046, %v1047
      %v1049 = vrot.slane %v991, 2
      %v1050 = vrot.slane %v992, 2
      %v1051 = vsel %vm1045, %v1049, %v1050
      %v1052 = vrot.slane %v993, 2
      %v1053 = vrot.slane %v994, 2
      %v1054 = vsel %vm1045, %v1052, %v1053
      %v1055 = vrot.slane %v995, 2
      %v1056 = vrot.slane %v996, 2
      %v1057 = vsel %vm1045, %v1055, %v1056
      %v1058 = vrot.slane %v997, 2
      %v1059 = vrot.slane %v998, 2
      %v1060 = vsel %vm1045, %v1058, %v1059
      %v1061 = vrot.slane %v999, 2
      %v1062 = vrot.slane %v1000, 2
      %v1063 = vsel %vm1045, %v1061, %v1062
      %v1064 = vrot.slane %v1001, 2
      %v1065 = vrot.slane %v1002, 2
      %v1066 = vsel %vm1045, %v1064, %v1065
      %v1067 = vrot.slane %v1003, 2
      %v1068 = vrot.slane %v1004, 2
      %v1069 = vsel %vm1045, %v1067, %v1068
      %v1070 = vrot.slane %v1005, 2
      %v1071 = vrot.slane %v1006, 2
      %v1072 = vsel %vm1045, %v1070, %v1071
      %v1073 = vrot.slane %v1007, 2
      %v1074 = vrot.slane %v1008, 2
      %v1075 = vsel %vm1045, %v1073, %v1074
      %v1076 = vrot.slane %v1009, 2
      %v1077 = vrot.slane %v1010, 2
      %v1078 = vsel %vm1045, %v1076, %v1077
      %v1079 = vrot.slane %v1011, 2
      %v1080 = vrot.slane %v1012, 2
      %v1081 = vsel %vm1045, %v1079, %v1080
      %v1082 = vrot.slane %v1013, 2
      %v1083 = vrot.slane %v1014, 2
      %v1084 = vsel %vm1045, %v1082, %v1083
      %v1085 = vrot.slane %v1015, 2
      %v1086 = vrot.slane %v1016, 2
      %v1087 = vsel %vm1045, %v1085, %v1086
      %v1116 = vadd.f32 %v960, %v1048
      %v1117 = vadd.f32 %v961, %v1047
      %v1118 = vadd.f32 %v962, %v1051
      %v1119 = vadd.f32 %v963, %v1050
      %v1120 = vadd.f32 %v964, %v1054
      %v1121 = vadd.f32 %v965, %v1053
      %v1122 = vadd.f32 %v966, %v1057
      %v1123 = vadd.f32 %v967, %v1056
      %v1124 = vadd.f32 %v968, %v1060
      %v1125 = vadd.f32 %v969, %v1059
      %v1126 = vadd.f32 %v970, %v1063
      %v1127 = vadd.f32 %v971, %v1062
      %v1128 = vadd.f32 %v972, %v1066
      %v1129 = vadd.f32 %v973, %v1065
      %v1130 = vadd.f32 %v974, %v1069
      %v1131 = vadd.f32 %v975, %v1068
      %v1132 = vadd.f32 %v976, %v1072
      %v1133 = vadd.f32 %v977, %v1071
      %v1134 = vadd.f32 %v978, %v1075
      %v1135 = vadd.f32 %v979, %v1074
      %v1136 = vadd.f32 %v980, %v1078
      %v1137 = vadd.f32 %v981, %v1077
      %v1138 = vadd.f32 %v982, %v1081
      %v1139 = vadd.f32 %v983, %v1080
      %v1140 = vadd.f32 %v984, %v1084
      %v1141 = vadd.f32 %v985, %v1083
      %v1142 = vadd.f32 %v986, %v1087
      %v1143 = vadd.f32 %v987, %v1086
      %v1144 = vperm.slane %v304, 1
      %v1145 = vmul.f32 %v510, %v1144
      %v1146 = vmul.f32 %v514, %v1144
      %v1147 = vmul.f32 %v518, %v1144
      %v1148 = vmul.f32 %v522, %v1144
      %v1149 = vmul.f32 %v526, %v1144
      %v1150 = vmul.f32 %v530, %v1144
      %v1151 = vmul.f32 %v534, %v1144
      %v1152 = vmul.f32 %v538, %v1144
      %v1153 = vmul.f32 %v542, %v1144
      %v1154 = vmul.f32 %v546, %v1144
      %v1155 = vmul.f32 %v550, %v1144
      %v1156 = vmul.f32 %v554, %v1144
      %v1157 = vmul.f32 %v558, %v1144
      %v1158 = vmul.f32 %v562, %v1144
      %v1159 = vmul.f32 %v566, %v1144
      %v1160 = vmul.f32 %v570, %v1144
      %v1161 = vmul.f32 %v574, %v1144
      %v1162 = vmul.f32 %v578, %v1144
      %v1163 = vmul.f32 %v582, %v1144
      %v1164 = vmul.f32 %v586, %v1144
      %v1165 = vmul.f32 %v590, %v1144
      %v1166 = vmul.f32 %v594, %v1144
      %v1167 = vmul.f32 %v598, %v1144
      %v1168 = vmul.f32 %v602, %v1144
      %v1169 = vmul.f32 %v606, %v1144
      %v1170 = vmul.f32 %v610, %v1144
      %v1171 = vmul.f32 %v614, %v1144
      %v1172 = vmul.f32 %v618, %v1144
      %v1201 = vrot.slane %v1145, 2
      %v1202 = vrot.slane %v1146, 2
      %v1203 = vsel %vm1045, %v1201, %v1202
      %v1204 = vrot.slane %v1147, 2
      %v1205 = vrot.slane %v1148, 2
      %v1206 = vsel %vm1045, %v1204, %v1205
      %v1207 = vrot.slane %v1149, 2
      %v1208 = vrot.slane %v1150, 2
      %v1209 = vsel %vm1045, %v1207, %v1208
      %v1210 = vrot.slane %v1151, 2
      %v1211 = vrot.slane %v1152, 2
      %v1212 = vsel %vm1045, %v1210, %v1211
      %v1213 = vrot.slane %v1153, 2
      %v1214 = vrot.slane %v1154, 2
      %v1215 = vsel %vm1045, %v1213, %v1214
      %v1216 = vrot.slane %v1155, 2
      %v1217 = vrot.slane %v1156, 2
      %v1218 = vsel %vm1045, %v1216, %v1217
      %v1219 = vrot.slane %v1157, 2
      %v1220 = vrot.slane %v1158, 2
      %v1221 = vsel %vm1045, %v1219, %v1220
      %v1222 = vrot.slane %v1159, 2
      %v1223 = vrot.slane %v1160, 2
      %v1224 = vsel %vm1045, %v1222, %v1223
      %v1225 = vrot.slane %v1161, 2
      %v1226 = vrot.slane %v1162, 2
      %v1227 = vsel %vm1045, %v1225, %v1226
      %v1228 = vrot.slane %v1163, 2
      %v1229 = vrot.slane %v1164, 2
      %v1230 = vsel %vm1045, %v1228, %v1229
      %v1231 = vrot.slane %v1165, 2
      %v1232 = vrot.slane %v1166, 2
      %v1233 = vsel %vm1045, %v1231, %v1232
      %v1234 = vrot.slane %v1167, 2
      %v1235 = vrot.slane %v1168, 2
      %v1236 = vsel %vm1045, %v1234, %v1235
      %v1237 = vrot.slane %v1169, 2
      %v1238 = vrot.slane %v1170, 2
      %v1239 = vsel %vm1045, %v1237, %v1238
      %v1240 = vrot.slane %v1171, 2
      %v1241 = vrot.slane %v1172, 2
      %v1242 = vsel %vm1045, %v1240, %v1241
      %v1271 = vadd.f32 %v1116, %v1203
      %v1272 = vadd.f32 %v1117, %v1202
      %v1273 = vadd.f32 %v1118, %v1206
      %v1274 = vadd.f32 %v1119, %v1205
      %v1275 = vadd.f32 %v1120, %v1209
      %v1276 = vadd.f32 %v1121, %v1208
      %v1277 = vadd.f32 %v1122, %v1212
      %v1278 = vadd.f32 %v1123, %v1211
      %v1279 = vadd.f32 %v1124, %v1215
      %v1280 = vadd.f32 %v1125, %v1214
      %v1281 = vadd.f32 %v1126, %v1218
      %v1282 = vadd.f32 %v1127, %v1217
      %v1283 = vadd.f32 %v1128, %v1221
      %v1284 = vadd.f32 %v1129, %v1220
      %v1285 = vadd.f32 %v1130, %v1224
      %v1286 = vadd.f32 %v1131, %v1223
      %v1287 = vadd.f32 %v1132, %v1227
      %v1288 = vadd.f32 %v1133, %v1226
      %v1289 = vadd.f32 %v1134, %v1230
      %v1290 = vadd.f32 %v1135, %v1229
      %v1291 = vadd.f32 %v1136, %v1233
      %v1292 = vadd.f32 %v1137, %v1232
      %v1293 = vadd.f32 %v1138, %v1236
      %v1294 = vadd.f32 %v1139, %v1235
      %v1295 = vadd.f32 %v1140, %v1239
      %v1296 = vadd.f32 %v1141, %v1238
      %v1297 = vadd.f32 %v1142, %v1242
      %v1298 = vadd.f32 %v1143, %v1241
      %1300 = vset.pattern.permute.xlu0 0
      %1301 = vperm.xlu0 %1300, %v298
      %v1302 = vpop.permute.xlu0 %1301
      %1305 = vset.pattern.permute.xlu0 0
      %1306 = vperm.xlu0 %1305, %v299
      %v1307 = vpop.permute.xlu0 %1306
      %v1309 = vperm.slane %v305, 0
      %v1310 = vmul.f32 %v324, %v1309
      %v1311 = vmul.f32 %v329, %v1309
      %v1312 = vmul.f32 %v334, %v1309
      %v1313 = vmul.f32 %v339, %v1309
      %v1314 = vmul.f32 %v344, %v1309
      %v1315 = vmul.f32 %v349, %v1309
      %v1316 = vmul.f32 %v354, %v1309
      %v1317 = vmul.f32 %v359, %v1309
      %v1318 = vmul.f32 %v364, %v1309
      %v1319 = vmul.f32 %v369, %v1309
      %v1320 = vmul.f32 %v374, %v1309
      %v1321 = vmul.f32 %v379, %v1309
      %v1322 = vmul.f32 %v384, %v1309
      %v1323 = vmul.f32 %v389, %v1309
      %v1324 = vmul.f32 %v394, %v1309
      %v1325 = vmul.f32 %v399, %v1309
      %v1326 = vmul.f32 %v404, %v1309
      %v1327 = vmul.f32 %v409, %v1309
      %v1328 = vmul.f32 %v414, %v1309
      %v1329 = vmul.f32 %v419, %v1309
      %v1330 = vmul.f32 %v424, %v1309
      %v1331 = vmul.f32 %v429, %v1309
      %v1332 = vmul.f32 %v434, %v1309
      %v1333 = vmul.f32 %v439, %v1309
      %v1334 = vmul.f32 %v444, %v1309
      %v1335 = vmul.f32 %v449, %v1309
      %v1336 = vmul.f32 %v1302, %v1309
      %v1337 = vmul.f32 %v1307, %v1309
      %v1338 = vadd.f32 %v1271, %v1310
      %v1339 = vadd.f32 %v1272, %v1311
      %v1340 = vadd.f32 %v1273, %v1312
      %v1341 = vadd.f32 %v1274, %v1313
      %v1342 = vadd.f32 %v1275, %v1314
      %v1343 = vadd.f32 %v1276, %v1315
      %v1344 = vadd.f32 %v1277, %v1316
      %v1345 = vadd.f32 %v1278, %v1317
      %v1346 = vadd.f32 %v1279, %v1318
      %v1347 = vadd.f32 %v1280, %v1319
      %v1348 = vadd.f32 %v1281, %v1320
      %v1349 = vadd.f32 %v1282, %v1321
      %v1350 = vadd.f32 %v1283, %v1322
      %v1351 = vadd.f32 %v1284, %v1323
      %v1352 = vadd.f32 %v1285, %v1324
      %v1353 = vadd.f32 %v1286, %v1325
      %v1354 = vadd.f32 %v1287, %v1326
      %v1355 = vadd.f32 %v1288, %v1327
      %v1356 = vadd.f32 %v1289, %v1328
      %v1357 = vadd.f32 %v1290, %v1329
      %v1358 = vadd.f32 %v1291, %v1330
      %v1359 = vadd.f32 %v1292, %v1331
      %v1360 = vadd.f32 %v1293, %v1332
      %v1361 = vadd.f32 %v1294, %v1333
      %v1362 = vadd.f32 %v1295, %v1334
      %v1363 = vadd.f32 %v1296, %v1335
      %v1364 = vadd.f32 %v1297, %v1336
      %v1365 = vadd.f32 %v1298, %v1337
      %1366 = vset.pattern.permute.xlu0 1
      %1367 = vperm.xlu0 %1366, %v298
      %v1368 = vpop.permute.xlu0 %1367
      %1370 = vset.pattern.permute.xlu0 1
      %1371 = vperm.xlu0 %1370, %v299
      %v1372 = vpop.permute.xlu0 %1371
      %v1374 = vperm.slane %v305, 1
      %v1375 = vmul.f32 %v518, %v1374
      %v1376 = vmul.f32 %v522, %v1374
      %v1377 = vmul.f32 %v526, %v1374
      %v1378 = vmul.f32 %v530, %v1374
      %v1379 = vmul.f32 %v534, %v1374
      %v1380 = vmul.f32 %v538, %v1374
      %v1381 = vmul.f32 %v542, %v1374
      %v1382 = vmul.f32 %v546, %v1374
      %v1383 = vmul.f32 %v550, %v1374
      %v1384 = vmul.f32 %v554, %v1374
      %v1385 = vmul.f32 %v558, %v1374
      %v1386 = vmul.f32 %v562, %v1374
      %v1387 = vmul.f32 %v566, %v1374
      %v1388 = vmul.f32 %v570, %v1374
      %v1389 = vmul.f32 %v574, %v1374
      %v1390 = vmul.f32 %v578, %v1374
      %v1391 = vmul.f32 %v582, %v1374
      %v1392 = vmul.f32 %v586, %v1374
      %v1393 = vmul.f32 %v590, %v1374
      %v1394 = vmul.f32 %v594, %v1374
      %v1395 = vmul.f32 %v598, %v1374
      %v1396 = vmul.f32 %v602, %v1374
      %v1397 = vmul.f32 %v606, %v1374
      %v1398 = vmul.f32 %v610, %v1374
      %v1399 = vmul.f32 %v614, %v1374
      %v1400 = vmul.f32 %v618, %v1374
      %v1401 = vmul.f32 %v1368, %v1374
      %v1402 = vmul.f32 %v1372, %v1374
      %v1403 = vadd.f32 %v1338, %v1375
      %v1404 = vadd.f32 %v1339, %v1376
      %v1405 = vadd.f32 %v1340, %v1377
      %v1406 = vadd.f32 %v1341, %v1378
      %v1407 = vadd.f32 %v1342, %v1379
      %v1408 = vadd.f32 %v1343, %v1380
      %v1409 = vadd.f32 %v1344, %v1381
      %v1410 = vadd.f32 %v1345, %v1382
      %v1411 = vadd.f32 %v1346, %v1383
      %v1412 = vadd.f32 %v1347, %v1384
      %v1413 = vadd.f32 %v1348, %v1385
      %v1414 = vadd.f32 %v1349, %v1386
      %v1415 = vadd.f32 %v1350, %v1387
      %v1416 = vadd.f32 %v1351, %v1388
      %v1417 = vadd.f32 %v1352, %v1389
      %v1418 = vadd.f32 %v1353, %v1390
      %v1419 = vadd.f32 %v1354, %v1391
      %v1420 = vadd.f32 %v1355, %v1392
      %v1421 = vadd.f32 %v1356, %v1393
      %v1422 = vadd.f32 %v1357, %v1394
      %v1423 = vadd.f32 %v1358, %v1395
      %v1424 = vadd.f32 %v1359, %v1396
      %v1425 = vadd.f32 %v1360, %v1397
      %v1426 = vadd.f32 %v1361, %v1398
      %v1427 = vadd.f32 %v1362, %v1399
      %v1428 = vadd.f32 %v1363, %v1400
      %v1429 = vadd.f32 %v1364, %v1401
      %v1430 = vadd.f32 %v1365, %v1402
      %v1431 = vperm.slane %v306, 0
      %v1432 = vmul.f32 %v324, %v1431
      %v1433 = vmul.f32 %v329, %v1431
      %v1434 = vmul.f32 %v334, %v1431
      %v1435 = vmul.f32 %v339, %v1431
      %v1436 = vmul.f32 %v344, %v1431
      %v1437 = vmul.f32 %v349, %v1431
      %v1438 = vmul.f32 %v354, %v1431
      %v1439 = vmul.f32 %v359, %v1431
      %v1440 = vmul.f32 %v364, %v1431
      %v1441 = vmul.f32 %v369, %v1431
      %v1442 = vmul.f32 %v374, %v1431
      %v1443 = vmul.f32 %v379, %v1431
      %v1444 = vmul.f32 %v384, %v1431
      %v1445 = vmul.f32 %v389, %v1431
      %v1446 = vmul.f32 %v394, %v1431
      %v1447 = vmul.f32 %v399, %v1431
      %v1448 = vmul.f32 %v404, %v1431
      %v1449 = vmul.f32 %v409, %v1431
      %v1450 = vmul.f32 %v414, %v1431
      %v1451 = vmul.f32 %v419, %v1431
      %v1452 = vmul.f32 %v424, %v1431
      %v1453 = vmul.f32 %v429, %v1431
      %v1454 = vmul.f32 %v434, %v1431
      %v1455 = vmul.f32 %v439, %v1431
      %v1456 = vmul.f32 %v444, %v1431
      %v1457 = vmul.f32 %v449, %v1431
      %v1458 = vmul.f32 %v1302, %v1431
      %v1459 = vmul.f32 %v1307, %v1431
      %v1488 = vrot.slane %v1432, 1
      %v1489 = vrot.slane %v1433, 1
      %v1490 = vsel %vm734, %v1488, %v1489
      %v1491 = vrot.slane %v1434, 1
      %v1492 = vrot.slane %v1435, 1
      %v1493 = vsel %vm734, %v1491, %v1492
      %v1494 = vrot.slane %v1436, 1
      %v1495 = vrot.slane %v1437, 1
      %v1496 = vsel %vm734, %v1494, %v1495
      %v1497 = vrot.slane %v1438, 1
      %v1498 = vrot.slane %v1439, 1
      %v1499 = vsel %vm734, %v1497, %v1498
      %v1500 = vrot.slane %v1440, 1
      %v1501 = vrot.slane %v1441, 1
      %v1502 = vsel %vm734, %v1500, %v1501
      %v1503 = vrot.slane %v1442, 1
      %v1504 = vrot.slane %v1443, 1
      %v1505 = vsel %vm734, %v1503, %v1504
      %v1506 = vrot.slane %v1444, 1
      %v1507 = vrot.slane %v1445, 1
      %v1508 = vsel %vm734, %v1506, %v1507
      %v1509 = vrot.slane %v1446, 1
      %v1510 = vrot.slane %v1447, 1
      %v1511 = vsel %vm734, %v1509, %v1510
      %v1512 = vrot.slane %v1448, 1
      %v1513 = vrot.slane %v1449, 1
      %v1514 = vsel %vm734, %v1512, %v1513
      %v1515 = vrot.slane %v1450, 1
      %v1516 = vrot.slane %v1451, 1
      %v1517 = vsel %vm734, %v1515, %v1516
      %v1518 = vrot.slane %v1452, 1
      %v1519 = vrot.slane %v1453, 1
      %v1520 = vsel %vm734, %v1518, %v1519
      %v1521 = vrot.slane %v1454, 1
      %v1522 = vrot.slane %v1455, 1
      %v1523 = vsel %vm734, %v1521, %v1522
      %v1524 = vrot.slane %v1456, 1
      %v1525 = vrot.slane %v1457, 1
      %v1526 = vsel %vm734, %v1524, %v1525
      %v1527 = vrot.slane %v1458, 1
      %v1528 = vrot.slane %v1459, 1
      %v1529 = vsel %vm734, %v1527, %v1528
      %v1558 = vadd.f32 %v1403, %v1490
      %v1559 = vadd.f32 %v1404, %v1489
      %v1560 = vadd.f32 %v1405, %v1493
      %v1561 = vadd.f32 %v1406, %v1492
      %v1562 = vadd.f32 %v1407, %v1496
      %v1563 = vadd.f32 %v1408, %v1495
      %v1564 = vadd.f32 %v1409, %v1499
      %v1565 = vadd.f32 %v1410, %v1498
      %v1566 = vadd.f32 %v1411, %v1502
      %v1567 = vadd.f32 %v1412, %v1501
      %v1568 = vadd.f32 %v1413, %v1505
      %v1569 = vadd.f32 %v1414, %v1504
      %v1570 = vadd.f32 %v1415, %v1508
      %v1571 = vadd.f32 %v1416, %v1507
      %v1572 = vadd.f32 %v1417, %v1511
      %v1573 = vadd.f32 %v1418, %v1510
      %v1574 = vadd.f32 %v1419, %v1514
      %v1575 = vadd.f32 %v1420, %v1513
      %v1576 = vadd.f32 %v1421, %v1517
      %v1577 = vadd.f32 %v1422, %v1516
      %v1578 = vadd.f32 %v1423, %v1520
      %v1579 = vadd.f32 %v1424, %v1519
      %v1580 = vadd.f32 %v1425, %v1523
      %v1581 = vadd.f32 %v1426, %v1522
      %v1582 = vadd.f32 %v1427, %v1526
      %v1583 = vadd.f32 %v1428, %v1525
      %v1584 = vadd.f32 %v1429, %v1529
      %v1585 = vadd.f32 %v1430, %v1528
      %v1586 = vperm.slane %v306, 1
      %v1587 = vmul.f32 %v518, %v1586
      %v1588 = vmul.f32 %v522, %v1586
      %v1589 = vmul.f32 %v526, %v1586
      %v1590 = vmul.f32 %v530, %v1586
      %v1591 = vmul.f32 %v534, %v1586
      %v1592 = vmul.f32 %v538, %v1586
      %v1593 = vmul.f32 %v542, %v1586
      %v1594 = vmul.f32 %v546, %v1586
      %v1595 = vmul.f32 %v550, %v1586
      %v1596 = vmul.f32 %v554, %v1586
      %v1597 = vmul.f32 %v558, %v1586
      %v1598 = vmul.f32 %v562, %v1586
      %v1599 = vmul.f32 %v566, %v1586
      %v1600 = vmul.f32 %v570, %v1586
      %v1601 = vmul.f32 %v574, %v1586
      %v1602 = vmul.f32 %v578, %v1586
      %v1603 = vmul.f32 %v582, %v1586
      %v1604 = vmul.f32 %v586, %v1586
      %v1605 = vmul.f32 %v590, %v1586
      %v1606 = vmul.f32 %v594, %v1586
      %v1607 = vmul.f32 %v598, %v1586
      %v1608 = vmul.f32 %v602, %v1586
      %v1609 = vmul.f32 %v606, %v1586
      %v1610 = vmul.f32 %v610, %v1586
      %v1611 = vmul.f32 %v614, %v1586
      %v1612 = vmul.f32 %v618, %v1586
      %v1613 = vmul.f32 %v1368, %v1586
      %v1614 = vmul.f32 %v1372, %v1586
      %v1643 = vrot.slane %v1587, 1
      %v1644 = vrot.slane %v1588, 1
      %v1645 = vsel %vm734, %v1643, %v1644
      %v1646 = vrot.slane %v1589, 1
      %v1647 = vrot.slane %v1590, 1
      %v1648 = vsel %vm734, %v1646, %v1647
      %v1649 = vrot.slane %v1591, 1
      %v1650 = vrot.slane %v1592, 1
      %v1651 = vsel %vm734, %v1649, %v1650
      %v1652 = vrot.slane %v1593, 1
      %v1653 = vrot.slane %v1594, 1
      %v1654 = vsel %vm734, %v1652, %v1653
      %v1655 = vrot.slane %v1595, 1
      %v1656 = vrot.slane %v1596, 1
      %v1657 = vsel %vm734, %v1655, %v1656
      %v1658 = vrot.slane %v1597, 1
      %v1659 = vrot.slane %v1598, 1
      %v1660 = vsel %vm734, %v1658, %v1659
      %v1661 = vrot.slane %v1599, 1
      %v1662 = vrot.slane %v1600, 1
      %v1663 = vsel %vm734, %v1661, %v1662
      %v1664 = vrot.slane %v1601, 1
      %v1665 = vrot.slane %v1602, 1
      %v1666 = vsel %vm734, %v1664, %v1665
      %v1667 = vrot.slane %v1603, 1
      %v1668 = vrot.slane %v1604, 1
      %v1669 = vsel %vm734, %v1667, %v1668
      %v1670 = vrot.slane %v1605, 1
      %v1671 = vrot.slane %v1606, 1
      %v1672 = vsel %vm734, %v1670, %v1671
      %v1673 = vrot.slane %v1607, 1
      %v1674 = vrot.slane %v1608, 1
      %v1675 = vsel %vm734, %v1673, %v1674
      %v1676 = vrot.slane %v1609, 1
      %v1677 = vrot.slane %v1610, 1
      %v1678 = vsel %vm734, %v1676, %v1677
      %v1679 = vrot.slane %v1611, 1
      %v1680 = vrot.slane %v1612, 1
      %v1681 = vsel %vm734, %v1679, %v1680
      %v1682 = vrot.slane %v1613, 1
      %v1683 = vrot.slane %v1614, 1
      %v1684 = vsel %vm734, %v1682, %v1683
      %v1713 = vadd.f32 %v1558, %v1645
      %v1714 = vadd.f32 %v1559, %v1644
      %v1715 = vadd.f32 %v1560, %v1648
      %v1716 = vadd.f32 %v1561, %v1647
      %v1717 = vadd.f32 %v1562, %v1651
      %v1718 = vadd.f32 %v1563, %v1650
      %v1719 = vadd.f32 %v1564, %v1654
      %v1720 = vadd.f32 %v1565, %v1653
      %v1721 = vadd.f32 %v1566, %v1657
      %v1722 = vadd.f32 %v1567, %v1656
      %v1723 = vadd.f32 %v1568, %v1660
      %v1724 = vadd.f32 %v1569, %v1659
      %v1725 = vadd.f32 %v1570, %v1663
      %v1726 = vadd.f32 %v1571, %v1662
      %v1727 = vadd.f32 %v1572, %v1666
      %v1728 = vadd.f32 %v1573, %v1665
      %v1729 = vadd.f32 %v1574, %v1669
      %v1730 = vadd.f32 %v1575, %v1668
      %v1731 = vadd.f32 %v1576, %v1672
      %v1732 = vadd.f32 %v1577, %v1671
      %v1733 = vadd.f32 %v1578, %v1675
      %v1734 = vadd.f32 %v1579, %v1674
      %v1735 = vadd.f32 %v1580, %v1678
      %v1736 = vadd.f32 %v1581, %v1677
      %v1737 = vadd.f32 %v1582, %v1681
      %v1738 = vadd.f32 %v1583, %v1680
      %v1739 = vadd.f32 %v1584, %v1684
      %v1740 = vadd.f32 %v1585, %v1683
      %v1741 = vperm.slane %v307, 0
      %v1742 = vmul.f32 %v324, %v1741
      %v1743 = vmul.f32 %v329, %v1741
      %v1744 = vmul.f32 %v334, %v1741
      %v1745 = vmul.f32 %v339, %v1741
      %v1746 = vmul.f32 %v344, %v1741
      %v1747 = vmul.f32 %v349, %v1741
      %v1748 = vmul.f32 %v354, %v1741
      %v1749 = vmul.f32 %v359, %v1741
      %v1750 = vmul.f32 %v364, %v1741
      %v1751 = vmul.f32 %v369, %v1741
      %v1752 = vmul.f32 %v374, %v1741
      %v1753 = vmul.f32 %v379, %v1741
      %v1754 = vmul.f32 %v384, %v1741
      %v1755 = vmul.f32 %v389, %v1741
      %v1756 = vmul.f32 %v394, %v1741
      %v1757 = vmul.f32 %v399, %v1741
      %v1758 = vmul.f32 %v404, %v1741
      %v1759 = vmul.f32 %v409, %v1741
      %v1760 = vmul.f32 %v414, %v1741
      %v1761 = vmul.f32 %v419, %v1741
      %v1762 = vmul.f32 %v424, %v1741
      %v1763 = vmul.f32 %v429, %v1741
      %v1764 = vmul.f32 %v434, %v1741
      %v1765 = vmul.f32 %v439, %v1741
      %v1766 = vmul.f32 %v444, %v1741
      %v1767 = vmul.f32 %v449, %v1741
      %v1768 = vmul.f32 %v1302, %v1741
      %v1769 = vmul.f32 %v1307, %v1741
      %v1798 = vrot.slane %v1742, 2
      %v1799 = vrot.slane %v1743, 2
      %v1800 = vsel %vm1045, %v1798, %v1799
      %v1801 = vrot.slane %v1744, 2
      %v1802 = vrot.slane %v1745, 2
      %v1803 = vsel %vm1045, %v1801, %v1802
      %v1804 = vrot.slane %v1746, 2
      %v1805 = vrot.slane %v1747, 2
      %v1806 = vsel %vm1045, %v1804, %v1805
      %v1807 = vrot.slane %v1748, 2
      %v1808 = vrot.slane %v1749, 2
      %v1809 = vsel %vm1045, %v1807, %v1808
      %v1810 = vrot.slane %v1750, 2
      %v1811 = vrot.slane %v1751, 2
      %v1812 = vsel %vm1045, %v1810, %v1811
      %v1813 = vrot.slane %v1752, 2
      %v1814 = vrot.slane %v1753, 2
      %v1815 = vsel %vm1045, %v1813, %v1814
      %v1816 = vrot.slane %v1754, 2
      %v1817 = vrot.slane %v1755, 2
      %v1818 = vsel %vm1045, %v1816, %v1817
      %v1819 = vrot.slane %v1756, 2
      %v1820 = vrot.slane %v1757, 2
      %v1821 = vsel %vm1045, %v1819, %v1820
      %v1822 = vrot.slane %v1758, 2
      %v1823 = vrot.slane %v1759, 2
      %v1824 = vsel %vm1045, %v1822, %v1823
      %v1825 = vrot.slane %v1760, 2
      %v1826 = vrot.slane %v1761, 2
      %v1827 = vsel %vm1045, %v1825, %v1826
      %v1828 = vrot.slane %v1762, 2
      %v1829 = vrot.slane %v1763, 2
      %v1830 = vsel %vm1045, %v1828, %v1829
      %v1831 = vrot.slane %v1764, 2
      %v1832 = vrot.slane %v1765, 2
      %v1833 = vsel %vm1045, %v1831, %v1832
      %v1834 = vrot.slane %v1766, 2
      %v1835 = vrot.slane %v1767, 2
      %v1836 = vsel %vm1045, %v1834, %v1835
      %v1837 = vrot.slane %v1768, 2
      %v1838 = vrot.slane %v1769, 2
      %v1839 = vsel %vm1045, %v1837, %v1838
      %v1868 = vadd.f32 %v1713, %v1800
      %v1869 = vadd.f32 %v1714, %v1799
      %v1870 = vadd.f32 %v1715, %v1803
      %v1871 = vadd.f32 %v1716, %v1802
      %v1872 = vadd.f32 %v1717, %v1806
      %v1873 = vadd.f32 %v1718, %v1805
      %v1874 = vadd.f32 %v1719, %v1809
      %v1875 = vadd.f32 %v1720, %v1808
      %v1876 = vadd.f32 %v1721, %v1812
      %v1877 = vadd.f32 %v1722, %v1811
      %v1878 = vadd.f32 %v1723, %v1815
      %v1879 = vadd.f32 %v1724, %v1814
      %v1880 = vadd.f32 %v1725, %v1818
      %v1881 = vadd.f32 %v1726, %v1817
      %v1882 = vadd.f32 %v1727, %v1821
      %v1883 = vadd.f32 %v1728, %v1820
      %v1884 = vadd.f32 %v1729, %v1824
      %v1885 = vadd.f32 %v1730, %v1823
      %v1886 = vadd.f32 %v1731, %v1827
      %v1887 = vadd.f32 %v1732, %v1826
      %v1888 = vadd.f32 %v1733, %v1830
      %v1889 = vadd.f32 %v1734, %v1829
      %v1890 = vadd.f32 %v1735, %v1833
      %v1891 = vadd.f32 %v1736, %v1832
      %v1892 = vadd.f32 %v1737, %v1836
      %v1893 = vadd.f32 %v1738, %v1835
      %v1894 = vadd.f32 %v1739, %v1839
      %v1895 = vadd.f32 %v1740, %v1838
      %v1896 = vperm.slane %v307, 1
      %v1897 = vmul.f32 %v518, %v1896
      %v1898 = vmul.f32 %v522, %v1896
      %v1899 = vmul.f32 %v526, %v1896
      %v1900 = vmul.f32 %v530, %v1896
      %v1901 = vmul.f32 %v534, %v1896
      %v1902 = vmul.f32 %v538, %v1896
      %v1903 = vmul.f32 %v542, %v1896
      %v1904 = vmul.f32 %v546, %v1896
      %v1905 = vmul.f32 %v550, %v1896
      %v1906 = vmul.f32 %v554, %v1896
      %v1907 = vmul.f32 %v558, %v1896
      %v1908 = vmul.f32 %v562, %v1896
      %v1909 = vmul.f32 %v566, %v1896
      %v1910 = vmul.f32 %v570, %v1896
      %v1911 = vmul.f32 %v574, %v1896
      %v1912 = vmul.f32 %v578, %v1896
      %v1913 = vmul.f32 %v582, %v1896
      %v1914 = vmul.f32 %v586, %v1896
      %v1915 = vmul.f32 %v590, %v1896
      %v1916 = vmul.f32 %v594, %v1896
      %v1917 = vmul.f32 %v598, %v1896
      %v1918 = vmul.f32 %v602, %v1896
      %v1919 = vmul.f32 %v606, %v1896
      %v1920 = vmul.f32 %v610, %v1896
      %v1921 = vmul.f32 %v614, %v1896
      %v1922 = vmul.f32 %v618, %v1896
      %v1923 = vmul.f32 %v1368, %v1896
      %v1924 = vmul.f32 %v1372, %v1896
      %v1953 = vrot.slane %v1897, 2
      %v1954 = vrot.slane %v1898, 2
      %v1955 = vsel %vm1045, %v1953, %v1954
      %v1956 = vrot.slane %v1899, 2
      %v1957 = vrot.slane %v1900, 2
      %v1958 = vsel %vm1045, %v1956, %v1957
      %v1959 = vrot.slane %v1901, 2
      %v1960 = vrot.slane %v1902, 2
      %v1961 = vsel %vm1045, %v1959, %v1960
      %v1962 = vrot.slane %v1903, 2
      %v1963 = vrot.slane %v1904, 2
      %v1964 = vsel %vm1045, %v1962, %v1963
      %v1965 = vrot.slane %v1905, 2
      %v1966 = vrot.slane %v1906, 2
      %v1967 = vsel %vm1045, %v1965, %v1966
      %v1968 = vrot.slane %v1907, 2
      %v1969 = vrot.slane %v1908, 2
      %v1970 = vsel %vm1045, %v1968, %v1969
      %v1971 = vrot.slane %v1909, 2
      %v1972 = vrot.slane %v1910, 2
      %v1973 = vsel %vm1045, %v1971, %v1972
      %v1974 = vrot.slane %v1911, 2
      %v1975 = vrot.slane %v1912, 2
      %v1976 = vsel %vm1045, %v1974, %v1975
      %v1977 = vrot.slane %v1913, 2
      %v1978 = vrot.slane %v1914, 2
      %v1979 = vsel %vm1045, %v1977, %v1978
      %v1980 = vrot.slane %v1915, 2
      %v1981 = vrot.slane %v1916, 2
      %v1982 = vsel %vm1045, %v1980, %v1981
      %v1983 = vrot.slane %v1917, 2
      %v1984 = vrot.slane %v1918, 2
      %v1985 = vsel %vm1045, %v1983, %v1984
      %v1986 = vrot.slane %v1919, 2
      %v1987 = vrot.slane %v1920, 2
      %v1988 = vsel %vm1045, %v1986, %v1987
      %v1989 = vrot.slane %v1921, 2
      %v1990 = vrot.slane %v1922, 2
      %v1991 = vsel %vm1045, %v1989, %v1990
      %v1992 = vrot.slane %v1923, 2
      %v1993 = vrot.slane %v1924, 2
      %v1994 = vsel %vm1045, %v1992, %v1993
      %v2023 = vadd.f32 %v1868, %v1955
      %v2024 = vadd.f32 %v1869, %v1954
      %v2025 = vadd.f32 %v1870, %v1958
      %v2026 = vadd.f32 %v1871, %v1957
      %v2027 = vadd.f32 %v1872, %v1961
      %v2028 = vadd.f32 %v1873, %v1960
      %v2029 = vadd.f32 %v1874, %v1964
      %v2030 = vadd.f32 %v1875, %v1963
      %v2031 = vadd.f32 %v1876, %v1967
      %v2032 = vadd.f32 %v1877, %v1966
      %v2033 = vadd.f32 %v1878, %v1970
      %v2034 = vadd.f32 %v1879, %v1969
      %v2035 = vadd.f32 %v1880, %v1973
      %v2036 = vadd.f32 %v1881, %v1972
      %v2037 = vadd.f32 %v1882, %v1976
      %v2038 = vadd.f32 %v1883, %v1975
      %v2039 = vadd.f32 %v1884, %v1979
      %v2040 = vadd.f32 %v1885, %v1978
      %v2041 = vadd.f32 %v1886, %v1982
      %v2042 = vadd.f32 %v1887, %v1981
      %v2043 = vadd.f32 %v1888, %v1985
      %v2044 = vadd.f32 %v1889, %v1984
      %v2045 = vadd.f32 %v1890, %v1988
      %v2046 = vadd.f32 %v1891, %v1987
      %v2047 = vadd.f32 %v1892, %v1991
      %v2048 = vadd.f32 %v1893, %v1990
      %v2049 = vadd.f32 %v1894, %v1994
      %v2050 = vadd.f32 %v1895, %v1993
      %2052 = vset.pattern.permute.xlu0 0
      %2053 = vperm.xlu0 %2052, %v300
      %v2054 = vpop.permute.xlu0 %2053
      %2057 = vset.pattern.permute.xlu0 0
      %2058 = vperm.xlu0 %2057, %v301
      %v2059 = vpop.permute.xlu0 %2058
      %v2061 = vperm.slane %v308, 0
      %v2062 = vmul.f32 %v334, %v2061
      %v2063 = vmul.f32 %v339, %v2061
      %v2064 = vmul.f32 %v344, %v2061
      %v2065 = vmul.f32 %v349, %v2061
      %v2066 = vmul.f32 %v354, %v2061
      %v2067 = vmul.f32 %v359, %v2061
      %v2068 = vmul.f32 %v364, %v2061
      %v2069 = vmul.f32 %v369, %v2061
      %v2070 = vmul.f32 %v374, %v2061
      %v2071 = vmul.f32 %v379, %v2061
      %v2072 = vmul.f32 %v384, %v2061
      %v2073 = vmul.f32 %v389, %v2061
      %v2074 = vmul.f32 %v394, %v2061
      %v2075 = vmul.f32 %v399, %v2061
      %v2076 = vmul.f32 %v404, %v2061
      %v2077 = vmul.f32 %v409, %v2061
      %v2078 = vmul.f32 %v414, %v2061
      %v2079 = vmul.f32 %v419, %v2061
      %v2080 = vmul.f32 %v424, %v2061
      %v2081 = vmul.f32 %v429, %v2061
      %v2082 = vmul.f32 %v434, %v2061
      %v2083 = vmul.f32 %v439, %v2061
      %v2084 = vmul.f32 %v444, %v2061
      %v2085 = vmul.f32 %v449, %v2061
      %v2086 = vmul.f32 %v1302, %v2061
      %v2087 = vmul.f32 %v1307, %v2061
      %v2088 = vmul.f32 %v2054, %v2061
      %v2089 = vmul.f32 %v2059, %v2061
      %v2090 = vadd.f32 %v2023, %v2062
      %v2091 = vadd.f32 %v2024, %v2063
      %v2092 = vadd.f32 %v2025, %v2064
      %v2093 = vadd.f32 %v2026, %v2065
      %v2094 = vadd.f32 %v2027, %v2066
      %v2095 = vadd.f32 %v2028, %v2067
      %v2096 = vadd.f32 %v2029, %v2068
      %v2097 = vadd.f32 %v2030, %v2069
      %v2098 = vadd.f32 %v2031, %v2070
      %v2099 = vadd.f32 %v2032, %v2071
      %v2100 = vadd.f32 %v2033, %v2072
      %v2101 = vadd.f32 %v2034, %v2073
      %v2102 = vadd.f32 %v2035, %v2074
      %v2103 = vadd.f32 %v2036, %v2075
      %v2104 = vadd.f32 %v2037, %v2076
      %v2105 = vadd.f32 %v2038, %v2077
      %v2106 = vadd.f32 %v2039, %v2078
      %v2107 = vadd.f32 %v2040, %v2079
      %v2108 = vadd.f32 %v2041, %v2080
      %v2109 = vadd.f32 %v2042, %v2081
      %v2110 = vadd.f32 %v2043, %v2082
      %v2111 = vadd.f32 %v2044, %v2083
      %v2112 = vadd.f32 %v2045, %v2084
      %v2113 = vadd.f32 %v2046, %v2085
      %v2114 = vadd.f32 %v2047, %v2086
      %v2115 = vadd.f32 %v2048, %v2087
      %v2116 = vadd.f32 %v2049, %v2088
      %v2117 = vadd.f32 %v2050, %v2089
      %2118 = vset.pattern.permute.xlu0 1
      %2119 = vperm.xlu0 %2118, %v300
      %v2120 = vpop.permute.xlu0 %2119
      %2122 = vset.pattern.permute.xlu0 1
      %2123 = vperm.xlu0 %2122, %v301
      %v2124 = vpop.permute.xlu0 %2123
      %v2126 = vperm.slane %v308, 1
      %v2127 = vmul.f32 %v526, %v2126
      %v2128 = vmul.f32 %v530, %v2126
      %v2129 = vmul.f32 %v534, %v2126
      %v2130 = vmul.f32 %v538, %v2126
      %v2131 = vmul.f32 %v542, %v2126
      %v2132 = vmul.f32 %v546, %v2126
      %v2133 = vmul.f32 %v550, %v2126
      %v2134 = vmul.f32 %v554, %v2126
      %v2135 = vmul.f32 %v558, %v2126
      %v2136 = vmul.f32 %v562, %v2126
      %v2137 = vmul.f32 %v566, %v2126
      %v2138 = vmul.f32 %v570, %v2126
      %v2139 = vmul.f32 %v574, %v2126
      %v2140 = vmul.f32 %v578, %v2126
      %v2141 = vmul.f32 %v582, %v2126
      %v2142 = vmul.f32 %v586, %v2126
      %v2143 = vmul.f32 %v590, %v2126
      %v2144 = vmul.f32 %v594, %v2126
      %v2145 = vmul.f32 %v598, %v2126
      %v2146 = vmul.f32 %v602, %v2126
      %v2147 = vmul.f32 %v606, %v2126
      %v2148 = vmul.f32 %v610, %v2126
      %v2149 = vmul.f32 %v614, %v2126
      %v2150 = vmul.f32 %v618, %v2126
      %v2151 = vmul.f32 %v1368, %v2126
      %v2152 = vmul.f32 %v1372, %v2126
      %v2153 = vmul.f32 %v2120, %v2126
      %v2154 = vmul.f32 %v2124, %v2126
      %v2155 = vadd.f32 %v2090, %v2127
      %v2156 = vadd.f32 %v2091, %v2128
      %v2157 = vadd.f32 %v2092, %v2129
      %v2158 = vadd.f32 %v2093, %v2130
      %v2159 = vadd.f32 %v2094, %v2131
      %v2160 = vadd.f32 %v2095, %v2132
      %v2161 = vadd.f32 %v2096, %v2133
      %v2162 = vadd.f32 %v2097, %v2134
      %v2163 = vadd.f32 %v2098, %v2135
      %v2164 = vadd.f32 %v2099, %v2136
      %v2165 = vadd.f32 %v2100, %v2137
      %v2166 = vadd.f32 %v2101, %v2138
      %v2167 = vadd.f32 %v2102, %v2139
      %v2168 = vadd.f32 %v2103, %v2140
      %v2169 = vadd.f32 %v2104, %v2141
      %v2170 = vadd.f32 %v2105, %v2142
      %v2171 = vadd.f32 %v2106, %v2143
      %v2172 = vadd.f32 %v2107, %v2144
      %v2173 = vadd.f32 %v2108, %v2145
      %v2174 = vadd.f32 %v2109, %v2146
      %v2175 = vadd.f32 %v2110, %v2147
      %v2176 = vadd.f32 %v2111, %v2148
      %v2177 = vadd.f32 %v2112, %v2149
      %v2178 = vadd.f32 %v2113, %v2150
      %v2179 = vadd.f32 %v2114, %v2151
      %v2180 = vadd.f32 %v2115, %v2152
      %v2181 = vadd.f32 %v2116, %v2153
      %v2182 = vadd.f32 %v2117, %v2154
      %v2183 = vperm.slane %v309, 0
      %v2184 = vmul.f32 %v334, %v2183
      %v2185 = vmul.f32 %v339, %v2183
      %v2186 = vmul.f32 %v344, %v2183
      %v2187 = vmul.f32 %v349, %v2183
      %v2188 = vmul.f32 %v354, %v2183
      %v2189 = vmul.f32 %v359, %v2183
      %v2190 = vmul.f32 %v364, %v2183
      %v2191 = vmul.f32 %v369, %v2183
      %v2192 = vmul.f32 %v374, %v2183
      %v2193 = vmul.f32 %v379, %v2183
      %v2194 = vmul.f32 %v384, %v2183
      %v2195 = vmul.f32 %v389, %v2183
      %v2196 = vmul.f32 %v394, %v2183
      %v2197 = vmul.f32 %v399, %v2183
      %v2198 = vmul.f32 %v404, %v2183
      %v2199 = vmul.f32 %v409, %v2183
      %v2200 = vmul.f32 %v414, %v2183
      %v2201 = vmul.f32 %v419, %v2183
      %v2202 = vmul.f32 %v424, %v2183
      %v2203 = vmul.f32 %v429, %v2183
      %v2204 = vmul.f32 %v434, %v2183
      %v2205 = vmul.f32 %v439, %v2183
      %v2206 = vmul.f32 %v444, %v2183
      %v2207 = vmul.f32 %v449, %v2183
      %v2208 = vmul.f32 %v1302, %v2183
      %v2209 = vmul.f32 %v1307, %v2183
      %v2210 = vmul.f32 %v2054, %v2183
      %v2211 = vmul.f32 %v2059, %v2183
      %v2240 = vrot.slane %v2184, 1
      %v2241 = vrot.slane %v2185, 1
      %v2242 = vsel %vm734, %v2240, %v2241
      %v2243 = vrot.slane %v2186, 1
      %v2244 = vrot.slane %v2187, 1
      %v2245 = vsel %vm734, %v2243, %v2244
      %v2246 = vrot.slane %v2188, 1
      %v2247 = vrot.slane %v2189, 1
      %v2248 = vsel %vm734, %v2246, %v2247
      %v2249 = vrot.slane %v2190, 1
      %v2250 = vrot.slane %v2191, 1
      %v2251 = vsel %vm734, %v2249, %v2250
      %v2252 = vrot.slane %v2192, 1
      %v2253 = vrot.slane %v2193, 1
      %v2254 = vsel %vm734, %v2252, %v2253
      %v2255 = vrot.slane %v2194, 1
      %v2256 = vrot.slane %v2195, 1
      %v2257 = vsel %vm734, %v2255, %v2256
      %v2258 = vrot.slane %v2196, 1
      %v2259 = vrot.slane %v2197, 1
      %v2260 = vsel %vm734, %v2258, %v2259
      %v2261 = vrot.slane %v2198, 1
      %v2262 = vrot.slane %v2199, 1
      %v2263 = vsel %vm734, %v2261, %v2262
      %v2264 = vrot.slane %v2200, 1
      %v2265 = vrot.slane %v2201, 1
      %v2266 = vsel %vm734, %v2264, %v2265
      %v2267 = vrot.slane %v2202, 1
      %v2268 = vrot.slane %v2203, 1
      %v2269 = vsel %vm734, %v2267, %v2268
      %v2270 = vrot.slane %v2204, 1
      %v2271 = vrot.slane %v2205, 1
      %v2272 = vsel %vm734, %v2270, %v2271
      %v2273 = vrot.slane %v2206, 1
      %v2274 = vrot.slane %v2207, 1
      %v2275 = vsel %vm734, %v2273, %v2274
      %v2276 = vrot.slane %v2208, 1
      %v2277 = vrot.slane %v2209, 1
      %v2278 = vsel %vm734, %v2276, %v2277
      %v2279 = vrot.slane %v2210, 1
      %v2280 = vrot.slane %v2211, 1
      %v2281 = vsel %vm734, %v2279, %v2280
      %v2310 = vadd.f32 %v2155, %v2242
      %v2311 = vadd.f32 %v2156, %v2241
      %v2312 = vadd.f32 %v2157, %v2245
      %v2313 = vadd.f32 %v2158, %v2244
      %v2314 = vadd.f32 %v2159, %v2248
      %v2315 = vadd.f32 %v2160, %v2247
      %v2316 = vadd.f32 %v2161, %v2251
      %v2317 = vadd.f32 %v2162, %v2250
      %v2318 = vadd.f32 %v2163, %v2254
      %v2319 = vadd.f32 %v2164, %v2253
      %v2320 = vadd.f32 %v2165, %v2257
      %v2321 = vadd.f32 %v2166, %v2256
      %v2322 = vadd.f32 %v2167, %v2260
      %v2323 = vadd.f32 %v2168, %v2259
      %v2324 = vadd.f32 %v2169, %v2263
      %v2325 = vadd.f32 %v2170, %v2262
      %v2326 = vadd.f32 %v2171, %v2266
      %v2327 = vadd.f32 %v2172, %v2265
      %v2328 = vadd.f32 %v2173, %v2269
      %v2329 = vadd.f32 %v2174, %v2268
      %v2330 = vadd.f32 %v2175, %v2272
      %v2331 = vadd.f32 %v2176, %v2271
      %v2332 = vadd.f32 %v2177, %v2275
      %v2333 = vadd.f32 %v2178, %v2274
      %v2334 = vadd.f32 %v2179, %v2278
      %v2335 = vadd.f32 %v2180, %v2277
      %v2336 = vadd.f32 %v2181, %v2281
      %v2337 = vadd.f32 %v2182, %v2280
      %v2338 = vperm.slane %v309, 1
      %v2339 = vmul.f32 %v526, %v2338
      %v2340 = vmul.f32 %v530, %v2338
      %v2341 = vmul.f32 %v534, %v2338
      %v2342 = vmul.f32 %v538, %v2338
      %v2343 = vmul.f32 %v542, %v2338
      %v2344 = vmul.f32 %v546, %v2338
      %v2345 = vmul.f32 %v550, %v2338
      %v2346 = vmul.f32 %v554, %v2338
      %v2347 = vmul.f32 %v558, %v2338
      %v2348 = vmul.f32 %v562, %v2338
      %v2349 = vmul.f32 %v566, %v2338
      %v2350 = vmul.f32 %v570, %v2338
      %v2351 = vmul.f32 %v574, %v2338
      %v2352 = vmul.f32 %v578, %v2338
      %v2353 = vmul.f32 %v582, %v2338
      %v2354 = vmul.f32 %v586, %v2338
      %v2355 = vmul.f32 %v590, %v2338
      %v2356 = vmul.f32 %v594, %v2338
      %v2357 = vmul.f32 %v598, %v2338
      %v2358 = vmul.f32 %v602, %v2338
      %v2359 = vmul.f32 %v606, %v2338
      %v2360 = vmul.f32 %v610, %v2338
      %v2361 = vmul.f32 %v614, %v2338
      %v2362 = vmul.f32 %v618, %v2338
      %v2363 = vmul.f32 %v1368, %v2338
      %v2364 = vmul.f32 %v1372, %v2338
      %v2365 = vmul.f32 %v2120, %v2338
      %v2366 = vmul.f32 %v2124, %v2338
      %v2395 = vrot.slane %v2339, 1
      %v2396 = vrot.slane %v2340, 1
      %v2397 = vsel %vm734, %v2395, %v2396
      %v2398 = vrot.slane %v2341, 1
      %v2399 = vrot.slane %v2342, 1
      %v2400 = vsel %vm734, %v2398, %v2399
      %v2401 = vrot.slane %v2343, 1
      %v2402 = vrot.slane %v2344, 1
      %v2403 = vsel %vm734, %v2401, %v2402
      %v2404 = vrot.slane %v2345, 1
      %v2405 = vrot.slane %v2346, 1
      %v2406 = vsel %vm734, %v2404, %v2405
      %v2407 = vrot.slane %v2347, 1
      %v2408 = vrot.slane %v2348, 1
      %v2409 = vsel %vm734, %v2407, %v2408
      %v2410 = vrot.slane %v2349, 1
      %v2411 = vrot.slane %v2350, 1
      %v2412 = vsel %vm734, %v2410, %v2411
      %v2413 = vrot.slane %v2351, 1
      %v2414 = vrot.slane %v2352, 1
      %v2415 = vsel %vm734, %v2413, %v2414
      %v2416 = vrot.slane %v2353, 1
      %v2417 = vrot.slane %v2354, 1
      %v2418 = vsel %vm734, %v2416, %v2417
      %v2419 = vrot.slane %v2355, 1
      %v2420 = vrot.slane %v2356, 1
      %v2421 = vsel %vm734, %v2419, %v2420
      %v2422 = vrot.slane %v2357, 1
      %v2423 = vrot.slane %v2358, 1
      %v2424 = vsel %vm734, %v2422, %v2423
      %v2425 = vrot.slane %v2359, 1
      %v2426 = vrot.slane %v2360, 1
      %v2427 = vsel %vm734, %v2425, %v2426
      %v2428 = vrot.slane %v2361, 1
      %v2429 = vrot.slane %v2362, 1
      %v2430 = vsel %vm734, %v2428, %v2429
      %v2431 = vrot.slane %v2363, 1
      %v2432 = vrot.slane %v2364, 1
      %v2433 = vsel %vm734, %v2431, %v2432
      %v2434 = vrot.slane %v2365, 1
      %v2435 = vrot.slane %v2366, 1
      %v2436 = vsel %vm734, %v2434, %v2435
      %v2465 = vadd.f32 %v2310, %v2397
      %v2466 = vadd.f32 %v2311, %v2396
      %v2467 = vadd.f32 %v2312, %v2400
      %v2468 = vadd.f32 %v2313, %v2399
      %v2469 = vadd.f32 %v2314, %v2403
      %v2470 = vadd.f32 %v2315, %v2402
      %v2471 = vadd.f32 %v2316, %v2406
      %v2472 = vadd.f32 %v2317, %v2405
      %v2473 = vadd.f32 %v2318, %v2409
      %v2474 = vadd.f32 %v2319, %v2408
      %v2475 = vadd.f32 %v2320, %v2412
      %v2476 = vadd.f32 %v2321, %v2411
      %v2477 = vadd.f32 %v2322, %v2415
      %v2478 = vadd.f32 %v2323, %v2414
      %v2479 = vadd.f32 %v2324, %v2418
      %v2480 = vadd.f32 %v2325, %v2417
      %v2481 = vadd.f32 %v2326, %v2421
      %v2482 = vadd.f32 %v2327, %v2420
      %v2483 = vadd.f32 %v2328, %v2424
      %v2484 = vadd.f32 %v2329, %v2423
      %v2485 = vadd.f32 %v2330, %v2427
      %v2486 = vadd.f32 %v2331, %v2426
      %v2487 = vadd.f32 %v2332, %v2430
      %v2488 = vadd.f32 %v2333, %v2429
      %v2489 = vadd.f32 %v2334, %v2433
      %v2490 = vadd.f32 %v2335, %v2432
      %v2491 = vadd.f32 %v2336, %v2436
      %v2492 = vadd.f32 %v2337, %v2435
      %v2493 = vperm.slane %v310, 0
      %v2494 = vmul.f32 %v334, %v2493
      %v2495 = vmul.f32 %v339, %v2493
      %v2496 = vmul.f32 %v344, %v2493
      %v2497 = vmul.f32 %v349, %v2493
      %v2498 = vmul.f32 %v354, %v2493
      %v2499 = vmul.f32 %v359, %v2493
      %v2500 = vmul.f32 %v364, %v2493
      %v2501 = vmul.f32 %v369, %v2493
      %v2502 = vmul.f32 %v374, %v2493
      %v2503 = vmul.f32 %v379, %v2493
      %v2504 = vmul.f32 %v384, %v2493
      %v2505 = vmul.f32 %v389, %v2493
      %v2506 = vmul.f32 %v394, %v2493
      %v2507 = vmul.f32 %v399, %v2493
      %v2508 = vmul.f32 %v404, %v2493
      %v2509 = vmul.f32 %v409, %v2493
      %v2510 = vmul.f32 %v414, %v2493
      %v2511 = vmul.f32 %v419, %v2493
      %v2512 = vmul.f32 %v424, %v2493
      %v2513 = vmul.f32 %v429, %v2493
      %v2514 = vmul.f32 %v434, %v2493
      %v2515 = vmul.f32 %v439, %v2493
      %v2516 = vmul.f32 %v444, %v2493
      %v2517 = vmul.f32 %v449, %v2493
      %v2518 = vmul.f32 %v1302, %v2493
      %v2519 = vmul.f32 %v1307, %v2493
      %v2520 = vmul.f32 %v2054, %v2493
      %v2521 = vmul.f32 %v2059, %v2493
      %v2550 = vrot.slane %v2494, 2
      %v2551 = vrot.slane %v2495, 2
      %v2552 = vsel %vm1045, %v2550, %v2551
      %v2553 = vrot.slane %v2496, 2
      %v2554 = vrot.slane %v2497, 2
      %v2555 = vsel %vm1045, %v2553, %v2554
      %v2556 = vrot.slane %v2498, 2
      %v2557 = vrot.slane %v2499, 2
      %v2558 = vsel %vm1045, %v2556, %v2557
      %v2559 = vrot.slane %v2500, 2
      %v2560 = vrot.slane %v2501, 2
      %v2561 = vsel %vm1045, %v2559, %v2560
      %v2562 = vrot.slane %v2502, 2
      %v2563 = vrot.slane %v2503, 2
      %v2564 = vsel %vm1045, %v2562, %v2563
      %v2565 = vrot.slane %v2504, 2
      %v2566 = vrot.slane %v2505, 2
      %v2567 = vsel %vm1045, %v2565, %v2566
      %v2568 = vrot.slane %v2506, 2
      %v2569 = vrot.slane %v2507, 2
      %v2570 = vsel %vm1045, %v2568, %v2569
      %v2571 = vrot.slane %v2508, 2
      %v2572 = vrot.slane %v2509, 2
      %v2573 = vsel %vm1045, %v2571, %v2572
      %v2574 = vrot.slane %v2510, 2
      %v2575 = vrot.slane %v2511, 2
      %v2576 = vsel %vm1045, %v2574, %v2575
      %v2577 = vrot.slane %v2512, 2
      %v2578 = vrot.slane %v2513, 2
      %v2579 = vsel %vm1045, %v2577, %v2578
      %v2580 = vrot.slane %v2514, 2
      %v2581 = vrot.slane %v2515, 2
      %v2582 = vsel %vm1045, %v2580, %v2581
      %v2583 = vrot.slane %v2516, 2
      %v2584 = vrot.slane %v2517, 2
      %v2585 = vsel %vm1045, %v2583, %v2584
      %v2586 = vrot.slane %v2518, 2
      %v2587 = vrot.slane %v2519, 2
      %v2588 = vsel %vm1045, %v2586, %v2587
      %v2589 = vrot.slane %v2520, 2
      %v2590 = vrot.slane %v2521, 2
      %v2591 = vsel %vm1045, %v2589, %v2590
      %v2620 = vadd.f32 %v2465, %v2552
      %v2621 = vadd.f32 %v2466, %v2551
      %v2622 = vadd.f32 %v2467, %v2555
      %v2623 = vadd.f32 %v2468, %v2554
      %v2624 = vadd.f32 %v2469, %v2558
      %v2625 = vadd.f32 %v2470, %v2557
      %v2626 = vadd.f32 %v2471, %v2561
      %v2627 = vadd.f32 %v2472, %v2560
      %v2628 = vadd.f32 %v2473, %v2564
      %v2629 = vadd.f32 %v2474, %v2563
      %v2630 = vadd.f32 %v2475, %v2567
      %v2631 = vadd.f32 %v2476, %v2566
      %v2632 = vadd.f32 %v2477, %v2570
      %v2633 = vadd.f32 %v2478, %v2569
      %v2634 = vadd.f32 %v2479, %v2573
      %v2635 = vadd.f32 %v2480, %v2572
      %v2636 = vadd.f32 %v2481, %v2576
      %v2637 = vadd.f32 %v2482, %v2575
      %v2638 = vadd.f32 %v2483, %v2579
      %v2639 = vadd.f32 %v2484, %v2578
      %v2640 = vadd.f32 %v2485, %v2582
      %v2641 = vadd.f32 %v2486, %v2581
      %v2642 = vadd.f32 %v2487, %v2585
      %v2643 = vadd.f32 %v2488, %v2584
      %v2644 = vadd.f32 %v2489, %v2588
      %v2645 = vadd.f32 %v2490, %v2587
      %v2646 = vadd.f32 %v2491, %v2591
      %v2647 = vadd.f32 %v2492, %v2590
      %v2648 = vperm.slane %v310, 1
      %v2649 = vmul.f32 %v526, %v2648
      %v2650 = vmul.f32 %v530, %v2648
      %v2651 = vmul.f32 %v534, %v2648
      %v2652 = vmul.f32 %v538, %v2648
      %v2653 = vmul.f32 %v542, %v2648
      %v2654 = vmul.f32 %v546, %v2648
      %v2655 = vmul.f32 %v550, %v2648
      %v2656 = vmul.f32 %v554, %v2648
      %v2657 = vmul.f32 %v558, %v2648
      %v2658 = vmul.f32 %v562, %v2648
      %v2659 = vmul.f32 %v566, %v2648
      %v2660 = vmul.f32 %v570, %v2648
      %v2661 = vmul.f32 %v574, %v2648
      %v2662 = vmul.f32 %v578, %v2648
      %v2663 = vmul.f32 %v582, %v2648
      %v2664 = vmul.f32 %v586, %v2648
      %v2665 = vmul.f32 %v590, %v2648
      %v2666 = vmul.f32 %v594, %v2648
      %v2667 = vmul.f32 %v598, %v2648
      %v2668 = vmul.f32 %v602, %v2648
      %v2669 = vmul.f32 %v606, %v2648
      %v2670 = vmul.f32 %v610, %v2648
      %v2671 = vmul.f32 %v614, %v2648
      %v2672 = vmul.f32 %v618, %v2648
      %v2673 = vmul.f32 %v1368, %v2648
      %v2674 = vmul.f32 %v1372, %v2648
      %v2675 = vmul.f32 %v2120, %v2648
      %v2676 = vmul.f32 %v2124, %v2648
      %v2705 = vrot.slane %v2649, 2
      %v2706 = vrot.slane %v2650, 2
      %v2707 = vsel %vm1045, %v2705, %v2706
      %v2708 = vrot.slane %v2651, 2
      %v2709 = vrot.slane %v2652, 2
      %v2710 = vsel %vm1045, %v2708, %v2709
      %v2711 = vrot.slane %v2653, 2
      %v2712 = vrot.slane %v2654, 2
      %v2713 = vsel %vm1045, %v2711, %v2712
      %v2714 = vrot.slane %v2655, 2
      %v2715 = vrot.slane %v2656, 2
      %v2716 = vsel %vm1045, %v2714, %v2715
      %v2717 = vrot.slane %v2657, 2
      %v2718 = vrot.slane %v2658, 2
      %v2719 = vsel %vm1045, %v2717, %v2718
      %v2720 = vrot.slane %v2659, 2
      %v2721 = vrot.slane %v2660, 2
      %v2722 = vsel %vm1045, %v2720, %v2721
      %v2723 = vrot.slane %v2661, 2
      %v2724 = vrot.slane %v2662, 2
      %v2725 = vsel %vm1045, %v2723, %v2724
      %v2726 = vrot.slane %v2663, 2
      %v2727 = vrot.slane %v2664, 2
      %v2728 = vsel %vm1045, %v2726, %v2727
      %v2729 = vrot.slane %v2665, 2
      %v2730 = vrot.slane %v2666, 2
      %v2731 = vsel %vm1045, %v2729, %v2730
      %v2732 = vrot.slane %v2667, 2
      %v2733 = vrot.slane %v2668, 2
      %v2734 = vsel %vm1045, %v2732, %v2733
      %v2735 = vrot.slane %v2669, 2
      %v2736 = vrot.slane %v2670, 2
      %v2737 = vsel %vm1045, %v2735, %v2736
      %v2738 = vrot.slane %v2671, 2
      %v2739 = vrot.slane %v2672, 2
      %v2740 = vsel %vm1045, %v2738, %v2739
      %v2741 = vrot.slane %v2673, 2
      %v2742 = vrot.slane %v2674, 2
      %v2743 = vsel %vm1045, %v2741, %v2742
      %v2744 = vrot.slane %v2675, 2
      %v2745 = vrot.slane %v2676, 2
      %v2746 = vsel %vm1045, %v2744, %v2745
      %v2775 = vadd.f32 %v2620, %v2707
      %v2776 = vadd.f32 %v2621, %v2706
      %v2777 = vadd.f32 %v2622, %v2710
      %v2778 = vadd.f32 %v2623, %v2709
      %v2779 = vadd.f32 %v2624, %v2713
      %v2780 = vadd.f32 %v2625, %v2712
      %v2781 = vadd.f32 %v2626, %v2716
      %v2782 = vadd.f32 %v2627, %v2715
      %v2783 = vadd.f32 %v2628, %v2719
      %v2784 = vadd.f32 %v2629, %v2718
      %v2785 = vadd.f32 %v2630, %v2722
      %v2786 = vadd.f32 %v2631, %v2721
      %v2787 = vadd.f32 %v2632, %v2725
      %v2788 = vadd.f32 %v2633, %v2724
      %v2789 = vadd.f32 %v2634, %v2728
      %v2790 = vadd.f32 %v2635, %v2727
      %v2791 = vadd.f32 %v2636, %v2731
      %v2792 = vadd.f32 %v2637, %v2730
      %v2793 = vadd.f32 %v2638, %v2734
      %v2794 = vadd.f32 %v2639, %v2733
      %v2795 = vadd.f32 %v2640, %v2737
      %v2796 = vadd.f32 %v2641, %v2736
      %v2797 = vadd.f32 %v2642, %v2740
      %v2798 = vadd.f32 %v2643, %v2739
      %v2799 = vadd.f32 %v2644, %v2743
      %v2800 = vadd.f32 %v2645, %v2742
      %v2801 = vadd.f32 %v2646, %v2746
      %v2802 = vadd.f32 %v2647, %v2745
      %v2803 = vld [vmem:[%s2] sm:$0x1]
      %v2805 = vperm.slane %v2803, 0
      %v2807 = vadd.f32 %v2775, %v2805
      %v2808 = vadd.f32 %v2776, %v2805
      %v2809 = vadd.f32 %v2777, %v2805
      %v2810 = vadd.f32 %v2778, %v2805
      %v2811 = vadd.f32 %v2779, %v2805
      %v2812 = vadd.f32 %v2780, %v2805
      %v2813 = vadd.f32 %v2781, %v2805
      %v2814 = vadd.f32 %v2782, %v2805
      %v2815 = vadd.f32 %v2783, %v2805
      %v2816 = vadd.f32 %v2784, %v2805
      %v2817 = vadd.f32 %v2785, %v2805
      %v2818 = vadd.f32 %v2786, %v2805
      %v2819 = vadd.f32 %v2787, %v2805
      %v2820 = vadd.f32 %v2788, %v2805
      %v2821 = vadd.f32 %v2789, %v2805
      %v2822 = vadd.f32 %v2790, %v2805
      %v2823 = vadd.f32 %v2791, %v2805
      %v2824 = vadd.f32 %v2792, %v2805
      %v2825 = vadd.f32 %v2793, %v2805
      %v2826 = vadd.f32 %v2794, %v2805
      %v2827 = vadd.f32 %v2795, %v2805
      %v2828 = vadd.f32 %v2796, %v2805
      %v2829 = vadd.f32 %v2797, %v2805
      %v2830 = vadd.f32 %v2798, %v2805
      %v2831 = vadd.f32 %v2799, %v2805
      %v2832 = vadd.f32 %v2800, %v2805
      %v2833 = vadd.f32 %v2801, %v2805
      %v2834 = vadd.f32 %v2802, %v2805
      %vm2835 = vcmp.ge.f32.partialorder %v2807, 0.0
      %vm2836 = vcmp.ge.f32.partialorder %v2808, 0.0
      %vm2837 = vcmp.ge.f32.partialorder %v2809, 0.0
      %vm2838 = vcmp.ge.f32.partialorder %v2810, 0.0
      %vm2839 = vcmp.ge.f32.partialorder %v2811, 0.0
      %vm2840 = vcmp.ge.f32.partialorder %v2812, 0.0
      %vm2841 = vcmp.ge.f32.partialorder %v2813, 0.0
      %vm2842 = vcmp.ge.f32.partialorder %v2814, 0.0
      %vm2843 = vcmp.ge.f32.partialorder %v2815, 0.0
      %vm2844 = vcmp.ge.f32.partialorder %v2816, 0.0
      %vm2845 = vcmp.ge.f32.partialorder %v2817, 0.0
      %vm2846 = vcmp.ge.f32.partialorder %v2818, 0.0
      %vm2847 = vcmp.ge.f32.partialorder %v2819, 0.0
      %vm2848 = vcmp.ge.f32.partialorder %v2820, 0.0
      %vm2849 = vcmp.ge.f32.partialorder %v2821, 0.0
      %vm2850 = vcmp.ge.f32.partialorder %v2822, 0.0
      %vm2851 = vcmp.ge.f32.partialorder %v2823, 0.0
      %vm2852 = vcmp.ge.f32.partialorder %v2824, 0.0
      %vm2853 = vcmp.ge.f32.partialorder %v2825, 0.0
      %vm2854 = vcmp.ge.f32.partialorder %v2826, 0.0
      %vm2855 = vcmp.ge.f32.partialorder %v2827, 0.0
      %vm2856 = vcmp.ge.f32.partialorder %v2828, 0.0
      %vm2857 = vcmp.ge.f32.partialorder %v2829, 0.0
      %vm2858 = vcmp.ge.f32.partialorder %v2830, 0.0
      %vm2859 = vcmp.ge.f32.partialorder %v2831, 0.0
      %vm2860 = vcmp.ge.f32.partialorder %v2832, 0.0
      %vm2861 = vcmp.ge.f32.partialorder %v2833, 0.0
      %vm2862 = vcmp.ge.f32.partialorder %v2834, 0.0
      %v2863 = vmul.f32 %v2807, 0.2
      %v2864 = vmul.f32 %v2808, 0.2
      %v2865 = vmul.f32 %v2809, 0.2
      %v2866 = vmul.f32 %v2810, 0.2
      %v2867 = vmul.f32 %v2811, 0.2
      %v2868 = vmul.f32 %v2812, 0.2
      %v2869 = vmul.f32 %v2813, 0.2
      %v2870 = vmul.f32 %v2814, 0.2
      %v2871 = vmul.f32 %v2815, 0.2
      %v2872 = vmul.f32 %v2816, 0.2
      %v2873 = vmul.f32 %v2817, 0.2
      %v2874 = vmul.f32 %v2818, 0.2
      %v2875 = vmul.f32 %v2819, 0.2
      %v2876 = vmul.f32 %v2820, 0.2
      %v2877 = vmul.f32 %v2821, 0.2
      %v2878 = vmul.f32 %v2822, 0.2
      %v2879 = vmul.f32 %v2823, 0.2
      %v2880 = vmul.f32 %v2824, 0.2
      %v2881 = vmul.f32 %v2825, 0.2
      %v2882 = vmul.f32 %v2826, 0.2
      %v2883 = vmul.f32 %v2827, 0.2
      %v2884 = vmul.f32 %v2828, 0.2
      %v2885 = vmul.f32 %v2829, 0.2
      %v2886 = vmul.f32 %v2830, 0.2
      %v2887 = vmul.f32 %v2831, 0.2
      %v2888 = vmul.f32 %v2832, 0.2
      %v2889 = vmul.f32 %v2833, 0.2
      %v2890 = vmul.f32 %v2834, 0.2
      %v2891 = vsel %vm2835, %v2807, %v2863
      %v2892 = vsel %vm2836, %v2808, %v2864
      %v2893 = vsel %vm2837, %v2809, %v2865
      %v2894 = vsel %vm2838, %v2810, %v2866
      %v2895 = vsel %vm2839, %v2811, %v2867
      %v2896 = vsel %vm2840, %v2812, %v2868
      %v2897 = vsel %vm2841, %v2813, %v2869
      %v2898 = vsel %vm2842, %v2814, %v2870
      %v2899 = vsel %vm2843, %v2815, %v2871
      %v2900 = vsel %vm2844, %v2816, %v2872
      %v2901 = vsel %vm2845, %v2817, %v2873
      %v2902 = vsel %vm2846, %v2818, %v2874
      %v2903 = vsel %vm2847, %v2819, %v2875
      %v2904 = vsel %vm2848, %v2820, %v2876
      %v2905 = vsel %vm2849, %v2821, %v2877
      %v2906 = vsel %vm2850, %v2822, %v2878
      %v2907 = vsel %vm2851, %v2823, %v2879
      %v2908 = vsel %vm2852, %v2824, %v2880
      %v2909 = vsel %vm2853, %v2825, %v2881
      %v2910 = vsel %vm2854, %v2826, %v2882
      %v2911 = vsel %vm2855, %v2827, %v2883
      %v2912 = vsel %vm2856, %v2828, %v2884
      %v2913 = vsel %vm2857, %v2829, %v2885
      %v2914 = vsel %vm2858, %v2830, %v2886
      %v2915 = vsel %vm2859, %v2831, %v2887
      %v2916 = vsel %vm2860, %v2832, %v2888
      %v2917 = vsel %vm2861, %v2833, %v2889
      %v2918 = vsel %vm2862, %v2834, %v2890
      %v2919 = vld [vmem:[%s3] sm:$0xf]
      %v2920 = vld [vmem:[%s3 + $0x4] sm:$0xf]
      %v2921 = vld [vmem:[%s3 + $0x8] sm:$0xf]
      %v2922 = vld [vmem:[%s3 + $0xc] sm:$0xf]
      %v2923 = vld [vmem:[%s3 + $0x10] sm:$0xf]
      %v2924 = vld [vmem:[%s3 + $0x14] sm:$0xf]
      %v2925 = vld [vmem:[%s3 + $0x18] sm:$0xf]
      %v2926 = vld [vmem:[%s3 + $0x1c] sm:$0xf]
      %v2927 = vld [vmem:[%s3 + $0x20] sm:$0xf]
      %v2928 = vld [vmem:[%s3 + $0x24] sm:$0xf]
      %v2929 = vld [vmem:[%s3 + $0x28] sm:$0xf]
      %v2930 = vld [vmem:[%s3 + $0x2c] sm:$0xf]
      %v2931 = vld [vmem:[%s3 + $0x30] sm:$0xf]
      %v2932 = vld [vmem:[%s3 + $0x34] sm:$0xf]
      %v2933 = vld [vmem:[%s3 + $0x38] sm:$0xf]
      %v2934 = vld [vmem:[%s3 + $0x3c] sm:$0xf]
      %v2935 = vld [vmem:[%s3 + $0x40] sm:$0xf]
      %v2936 = vld [vmem:[%s3 + $0x44] sm:$0xf]
      %v2937 = vld [vmem:[%s3 + $0x48] sm:$0xf]
      %v2938 = vld [vmem:[%s3 + $0x4c] sm:$0xf]
      %v2939 = vld [vmem:[%s3 + $0x50] sm:$0xf]
      %v2940 = vld [vmem:[%s3 + $0x54] sm:$0xf]
      %v2941 = vld [vmem:[%s3 + $0x58] sm:$0xf]
      %v2942 = vld [vmem:[%s3 + $0x5c] sm:$0xf]
      %v2943 = vld [vmem:[%s3 + $0x60] sm:$0xf]
      %v2944 = vld [vmem:[%s3 + $0x64] sm:$0xf]
      %v2945 = vld [vmem:[%s3 + $0x68] sm:$0xf]
      %v2946 = vld [vmem:[%s3 + $0x6c] sm:$0xf]
      %v2947 = vld [vmem:[%s3 + $0x70] sm:$0xf]
      %v2948 = vld [vmem:[%s3 + $0x74] sm:$0xf]
      %v2949 = vld [vmem:[%s3 + $0x78] sm:$0xf]
      %v2950 = vld [vmem:[%s3 + $0x7c] sm:$0xf]
      %v2951 = vld [vmem:[%s3 + $0x80] sm:$0xf]
      %v2952 = vld [vmem:[%s3 + $0x84] sm:$0xf]
      %v2953 = vld [vmem:[%s3 + $0x88] sm:$0xf]
      %v2954 = vld [vmem:[%s3 + $0x8c] sm:$0xf]
      %v2955 = vld [vmem:[%s3 + $0x90] sm:$0xf]
      %v2956 = vld [vmem:[%s3 + $0x94] sm:$0xf]
      %v2957 = vld [vmem:[%s3 + $0x98] sm:$0xf]
      %v2958 = vld [vmem:[%s3 + $0x9c] sm:$0xf]
      %v2959 = vld [vmem:[%s3 + $0xa0] sm:$0xf]
      %v2960 = vld [vmem:[%s3 + $0xa4] sm:$0xf]
      %v2961 = vld [vmem:[%s3 + $0xa8] sm:$0xf]
      %v2962 = vld [vmem:[%s3 + $0xac] sm:$0xf]
      %v2963 = vld [vmem:[%s3 + $0xb0] sm:$0xf]
      %v2964 = vld [vmem:[%s3 + $0xb4] sm:$0xf]
      %v2965 = vld [vmem:[%s3 + $0xb8] sm:$0xf]
      %v2966 = vld [vmem:[%s3 + $0xbc] sm:$0xf]
      %v2967 = vld [vmem:[%s3 + $0xc0] sm:$0xf]
      %v2968 = vld [vmem:[%s3 + $0xc4] sm:$0xf]
      %v2969 = vld [vmem:[%s3 + $0xc8] sm:$0xf]
      %v2970 = vld [vmem:[%s3 + $0xcc] sm:$0xf]
      %v2971 = vld [vmem:[%s3 + $0xd0] sm:$0xf]
      %v2972 = vld [vmem:[%s3 + $0xd4] sm:$0xf]
      %v2973 = vld [vmem:[%s3 + $0xd8] sm:$0xf]
      %v2974 = vld [vmem:[%s3 + $0xdc] sm:$0xf]
      %v2975 = vld [vmem:[%s3 + $0xe0] sm:$0xf]
      %v2976 = vld [vmem:[%s3 + $0xe4] sm:$0xf]
      %v2977 = vld [vmem:[%s3 + $0xe8] sm:$0xf]
      %v2978 = vld [vmem:[%s3 + $0xec] sm:$0xf]
      %v2979 = vld [vmem:[%s3 + $0xf0] sm:$0xf]
      %v2980 = vld [vmem:[%s3 + $0xf4] sm:$0xf]
      %v2981 = vld [vmem:[%s3 + $0xf8] sm:$0xf]
      %v2982 = vld [vmem:[%s3 + $0xfc] sm:$0xf]
      %v2983 = vld [vmem:[%s3 + $0x100] sm:$0xf]
      %v2984 = vld [vmem:[%s3 + $0x104] sm:$0xf]
      %v2985 = vld [vmem:[%s3 + $0x108] sm:$0xf]
      %v2986 = vld [vmem:[%s3 + $0x10c] sm:$0xf]
      %v2987 = vld [vmem:[%s3 + $0x110] sm:$0xf]
      %v2988 = vld [vmem:[%s3 + $0x114] sm:$0xf]
      %v2989 = vld [vmem:[%s3 + $0x118] sm:$0xf]
      %v2990 = vld [vmem:[%s3 + $0x11c] sm:$0xf]
      %v2991 = vpack.c.bf16 %v2891, %v2891
      %v2992 = vpack.c.bf16 %v2892, %v2892
      %v2993 = vpack.c.bf16 %v2893, %v2893
      %v2994 = vpack.c.bf16 %v2894, %v2894
      %v2995 = vpack.c.bf16 %v2895, %v2895
      %v2996 = vpack.c.bf16 %v2896, %v2896
      %v2997 = vpack.c.bf16 %v2897, %v2897
      %v2998 = vpack.c.bf16 %v2898, %v2898
      %v2999 = vpack.c.bf16 %v2899, %v2899
      %v3000 = vpack.c.bf16 %v2900, %v2900
      %v3001 = vpack.c.bf16 %v2901, %v2901
      %v3002 = vpack.c.bf16 %v2902, %v2902
      %v3003 = vpack.c.bf16 %v2903, %v2903
      %v3004 = vpack.c.bf16 %v2904, %v2904
      %v3005 = vpack.c.bf16 %v2905, %v2905
      %v3006 = vpack.c.bf16 %v2906, %v2906
      %v3007 = vpack.c.bf16 %v2907, %v2907
      %v3008 = vpack.c.bf16 %v2908, %v2908
      %v3009 = vpack.c.bf16 %v2909, %v2909
      %v3010 = vpack.c.bf16 %v2910, %v2910
      %v3011 = vpack.c.bf16 %v2911, %v2911
      %v3012 = vpack.c.bf16 %v2912, %v2912
      %v3013 = vpack.c.bf16 %v2913, %v2913
      %v3014 = vpack.c.bf16 %v2914, %v2914
      %v3015 = vpack.c.bf16 %v2915, %v2915
      %v3016 = vpack.c.bf16 %v2916, %v2916
      %v3017 = vpack.c.bf16 %v2917, %v2917
      %v3018 = vpack.c.bf16 %v2918, %v2918
      %v3043 = vunpack.c.l.b16 %v2991
      %v3044 = vunpack.c.l.b16 %v2992
      %v3045 = vunpack.c.l.b16 %v2993
      %v3046 = vunpack.c.l.b16 %v2994
      %v3047 = vunpack.c.l.b16 %v2995
      %v3048 = vunpack.c.l.b16 %v2996
      %v3049 = vunpack.c.l.b16 %v2997
      %v3050 = vunpack.c.l.b16 %v2998
      %v3051 = vunpack.c.l.b16 %v2999
      %v3052 = vunpack.c.l.b16 %v3000
      %v3053 = vunpack.c.l.b16 %v3001
      %v3054 = vunpack.c.l.b16 %v3002
      %v3055 = vunpack.c.l.b16 %v3003
      %v3056 = vunpack.c.l.b16 %v3004
      %v3057 = vunpack.c.l.b16 %v3005
      %v3058 = vunpack.c.l.b16 %v3006
      %v3059 = vunpack.c.l.b16 %v3007
      %v3060 = vunpack.c.l.b16 %v3008
      %v3061 = vunpack.c.l.b16 %v3009
      %v3062 = vunpack.c.l.b16 %v3010
      %v3063 = vunpack.c.l.b16 %v3011
      %v3064 = vunpack.c.l.b16 %v3012
      %v3065 = vunpack.c.l.b16 %v3013
      %v3066 = vunpack.c.l.b16 %v3014
      %v3067 = vpack.c.b16 %v3044, %v3043
      %v3068 = vpack.c.b16 %v3046, %v3045
      %v3069 = vpack.c.b16 %v3048, %v3047
      %v3070 = vpack.c.b16 %v3050, %v3049
      %v3071 = vpack.c.b16 %v3052, %v3051
      %v3072 = vpack.c.b16 %v3054, %v3053
      %v3073 = vpack.c.b16 %v3056, %v3055
      %v3074 = vpack.c.b16 %v3058, %v3057
      %v3075 = vpack.c.b16 %v3060, %v3059
      %v3076 = vpack.c.b16 %v3062, %v3061
      %v3077 = vpack.c.b16 %v3064, %v3063
      %v3078 = vpack.c.b16 %v3066, %v3065
      %v3080 = vshrl.u32 %v3067, 16
      %v3082 = vshll.u32 %v3067, 16
      %v3084 = vrot.slane %v3082, 1
      %v3085 = vor.u32 %v3080, %v3084
      %v3087 = vshrl.u32 %v3068, 16
      %v3089 = vshll.u32 %v3068, 16
      %v3091 = vrot.slane %v3089, 1
      %v3092 = vor.u32 %v3087, %v3091
      %v3094 = vshrl.u32 %v3069, 16
      %v3096 = vshll.u32 %v3069, 16
      %v3098 = vrot.slane %v3096, 1
      %v3099 = vor.u32 %v3094, %v3098
      %v3101 = vshrl.u32 %v3070, 16
      %v3103 = vshll.u32 %v3070, 16
      %v3105 = vrot.slane %v3103, 1
      %v3106 = vor.u32 %v3101, %v3105
      %v3108 = vshrl.u32 %v3071, 16
      %v3110 = vshll.u32 %v3071, 16
      %v3112 = vrot.slane %v3110, 1
      %v3113 = vor.u32 %v3108, %v3112
      %v3115 = vshrl.u32 %v3072, 16
      %v3117 = vshll.u32 %v3072, 16
      %v3119 = vrot.slane %v3117, 1
      %v3120 = vor.u32 %v3115, %v3119
      %v3122 = vshrl.u32 %v3073, 16
      %v3124 = vshll.u32 %v3073, 16
      %v3126 = vrot.slane %v3124, 1
      %v3127 = vor.u32 %v3122, %v3126
      %v3129 = vshrl.u32 %v3074, 16
      %v3131 = vshll.u32 %v3074, 16
      %v3133 = vrot.slane %v3131, 1
      %v3134 = vor.u32 %v3129, %v3133
      %v3136 = vshrl.u32 %v3075, 16
      %v3138 = vshll.u32 %v3075, 16
      %v3140 = vrot.slane %v3138, 1
      %v3141 = vor.u32 %v3136, %v3140
      %v3143 = vshrl.u32 %v3076, 16
      %v3145 = vshll.u32 %v3076, 16
      %v3147 = vrot.slane %v3145, 1
      %v3148 = vor.u32 %v3143, %v3147
      %v3150 = vshrl.u32 %v3077, 16
      %v3152 = vshll.u32 %v3077, 16
      %v3154 = vrot.slane %v3152, 1
      %v3155 = vor.u32 %v3150, %v3154
      %v3157 = vshrl.u32 %v3078, 16
      %v3159 = vshll.u32 %v3078, 16
      %v3161 = vrot.slane %v3159, 1
      %v3162 = vor.u32 %v3157, %v3161
      %3163 = vrot.lane.b32.xlu0 %v3085, 64
      %v3164 = vpop.permute.xlu0 %3163
      %3165 = vrot.lane.b32.xlu0 %v3092, 64
      %v3166 = vpop.permute.xlu0 %3165
      %3167 = vrot.lane.b32.xlu0 %v3099, 64
      %v3168 = vpop.permute.xlu0 %3167
      %3169 = vrot.lane.b32.xlu0 %v3106, 64
      %v3170 = vpop.permute.xlu0 %3169
      %3171 = vrot.lane.b32.xlu0 %v3113, 64
      %v3172 = vpop.permute.xlu0 %3171
      %3173 = vrot.lane.b32.xlu0 %v3120, 64
      %v3174 = vpop.permute.xlu0 %3173
      %3175 = vrot.lane.b32.xlu0 %v3127, 64
      %v3176 = vpop.permute.xlu0 %3175
      %3177 = vrot.lane.b32.xlu0 %v3134, 64
      %v3178 = vpop.permute.xlu0 %3177
      %3179 = vrot.lane.b32.xlu0 %v3141, 64
      %v3180 = vpop.permute.xlu0 %3179
      %3181 = vrot.lane.b32.xlu0 %v3148, 64
      %v3182 = vpop.permute.xlu0 %3181
      %3183 = vrot.lane.b32.xlu0 %v3155, 64
      %v3184 = vpop.permute.xlu0 %3183
      %3185 = vrot.lane.b32.xlu0 %v3162, 64
      %v3186 = vpop.permute.xlu0 %3185
      %v3187 = vrot.slane %v3067, 1
      %v3188 = vrot.slane %v3068, 1
      %v3189 = vrot.slane %v3069, 1
      %v3190 = vrot.slane %v3070, 1
      %v3191 = vrot.slane %v3071, 1
      %v3192 = vrot.slane %v3072, 1
      %v3193 = vrot.slane %v3073, 1
      %v3194 = vrot.slane %v3074, 1
      %v3195 = vrot.slane %v3075, 1
      %v3196 = vrot.slane %v3076, 1
      %v3197 = vrot.slane %v3077, 1
      %v3198 = vrot.slane %v3078, 1
      %v3201 = vunpack.c.l.b16 %v3015
      %v3202 = vunpack.c.l.b16 %v3016
      %v3203 = vpack.c.b16 %v3202, %v3201
      %3204 = vrot.lane.b32.xlu0 %v3068, 64
      %v3205 = vpop.permute.xlu0 %3204
      %3206 = vrot.lane.b32.xlu0 %v3069, 64
      %v3207 = vpop.permute.xlu0 %3206
      %3208 = vrot.lane.b32.xlu0 %v3070, 64
      %v3209 = vpop.permute.xlu0 %3208
      %3210 = vrot.lane.b32.xlu0 %v3071, 64
      %v3211 = vpop.permute.xlu0 %3210
      %3212 = vrot.lane.b32.xlu0 %v3072, 64
      %v3213 = vpop.permute.xlu0 %3212
      %3214 = vrot.lane.b32.xlu0 %v3073, 64
      %v3215 = vpop.permute.xlu0 %3214
      %3216 = vrot.lane.b32.xlu0 %v3074, 64
      %v3217 = vpop.permute.xlu0 %3216
      %3218 = vrot.lane.b32.xlu0 %v3075, 64
      %v3219 = vpop.permute.xlu0 %3218
      %3220 = vrot.lane.b32.xlu0 %v3076, 64
      %v3221 = vpop.permute.xlu0 %3220
      %3222 = vrot.lane.b32.xlu0 %v3077, 64
      %v3223 = vpop.permute.xlu0 %3222
      %3224 = vrot.lane.b32.xlu0 %v3078, 64
      %v3225 = vpop.permute.xlu0 %3224
      %3226 = vrot.lane.b32.xlu0 %v3203, 64
      %v3227 = vpop.permute.xlu0 %3226
      %v3229 = vshrl.u32 %v3203, 16
      %v3231 = vshll.u32 %v3203, 16
      %v3233 = vrot.slane %v3231, 1
      %v3234 = vor.u32 %v3229, %v3233
      %v3235 = vrot.slane %v3203, 1
      %3236 = vrot.lane.b32.xlu0 %v3188, 64
      %v3237 = vpop.permute.xlu0 %3236
      %3238 = vrot.lane.b32.xlu0 %v3189, 64
      %v3239 = vpop.permute.xlu0 %3238
      %3240 = vrot.lane.b32.xlu0 %v3190, 64
      %v3241 = vpop.permute.xlu0 %3240
      %3242 = vrot.lane.b32.xlu0 %v3191, 64
      %v3243 = vpop.permute.xlu0 %3242
      %3244 = vrot.lane.b32.xlu0 %v3192, 64
      %v3245 = vpop.permute.xlu0 %3244
      %3246 = vrot.lane.b32.xlu0 %v3193, 64
      %v3247 = vpop.permute.xlu0 %3246
      %3248 = vrot.lane.b32.xlu0 %v3194, 64
      %v3249 = vpop.permute.xlu0 %3248
      %3250 = vrot.lane.b32.xlu0 %v3195, 64
      %v3251 = vpop.permute.xlu0 %3250
      %3252 = vrot.lane.b32.xlu0 %v3196, 64
      %v3253 = vpop.permute.xlu0 %3252
      %3254 = vrot.lane.b32.xlu0 %v3197, 64
      %v3255 = vpop.permute.xlu0 %3254
      %3256 = vrot.lane.b32.xlu0 %v3198, 64
      %v3257 = vpop.permute.xlu0 %3256
      %3258 = vrot.lane.b32.xlu0 %v3235, 64
      %v3259 = vpop.permute.xlu0 %3258
      %v3262 = vunpack.c.l.b16 %v3017
      %v3263 = vunpack.c.l.b16 %v3018
      %v3264 = vpack.c.b16 %v3263, %v3262
      %v3266 = vshrl.u32 %v3264, 16
      %v3268 = vshll.u32 %v3264, 16
      %v3270 = vrot.slane %v3268, 1
      %v3271 = vor.u32 %v3266, %v3270
      %3272 = vrot.lane.b32.xlu0 %v3234, 64
      %v3273 = vpop.permute.xlu0 %3272
      %3274 = vrot.lane.b32.xlu0 %v3271, 64
      %v3275 = vpop.permute.xlu0 %3274
      %v3276 = vrot.slane %v3264, 1
      %vm3277 = vcmask 523264
      %v3279 = vsel %vm3277, %v3067, %v3164
      %v3281 = vsel %vm3277, %v3068, %v3166
      %v3283 = vsel %vm3277, %v3069, %v3168
      %v3285 = vsel %vm3277, %v3070, %v3170
      %v3287 = vsel %vm3277, %v3071, %v3172
      %v3289 = vsel %vm3277, %v3072, %v3174
      %v3291 = vsel %vm3277, %v3073, %v3176
      %v3293 = vsel %vm3277, %v3074, %v3178
      %v3295 = vsel %vm3277, %v3075, %v3180
      %v3297 = vsel %vm3277, %v3076, %v3182
      %v3299 = vsel %vm3277, %v3077, %v3184
      %v3301 = vsel %vm3277, %v3078, %v3186
      %v3304 = vsel %vm3277, %v3187, %v3205
      %v3307 = vsel %vm3277, %v3188, %v3207
      %v3310 = vsel %vm3277, %v3189, %v3209
      %v3313 = vsel %vm3277, %v3190, %v3211
      %v3316 = vsel %vm3277, %v3191, %v3213
      %v3319 = vsel %vm3277, %v3192, %v3215
      %v3322 = vsel %vm3277, %v3193, %v3217
      %v3325 = vsel %vm3277, %v3194, %v3219
      %v3328 = vsel %vm3277, %v3195, %v3221
      %v3331 = vsel %vm3277, %v3196, %v3223
      %v3334 = vsel %vm3277, %v3197, %v3225
      %v3337 = vsel %vm3277, %v3198, %v3227
      %v3340 = vsel %vm3277, %v3092, %v3237
      %v3343 = vsel %vm3277, %v3099, %v3239
      %v3346 = vsel %vm3277, %v3106, %v3241
      %v3349 = vsel %vm3277, %v3113, %v3243
      %v3352 = vsel %vm3277, %v3120, %v3245
      %v3355 = vsel %vm3277, %v3127, %v3247
      %v3358 = vsel %vm3277, %v3134, %v3249
      %v3361 = vsel %vm3277, %v3141, %v3251
      %v3364 = vsel %vm3277, %v3148, %v3253
      %v3367 = vsel %vm3277, %v3155, %v3255
      %v3370 = vsel %vm3277, %v3162, %v3257
      %v3373 = vsel %vm3277, %v3234, %v3259
      %v3375 = vsel %vm3277, %v3203, %v3273
      %v3377 = vsel %vm3277, %v3264, %v3275
      %v3414 = vrot.slane %v3304, 6
      %v3415 = vrot.slane %v3340, 4
      %v3416 = vrot.slane %v3283, 2
      %v3417 = vrot.slane %v3307, 6
      %v3418 = vrot.slane %v3343, 4
      %v3419 = vrot.slane %v3285, 2
      %v3420 = vrot.slane %v3310, 6
      %v3421 = vrot.slane %v3346, 4
      %v3422 = vrot.slane %v3287, 2
      %v3423 = vrot.slane %v3313, 6
      %v3424 = vrot.slane %v3349, 4
      %v3425 = vrot.slane %v3289, 2
      %v3426 = vrot.slane %v3316, 6
      %v3427 = vrot.slane %v3352, 4
      %v3428 = vrot.slane %v3291, 2
      %v3429 = vrot.slane %v3319, 6
      %v3430 = vrot.slane %v3355, 4
      %v3431 = vrot.slane %v3293, 2
      %v3432 = vrot.slane %v3322, 6
      %v3433 = vrot.slane %v3358, 4
      %v3434 = vrot.slane %v3295, 2
      %v3435 = vrot.slane %v3325, 6
      %v3436 = vrot.slane %v3361, 4
      %v3437 = vrot.slane %v3297, 2
      %v3438 = vrot.slane %v3328, 6
      %v3439 = vrot.slane %v3364, 4
      %v3440 = vrot.slane %v3299, 2
      %v3441 = vrot.slane %v3331, 6
      %v3442 = vrot.slane %v3367, 4
      %v3443 = vrot.slane %v3301, 2
      %v3444 = vrot.slane %v3334, 6
      %v3445 = vrot.slane %v3370, 4
      %v3446 = vrot.slane %v3375, 2
      %v3447 = vrot.slane %v3337, 6
      %v3448 = vrot.slane %v3373, 4
      %v3449 = vrot.slane %v3377, 2
      %vm3450 = vcmask 1041408
      %v3452 = vsel %vm3450, %v3279, %v3414
      %vm3453 = vcmask 1045508
      %v3456 = vsel %vm3453, %v3415, %v3416
      %vm3457 = vcmask 1043456
      %v3458 = vsel %vm3457, %v3452, %v3456
      %vm3459 = vcmask 1043458
      %v3460 = vsel %vm3459, %v3279, %v3414
      %v3461 = vsel %vm1045, %v3416, %v3415
      %vm3462 = vcmask 1045506
      %v3463 = vsel %vm3462, %v3460, %v3461
      %v3465 = vrot.slane %v3463, 2
      %v3466 = vrot.slane %v3189, 2
      %v3467 = vsel %vm3453, %v3279, %v3414
      %v3468 = vsel %vm3450, %v3415, %v3416
      %v3469 = vsel %vm3457, %v3468, %v3467
      %v3471 = vrot.slane %v3469, 4
      %v3472 = vrot.slane %v3189, 4
      %v3474 = vsel %vm3450, %v3281, %v3417
      %v3477 = vsel %vm3453, %v3418, %v3419
      %v3478 = vsel %vm3457, %v3474, %v3477
      %v3479 = vsel %vm3459, %v3281, %v3417
      %v3480 = vsel %vm1045, %v3419, %v3418
      %v3481 = vsel %vm3462, %v3479, %v3480
      %v3483 = vrot.slane %v3481, 2
      %v3484 = vrot.slane %v3190, 2
      %v3485 = vsel %vm3453, %v3281, %v3417
      %v3486 = vsel %vm3450, %v3418, %v3419
      %v3487 = vsel %vm3457, %v3486, %v3485
      %v3489 = vrot.slane %v3487, 4
      %v3490 = vrot.slane %v3190, 4
      %v3492 = vsel %vm3450, %v3283, %v3420
      %v3495 = vsel %vm3453, %v3421, %v3422
      %v3496 = vsel %vm3457, %v3492, %v3495
      %v3497 = vsel %vm3459, %v3283, %v3420
      %v3498 = vsel %vm1045, %v3422, %v3421
      %v3499 = vsel %vm3462, %v3497, %v3498
      %v3501 = vrot.slane %v3499, 2
      %v3502 = vrot.slane %v3191, 2
      %v3503 = vsel %vm3453, %v3283, %v3420
      %v3504 = vsel %vm3450, %v3421, %v3422
      %v3505 = vsel %vm3457, %v3504, %v3503
      %v3507 = vrot.slane %v3505, 4
      %v3508 = vrot.slane %v3191, 4
      %v3510 = vsel %vm3450, %v3285, %v3423
      %v3513 = vsel %vm3453, %v3424, %v3425
      %v3514 = vsel %vm3457, %v3510, %v3513
      %v3515 = vsel %vm3459, %v3285, %v3423
      %v3516 = vsel %vm1045, %v3425, %v3424
      %v3517 = vsel %vm3462, %v3515, %v3516
      %v3519 = vrot.slane %v3517, 2
      %v3520 = vrot.slane %v3192, 2
      %v3521 = vsel %vm3453, %v3285, %v3423
      %v3522 = vsel %vm3450, %v3424, %v3425
      %v3523 = vsel %vm3457, %v3522, %v3521
      %v3525 = vrot.slane %v3523, 4
      %v3526 = vrot.slane %v3192, 4
      %v3528 = vsel %vm3450, %v3287, %v3426
      %v3531 = vsel %vm3453, %v3427, %v3428
      %v3532 = vsel %vm3457, %v3528, %v3531
      %v3533 = vsel %vm3459, %v3287, %v3426
      %v3534 = vsel %vm1045, %v3428, %v3427
      %v3535 = vsel %vm3462, %v3533, %v3534
      %v3537 = vrot.slane %v3535, 2
      %v3538 = vrot.slane %v3193, 2
      %v3539 = vsel %vm3453, %v3287, %v3426
      %v3540 = vsel %vm3450, %v3427, %v3428
      %v3541 = vsel %vm3457, %v3540, %v3539
      %v3543 = vrot.slane %v3541, 4
      %v3544 = vrot.slane %v3193, 4
      %v3546 = vsel %vm3450, %v3289, %v3429
      %v3549 = vsel %vm3453, %v3430, %v3431
      %v3550 = vsel %vm3457, %v3546, %v3549
      %v3551 = vsel %vm3459, %v3289, %v3429
      %v3552 = vsel %vm1045, %v3431, %v3430
      %v3553 = vsel %vm3462, %v3551, %v3552
      %v3555 = vrot.slane %v3553, 2
      %v3556 = vrot.slane %v3194, 2
      %v3557 = vsel %vm3453, %v3289, %v3429
      %v3558 = vsel %vm3450, %v3430, %v3431
      %v3559 = vsel %vm3457, %v3558, %v3557
      %v3561 = vrot.slane %v3559, 4
      %v3562 = vrot.slane %v3194, 4
      %v3564 = vsel %vm3450, %v3291, %v3432
      %v3567 = vsel %vm3453, %v3433, %v3434
      %v3568 = vsel %vm3457, %v3564, %v3567
      %v3569 = vsel %vm3459, %v3291, %v3432
      %v3570 = vsel %vm1045, %v3434, %v3433
      %v3571 = vsel %vm3462, %v3569, %v3570
      %v3573 = vrot.slane %v3571, 2
      %v3574 = vrot.slane %v3195, 2
      %v3575 = vsel %vm3453, %v3291, %v3432
      %v3576 = vsel %vm3450, %v3433, %v3434
      %v3577 = vsel %vm3457, %v3576, %v3575
      %v3579 = vrot.slane %v3577, 4
      %v3580 = vrot.slane %v3195, 4
      %v3582 = vsel %vm3450, %v3293, %v3435
      %v3585 = vsel %vm3453, %v3436, %v3437
      %v3586 = vsel %vm3457, %v3582, %v3585
      %v3587 = vsel %vm3459, %v3293, %v3435
      %v3588 = vsel %vm1045, %v3437, %v3436
      %v3589 = vsel %vm3462, %v3587, %v3588
      %v3591 = vrot.slane %v3589, 2
      %v3592 = vrot.slane %v3196, 2
      %v3593 = vsel %vm3453, %v3293, %v3435
      %v3594 = vsel %vm3450, %v3436, %v3437
      %v3595 = vsel %vm3457, %v3594, %v3593
      %v3597 = vrot.slane %v3595, 4
      %v3598 = vrot.slane %v3196, 4
      %v3600 = vsel %vm3450, %v3295, %v3438
      %v3603 = vsel %vm3453, %v3439, %v3440
      %v3604 = vsel %vm3457, %v3600, %v3603
      %v3605 = vsel %vm3459, %v3295, %v3438
      %v3606 = vsel %vm1045, %v3440, %v3439
      %v3607 = vsel %vm3462, %v3605, %v3606
      %v3609 = vrot.slane %v3607, 2
      %v3610 = vrot.slane %v3197, 2
      %v3611 = vsel %vm3453, %v3295, %v3438
      %v3612 = vsel %vm3450, %v3439, %v3440
      %v3613 = vsel %vm3457, %v3612, %v3611
      %v3615 = vrot.slane %v3613, 4
      %v3616 = vrot.slane %v3197, 4
      %v3618 = vsel %vm3450, %v3297, %v3441
      %v3621 = vsel %vm3453, %v3442, %v3443
      %v3622 = vsel %vm3457, %v3618, %v3621
      %v3623 = vsel %vm3459, %v3297, %v3441
      %v3624 = vsel %vm1045, %v3443, %v3442
      %v3625 = vsel %vm3462, %v3623, %v3624
      %v3627 = vrot.slane %v3625, 2
      %v3628 = vrot.slane %v3198, 2
      %v3629 = vsel %vm3453, %v3297, %v3441
      %v3630 = vsel %vm3450, %v3442, %v3443
      %v3631 = vsel %vm3457, %v3630, %v3629
      %v3633 = vrot.slane %v3631, 4
      %v3634 = vrot.slane %v3198, 4
      %v3636 = vsel %vm3450, %v3299, %v3444
      %v3639 = vsel %vm3453, %v3445, %v3446
      %v3640 = vsel %vm3457, %v3636, %v3639
      %v3641 = vsel %vm3459, %v3299, %v3444
      %v3642 = vsel %vm1045, %v3446, %v3445
      %v3643 = vsel %vm3462, %v3641, %v3642
      %v3645 = vrot.slane %v3643, 2
      %v3646 = vrot.slane %v3235, 2
      %v3647 = vsel %vm3453, %v3299, %v3444
      %v3648 = vsel %vm3450, %v3445, %v3446
      %v3649 = vsel %vm3457, %v3648, %v3647
      %v3651 = vrot.slane %v3649, 4
      %v3652 = vrot.slane %v3235, 4
      %v3654 = vsel %vm3450, %v3301, %v3447
      %v3657 = vsel %vm3453, %v3448, %v3449
      %v3658 = vsel %vm3457, %v3654, %v3657
      %v3659 = vsel %vm3459, %v3301, %v3447
      %v3660 = vsel %vm1045, %v3449, %v3448
      %v3661 = vsel %vm3462, %v3659, %v3660
      %v3663 = vrot.slane %v3661, 2
      %v3664 = vrot.slane %v3276, 2
      %v3665 = vsel %vm3453, %v3301, %v3447
      %v3666 = vsel %vm3450, %v3448, %v3449
      %v3667 = vsel %vm3457, %v3666, %v3665
      %v3669 = vrot.slane %v3667, 4
      %v3670 = vrot.slane %v3276, 4
      %3671 = vst [vmem:[#allocation1] ss:$4 sm:$0xff] %v3458
      %s3673 = scalar_lea.vmem [#allocation1], 1
      %3674 = vst [vmem:[%s3673] ss:$4 sm:$0xff] %v3465
      %s3676 = scalar_lea.vmem [#allocation1], 2
      %3677 = vst [vmem:[%s3676] ss:$4 sm:$0xff] %v3471
      %s3678 = scalar_lea.vmem [#allocation1], 3
      %3679 = vst [vmem:[%s3678] ss:$4 sm:$0xff] %v3478
      %s3680 = scalar_lea.vmem [#allocation1], 32
      %3681 = vst [vmem:[%s3680] ss:$4 sm:$0xff] %v3189
      %s3683 = scalar_lea.vmem [#allocation1], 33
      %3684 = vst [vmem:[%s3683] ss:$4 sm:$0xff] %v3466
      %s3686 = scalar_lea.vmem [#allocation1], 34
      %3687 = vst [vmem:[%s3686] ss:$4 sm:$0xff] %v3472
      %s3688 = scalar_lea.vmem [#allocation1], 35
      %3689 = vst [vmem:[%s3688] ss:$4 sm:$0xff] %v3190
      %v3690 = vld.sshfl [vmem:[#allocation1] sm:$0xff pattern:$0x73625140]
      %v3691 = vld.sshfl [vmem:[#allocation1 + $0x8] sm:$0xff pattern:$0x73625140]
      %v3692 = vld.sshfl [vmem:[#allocation1 + $0x10] sm:$0xff pattern:$0x73625140]
      %v3693 = vld.sshfl [vmem:[#allocation1 + $0x18] sm:$0xff pattern:$0x73625140]
      %v3694 = vld.sshfl [vmem:[#allocation1 + $0x20] sm:$0xff pattern:$0x73625140]
      %3696 = vst [vmem:[#allocation1] ss:$4 sm:$0xff] %v3483
      %3698 = vst [vmem:[%s3673] ss:$4 sm:$0xff] %v3489
      %3699 = vst [vmem:[%s3676] ss:$4 sm:$0xff] %v3496
      %3701 = vst [vmem:[%s3678] ss:$4 sm:$0xff] %v3501
      %3703 = vst [vmem:[%s3680] ss:$4 sm:$0xff] %v3484
      %3705 = vst [vmem:[%s3683] ss:$4 sm:$0xff] %v3490
      %3706 = vst [vmem:[%s3686] ss:$4 sm:$0xff] %v3191
      %3708 = vst [vmem:[%s3688] ss:$4 sm:$0xff] %v3502
      %v3709 = vld.sshfl [vmem:[#allocation1] sm:$0xff pattern:$0x73625140]
      %v3710 = vld.sshfl [vmem:[#allocation1 + $0x8] sm:$0xff pattern:$0x73625140]
      %v3711 = vld.sshfl [vmem:[#allocation1 + $0x10] sm:$0xff pattern:$0x73625140]
      %v3712 = vld.sshfl [vmem:[#allocation1 + $0x18] sm:$0xff pattern:$0x73625140]
      %v3713 = vld.sshfl [vmem:[#allocation1 + $0x20] sm:$0xff pattern:$0x73625140]
      %3715 = vst [vmem:[#allocation1] ss:$4 sm:$0xff] %v3507
      %3716 = vst [vmem:[%s3673] ss:$4 sm:$0xff] %v3514
      %3718 = vst [vmem:[%s3676] ss:$4 sm:$0xff] %v3519
      %3720 = vst [vmem:[%s3678] ss:$4 sm:$0xff] %v3525
      %3722 = vst [vmem:[%s3680] ss:$4 sm:$0xff] %v3508
      %3723 = vst [vmem:[%s3683] ss:$4 sm:$0xff] %v3192
      %3725 = vst [vmem:[%s3686] ss:$4 sm:$0xff] %v3520
      %3727 = vst [vmem:[%s3688] ss:$4 sm:$0xff] %v3526
      %v3728 = vld.sshfl [vmem:[#allocation1] sm:$0xff pattern:$0x73625140]
      %v3729 = vld.sshfl [vmem:[#allocation1 + $0x8] sm:$0xff pattern:$0x73625140]
      %v3730 = vld.sshfl [vmem:[#allocation1 + $0x10] sm:$0xff pattern:$0x73625140]
      %v3731 = vld.sshfl [vmem:[#allocation1 + $0x18] sm:$0xff pattern:$0x73625140]
      %v3732 = vld.sshfl [vmem:[#allocation1 + $0x20] sm:$0xff pattern:$0x73625140]
      %3733 = vst [vmem:[#allocation1] ss:$4 sm:$0xff] %v3532
      %3735 = vst [vmem:[%s3673] ss:$4 sm:$0xff] %v3537
      %3737 = vst [vmem:[%s3676] ss:$4 sm:$0xff] %v3543
      %3738 = vst [vmem:[%s3678] ss:$4 sm:$0xff] %v3550
      %3739 = vst [vmem:[%s3680] ss:$4 sm:$0xff] %v3193
      %3741 = vst [vmem:[%s3683] ss:$4 sm:$0xff] %v3538
      %3743 = vst [vmem:[%s3686] ss:$4 sm:$0xff] %v3544
      %3744 = vst [vmem:[%s3688] ss:$4 sm:$0xff] %v3194
      %v3745 = vld.sshfl [vmem:[#allocation1] sm:$0xff pattern:$0x73625140]
      %v3746 = vld.sshfl [vmem:[#allocation1 + $0x8] sm:$0xff pattern:$0x73625140]
      %v3747 = vld.sshfl [vmem:[#allocation1 + $0x10] sm:$0xff pattern:$0x73625140]
      %v3748 = vld.sshfl [vmem:[#allocation1 + $0x18] sm:$0xff pattern:$0x73625140]
      %v3749 = vld.sshfl [vmem:[#allocation1 + $0x20] sm:$0xff pattern:$0x73625140]
      %3751 = vst [vmem:[#allocation1] ss:$4 sm:$0xff] %v3555
      %3753 = vst [vmem:[%s3673] ss:$4 sm:$0xff] %v3561
      %3754 = vst [vmem:[%s3676] ss:$4 sm:$0xff] %v3568
      %3756 = vst [vmem:[%s3678] ss:$4 sm:$0xff] %v3573
      %3758 = vst [vmem:[%s3680] ss:$4 sm:$0xff] %v3556
      %3760 = vst [vmem:[%s3683] ss:$4 sm:$0xff] %v3562
      %3761 = vst [vmem:[%s3686] ss:$4 sm:$0xff] %v3195
      %3763 = vst [vmem:[%s3688] ss:$4 sm:$0xff] %v3574
      %v3764 = vld.sshfl [vmem:[#allocation1] sm:$0xff pattern:$0x73625140]
      %v3765 = vld.sshfl [vmem:[#allocation1 + $0x8] sm:$0xff pattern:$0x73625140]
      %v3766 = vld.sshfl [vmem:[#allocation1 + $0x10] sm:$0xff pattern:$0x73625140]
      %v3767 = vld.sshfl [vmem:[#allocation1 + $0x18] sm:$0xff pattern:$0x73625140]
      %v3768 = vld.sshfl [vmem:[#allocation1 + $0x20] sm:$0xff pattern:$0x73625140]
      %3770 = vst [vmem:[#allocation1] ss:$4 sm:$0xff] %v3579
      %3771 = vst [vmem:[%s3673] ss:$4 sm:$0xff] %v3586
      %3773 = vst [vmem:[%s3676] ss:$4 sm:$0xff] %v3591
      %3775 = vst [vmem:[%s3678] ss:$4 sm:$0xff] %v3597
      %3777 = vst [vmem:[%s3680] ss:$4 sm:$0xff] %v3580
      %3778 = vst [vmem:[%s3683] ss:$4 sm:$0xff] %v3196
      %3780 = vst [vmem:[%s3686] ss:$4 sm:$0xff] %v3592
      %3782 = vst [vmem:[%s3688] ss:$4 sm:$0xff] %v3598
      %v3783 = vld.sshfl [vmem:[#allocation1] sm:$0xff pattern:$0x73625140]
      %v3784 = vld.sshfl [vmem:[#allocation1 + $0x8] sm:$0xff pattern:$0x73625140]
      %v3785 = vld.sshfl [vmem:[#allocation1 + $0x10] sm:$0xff pattern:$0x73625140]
      %v3786 = vld.sshfl [vmem:[#allocation1 + $0x18] sm:$0xff pattern:$0x73625140]
      %v3787 = vld.sshfl [vmem:[#allocation1 + $0x20] sm:$0xff pattern:$0x73625140]
      %3788 = vst [vmem:[#allocation1] ss:$4 sm:$0xff] %v3604
      %3790 = vst [vmem:[%s3673] ss:$4 sm:$0xff] %v3609
      %3792 = vst [vmem:[%s3676] ss:$4 sm:$0xff] %v3615
      %3793 = vst [vmem:[%s3678] ss:$4 sm:$0xff] %v3622
      %3794 = vst [vmem:[%s3680] ss:$4 sm:$0xff] %v3197
      %3796 = vst [vmem:[%s3683] ss:$4 sm:$0xff] %v3610
      %3798 = vst [vmem:[%s3686] ss:$4 sm:$0xff] %v3616
      %3799 = vst [vmem:[%s3688] ss:$4 sm:$0xff] %v3198
      %v3800 = vld.sshfl [vmem:[#allocation1] sm:$0xff pattern:$0x73625140]
      %v3801 = vld.sshfl [vmem:[#allocation1 + $0x8] sm:$0xff pattern:$0x73625140]
      %v3802 = vld.sshfl [vmem:[#allocation1 + $0x10] sm:$0xff pattern:$0x73625140]
      %v3803 = vld.sshfl [vmem:[#allocation1 + $0x18] sm:$0xff pattern:$0x73625140]
      %v3804 = vld.sshfl [vmem:[#allocation1 + $0x20] sm:$0xff pattern:$0x73625140]
      %3806 = vst [vmem:[#allocation1] ss:$4 sm:$0xff] %v3627
      %3808 = vst [vmem:[%s3673] ss:$4 sm:$0xff] %v3633
      %3809 = vst [vmem:[%s3676] ss:$4 sm:$0xff] %v3640
      %3811 = vst [vmem:[%s3678] ss:$4 sm:$0xff] %v3645
      %3813 = vst [vmem:[%s3680] ss:$4 sm:$0xff] %v3628
      %3815 = vst [vmem:[%s3683] ss:$4 sm:$0xff] %v3634
      %3817 = vst [vmem:[%s3686] ss:$4 sm:$0xff] %v3235
      %3819 = vst [vmem:[%s3688] ss:$4 sm:$0xff] %v3646
      %v3820 = vld.sshfl [vmem:[#allocation1] sm:$0xff pattern:$0x73625140]
      %v3821 = vld.sshfl [vmem:[#allocation1 + $0x8] sm:$0xff pattern:$0x73625140]
      %v3822 = vld.sshfl [vmem:[#allocation1 + $0x10] sm:$0xff pattern:$0x73625140]
      %v3823 = vld.sshfl [vmem:[#allocation1 + $0x18] sm:$0xff pattern:$0x73625140]
      %v3824 = vld.sshfl [vmem:[#allocation1 + $0x20] sm:$0xff pattern:$0x73625140]
      %3826 = vst [vmem:[#allocation1] ss:$4 sm:$0xff] %v3651
      %3827 = vst [vmem:[%s3673] ss:$4 sm:$0xff] %v3658
      %3829 = vst [vmem:[%s3676] ss:$4 sm:$0xff] %v3663
      %3831 = vst [vmem:[%s3678] ss:$4 sm:$0xff] %v3669
      %3833 = vst [vmem:[%s3680] ss:$4 sm:$0xff] %v3652
      %3835 = vst [vmem:[%s3683] ss:$4 sm:$0xff] %v3276
      %3837 = vst [vmem:[%s3686] ss:$4 sm:$0xff] %v3664
      %3839 = vst [vmem:[%s3688] ss:$4 sm:$0xff] %v3670
      %v3840 = vld.sshfl [vmem:[#allocation1] sm:$0xff pattern:$0x73625140]
      %v3841 = vld.sshfl [vmem:[#allocation1 + $0x8] sm:$0xff pattern:$0x73625140]
      %v3842 = vld.sshfl [vmem:[#allocation1 + $0x10] sm:$0xff pattern:$0x73625140]
      %v3843 = vld.sshfl [vmem:[#allocation1 + $0x18] sm:$0xff pattern:$0x73625140]
      %v3844 = vld.sshfl [vmem:[#allocation1 + $0x20] sm:$0xff pattern:$0x73625140]
      %v3953 = vunpack.c.l.b16 %v2919
      %v3954 = vunpack.c.l.b16 %v2920
      %v3955 = vunpack.c.l.b16 %v2921
      %v3956 = vunpack.c.l.b16 %v2922
      %v3957 = vunpack.c.l.b16 %v2923
      %v3958 = vunpack.c.l.b16 %v2924
      %v3959 = vunpack.c.l.b16 %v2925
      %v3960 = vunpack.c.l.b16 %v2926
      %v3961 = vunpack.c.l.b16 %v2927
      %v3962 = vunpack.c.l.b16 %v2928
      %v3963 = vunpack.c.l.b16 %v2929
      %v3964 = vunpack.c.l.b16 %v2930
      %v3965 = vunpack.c.l.b16 %v2931
      %v3966 = vunpack.c.l.b16 %v2932
      %v3967 = vunpack.c.l.b16 %v2933
      %v3968 = vunpack.c.l.b16 %v2934
      %v3969 = vunpack.c.l.b16 %v2935
      %v3970 = vunpack.c.l.b16 %v2936
      %v3971 = vunpack.c.l.b16 %v2937
      %v3972 = vunpack.c.l.b16 %v2938
      %v3973 = vunpack.c.l.b16 %v2939
      %v3974 = vunpack.c.l.b16 %v2940
      %v3975 = vunpack.c.l.b16 %v2941
      %v3976 = vunpack.c.l.b16 %v2942
      %v3977 = vunpack.c.l.b16 %v2943
      %v3978 = vunpack.c.l.b16 %v2944
      %v3979 = vunpack.c.l.b16 %v2945
      %v3980 = vunpack.c.l.b16 %v2946
      %v3981 = vunpack.c.l.b16 %v2947
      %v3982 = vunpack.c.l.b16 %v2948
      %v3983 = vunpack.c.l.b16 %v2949
      %v3984 = vunpack.c.l.b16 %v2950
      %v3985 = vunpack.c.l.b16 %v2951
      %v3986 = vunpack.c.l.b16 %v2952
      %v3987 = vunpack.c.l.b16 %v2953
      %v3988 = vunpack.c.l.b16 %v2954
      %v3989 = vunpack.c.l.b16 %v2955
      %v3990 = vunpack.c.l.b16 %v2956
      %v3991 = vunpack.c.l.b16 %v2957
      %v3992 = vunpack.c.l.b16 %v2958
      %v3993 = vunpack.c.l.b16 %v2959
      %v3994 = vunpack.c.l.b16 %v2960
      %v3995 = vunpack.c.l.b16 %v2961
      %v3996 = vunpack.c.l.b16 %v2962
      %v3997 = vunpack.c.l.b16 %v2963
      %v3998 = vunpack.c.l.b16 %v2964
      %v3999 = vunpack.c.l.b16 %v2965
      %v4000 = vunpack.c.l.b16 %v2966
      %v4001 = vunpack.c.l.b16 %v2967
      %v4002 = vunpack.c.l.b16 %v2968
      %v4003 = vunpack.c.l.b16 %v2969
      %v4004 = vunpack.c.l.b16 %v2970
      %v4005 = vunpack.c.l.b16 %v2971
      %v4006 = vunpack.c.l.b16 %v2972
      %v4007 = vunpack.c.l.b16 %v2973
      %v4008 = vunpack.c.l.b16 %v2974
      %v4009 = vunpack.c.l.b16 %v2975
      %v4010 = vunpack.c.l.b16 %v2976
      %v4011 = vunpack.c.l.b16 %v2977
      %v4012 = vunpack.c.l.b16 %v2978
      %v4013 = vunpack.c.l.b16 %v2979
      %v4014 = vunpack.c.l.b16 %v2980
      %v4015 = vunpack.c.l.b16 %v2981
      %v4016 = vunpack.c.l.b16 %v2982
      %v4017 = vunpack.c.l.b16 %v2983
      %v4018 = vunpack.c.l.b16 %v2984
      %v4019 = vunpack.c.l.b16 %v2985
      %v4020 = vunpack.c.l.b16 %v2986
      %v4021 = vunpack.c.l.b16 %v2987
      %v4022 = vunpack.c.l.b16 %v2988
      %v4023 = vunpack.c.l.b16 %v2989
      %v4024 = vunpack.c.l.b16 %v2990
      %v4025 = vpack.c.b16 %v3954, %v3953
      %v4026 = vpack.c.b16 %v3956, %v3955
      %v4027 = vpack.c.b16 %v3958, %v3957
      %v4028 = vpack.c.b16 %v3960, %v3959
      %v4029 = vpack.c.b16 %v3962, %v3961
      %v4030 = vpack.c.b16 %v3964, %v3963
      %v4031 = vpack.c.b16 %v3966, %v3965
      %v4032 = vpack.c.b16 %v3968, %v3967
      %v4033 = vpack.c.b16 %v3970, %v3969
      %v4034 = vpack.c.b16 %v3972, %v3971
      %v4035 = vpack.c.b16 %v3974, %v3973
      %v4036 = vpack.c.b16 %v3976, %v3975
      %v4037 = vpack.c.b16 %v3978, %v3977
      %v4038 = vpack.c.b16 %v3980, %v3979
      %v4039 = vpack.c.b16 %v3982, %v3981
      %v4040 = vpack.c.b16 %v3984, %v3983
      %v4041 = vpack.c.b16 %v3986, %v3985
      %v4042 = vpack.c.b16 %v3988, %v3987
      %v4043 = vpack.c.b16 %v3990, %v3989
      %v4044 = vpack.c.b16 %v3992, %v3991
      %v4045 = vpack.c.b16 %v3994, %v3993
      %v4046 = vpack.c.b16 %v3996, %v3995
      %v4047 = vpack.c.b16 %v3998, %v3997
      %v4048 = vpack.c.b16 %v4000, %v3999
      %v4049 = vpack.c.b16 %v4002, %v4001
      %v4050 = vpack.c.b16 %v4004, %v4003
      %v4051 = vpack.c.b16 %v4006, %v4005
      %v4052 = vpack.c.b16 %v4008, %v4007
      %v4053 = vpack.c.b16 %v4010, %v4009
      %v4054 = vpack.c.b16 %v4012, %v4011
      %v4055 = vpack.c.b16 %v4014, %v4013
      %v4056 = vpack.c.b16 %v4016, %v4015
      %v4057 = vpack.c.b16 %v4018, %v4017
      %v4058 = vpack.c.b16 %v4020, %v4019
      %v4059 = vpack.c.b16 %v4022, %v4021
      %v4060 = vpack.c.b16 %v4024, %v4023
      %v4097 = vsel %vm3277, %v3694, 0
      %v4099 = vsel %vm3277, %v3713, 0
      %v4101 = vsel %vm3277, %v3732, 0
      %v4103 = vsel %vm3277, %v3749, 0
      %v4105 = vsel %vm3277, %v3768, 0
      %v4107 = vsel %vm3277, %v3787, 0
      %v4109 = vsel %vm3277, %v3804, 0
      %v4111 = vsel %vm3277, %v3824, 0
      %v4113 = vsel %vm3277, %v3844, 0
      %4115 = vmatpush.bf16.msra.mxu0 %v4032
      %4116 = vmatpush.bf16.msra.mxu0 %v4031
      %4117 = vmatpush.bf16.msra.mxu0 %v4030
      %4118 = vmatpush.bf16.msra.mxu0 %v4029
      %4119 = vmatpush.bf16.msra.mxu0 %v4028
      %4120 = vmatpush.bf16.msra.mxu0 %v4027
      %4121 = vmatpush.bf16.msra.mxu0 %v4026
      %4122 = vmatpush.bf16.msra.mxu0 %v4025
      %4123 = vmatmul.bf16.gmra.mxu0 %v3690
      %v4124 = vpop.f32.mrf.mxu0
      %v4125 = vadd.f32 0.0, %v4124
      %v4126 = vpop.f32.mrf.mxu0
      %v4127 = vadd.f32 0.0, %v4126
      %4128 = vmatmul.bf16.gmra.mxu0 %v3709
      %v4129 = vpop.f32.mrf.mxu0
      %v4130 = vadd.f32 0.0, %v4129
      %v4131 = vpop.f32.mrf.mxu0
      %v4132 = vadd.f32 0.0, %v4131
      %4133 = vmatmul.bf16.gmra.mxu0 %v3728
      %v4134 = vpop.f32.mrf.mxu0
      %v4135 = vadd.f32 0.0, %v4134
      %v4136 = vpop.f32.mrf.mxu0
      %v4137 = vadd.f32 0.0, %v4136
      %4138 = vmatmul.bf16.gmra.mxu0 %v3745
      %v4139 = vpop.f32.mrf.mxu0
      %v4140 = vadd.f32 0.0, %v4139
      %v4141 = vpop.f32.mrf.mxu0
      %v4142 = vadd.f32 0.0, %v4141
      %4143 = vmatmul.bf16.gmra.mxu0 %v3764
      %v4144 = vpop.f32.mrf.mxu0
      %v4145 = vadd.f32 0.0, %v4144
      %v4146 = vpop.f32.mrf.mxu0
      %v4147 = vadd.f32 0.0, %v4146
      %4148 = vmatmul.bf16.gmra.mxu0 %v3783
      %v4149 = vpop.f32.mrf.mxu0
      %v4150 = vadd.f32 0.0, %v4149
      %v4151 = vpop.f32.mrf.mxu0
      %v4152 = vadd.f32 0.0, %v4151
      %4153 = vmatmul.bf16.gmra.mxu0 %v3800
      %v4154 = vpop.f32.mrf.mxu0
      %v4155 = vadd.f32 0.0, %v4154
      %v4156 = vpop.f32.mrf.mxu0
      %v4157 = vadd.f32 0.0, %v4156
      %4158 = vmatmul.bf16.gmra.mxu0 %v3820
      %v4159 = vpop.f32.mrf.mxu0
      %v4160 = vadd.f32 0.0, %v4159
      %v4161 = vpop.f32.mrf.mxu0
      %v4162 = vadd.f32 0.0, %v4161
      %4163 = vmatmul.bf16.gmra.mxu0 %v3840
      %v4164 = vpop.f32.mrf.mxu0
      %v4165 = vadd.f32 0.0, %v4164
      %v4166 = vpop.f32.mrf.mxu0
      %v4167 = vadd.f32 0.0, %v4166
      %4168 = vdwg.mxu0
      %4169 = vmatpush.bf16.msra.mxu0 %v4040
      %4170 = vmatpush.bf16.msra.mxu0 %v4039
      %4171 = vmatpush.bf16.msra.mxu0 %v4038
      %4172 = vmatpush.bf16.msra.mxu0 %v4037
      %4173 = vmatpush.bf16.msra.mxu0 %v4036
      %4174 = vmatpush.bf16.msra.mxu0 %v4035
      %4175 = vmatpush.bf16.msra.mxu0 %v4034
      %4176 = vmatpush.bf16.msra.mxu0 %v4033
      %4177 = vmatmul.bf16.gmra.mxu0 %v3691
      %v4178 = vpop.f32.mrf.mxu0
      %v4179 = vadd.f32 %v4125, %v4178
      %v4180 = vpop.f32.mrf.mxu0
      %v4181 = vadd.f32 %v4127, %v4180
      %4182 = vmatmul.bf16.gmra.mxu0 %v3710
      %v4183 = vpop.f32.mrf.mxu0
      %v4184 = vadd.f32 %v4130, %v4183
      %v4185 = vpop.f32.mrf.mxu0
      %v4186 = vadd.f32 %v4132, %v4185
      %4187 = vmatmul.bf16.gmra.mxu0 %v3729
      %v4188 = vpop.f32.mrf.mxu0
      %v4189 = vadd.f32 %v4135, %v4188
      %v4190 = vpop.f32.mrf.mxu0
      %v4191 = vadd.f32 %v4137, %v4190
      %4192 = vmatmul.bf16.gmra.mxu0 %v3746
      %v4193 = vpop.f32.mrf.mxu0
      %v4194 = vadd.f32 %v4140, %v4193
      %v4195 = vpop.f32.mrf.mxu0
      %v4196 = vadd.f32 %v4142, %v4195
      %4197 = vmatmul.bf16.gmra.mxu0 %v3765
      %v4198 = vpop.f32.mrf.mxu0
      %v4199 = vadd.f32 %v4145, %v4198
      %v4200 = vpop.f32.mrf.mxu0
      %v4201 = vadd.f32 %v4147, %v4200
      %4202 = vmatmul.bf16.gmra.mxu0 %v3784
      %v4203 = vpop.f32.mrf.mxu0
      %v4204 = vadd.f32 %v4150, %v4203
      %v4205 = vpop.f32.mrf.mxu0
      %v4206 = vadd.f32 %v4152, %v4205
      %4207 = vmatmul.bf16.gmra.mxu0 %v3801
      %v4208 = vpop.f32.mrf.mxu0
      %v4209 = vadd.f32 %v4155, %v4208
      %v4210 = vpop.f32.mrf.mxu0
      %v4211 = vadd.f32 %v4157, %v4210
      %4212 = vmatmul.bf16.gmra.mxu0 %v3821
      %v4213 = vpop.f32.mrf.mxu0
      %v4214 = vadd.f32 %v4160, %v4213
      %v4215 = vpop.f32.mrf.mxu0
      %v4216 = vadd.f32 %v4162, %v4215
      %4217 = vmatmul.bf16.gmra.mxu0 %v3841
      %v4218 = vpop.f32.mrf.mxu0
      %v4219 = vadd.f32 %v4165, %v4218
      %v4220 = vpop.f32.mrf.mxu0
      %v4221 = vadd.f32 %v4167, %v4220
      %4222 = vdwg.mxu0
      %4223 = vmatpush.bf16.msra.mxu0 %v4048
      %4224 = vmatpush.bf16.msra.mxu0 %v4047
      %4225 = vmatpush.bf16.msra.mxu0 %v4046
      %4226 = vmatpush.bf16.msra.mxu0 %v4045
      %4227 = vmatpush.bf16.msra.mxu0 %v4044
      %4228 = vmatpush.bf16.msra.mxu0 %v4043
      %4229 = vmatpush.bf16.msra.mxu0 %v4042
      %4230 = vmatpush.bf16.msra.mxu0 %v4041
      %4231 = vmatmul.bf16.gmra.mxu0 %v3692
      %v4232 = vpop.f32.mrf.mxu0
      %v4233 = vadd.f32 %v4179, %v4232
      %v4234 = vpop.f32.mrf.mxu0
      %v4235 = vadd.f32 %v4181, %v4234
      %4236 = vmatmul.bf16.gmra.mxu0 %v3711
      %v4237 = vpop.f32.mrf.mxu0
      %v4238 = vadd.f32 %v4184, %v4237
      %v4239 = vpop.f32.mrf.mxu0
      %v4240 = vadd.f32 %v4186, %v4239
      %4241 = vmatmul.bf16.gmra.mxu0 %v3730
      %v4242 = vpop.f32.mrf.mxu0
      %v4243 = vadd.f32 %v4189, %v4242
      %v4244 = vpop.f32.mrf.mxu0
      %v4245 = vadd.f32 %v4191, %v4244
      %4246 = vmatmul.bf16.gmra.mxu0 %v3747
      %v4247 = vpop.f32.mrf.mxu0
      %v4248 = vadd.f32 %v4194, %v4247
      %v4249 = vpop.f32.mrf.mxu0
      %v4250 = vadd.f32 %v4196, %v4249
      %4251 = vmatmul.bf16.gmra.mxu0 %v3766
      %v4252 = vpop.f32.mrf.mxu0
      %v4253 = vadd.f32 %v4199, %v4252
      %v4254 = vpop.f32.mrf.mxu0
      %v4255 = vadd.f32 %v4201, %v4254
      %4256 = vmatmul.bf16.gmra.mxu0 %v3785
      %v4257 = vpop.f32.mrf.mxu0
      %v4258 = vadd.f32 %v4204, %v4257
      %v4259 = vpop.f32.mrf.mxu0
      %v4260 = vadd.f32 %v4206, %v4259
      %4261 = vmatmul.bf16.gmra.mxu0 %v3802
      %v4262 = vpop.f32.mrf.mxu0
      %v4263 = vadd.f32 %v4209, %v4262
      %v4264 = vpop.f32.mrf.mxu0
      %v4265 = vadd.f32 %v4211, %v4264
      %4266 = vmatmul.bf16.gmra.mxu0 %v3822
      %v4267 = vpop.f32.mrf.mxu0
      %v4268 = vadd.f32 %v4214, %v4267
      %v4269 = vpop.f32.mrf.mxu0
      %v4270 = vadd.f32 %v4216, %v4269
      %4271 = vmatmul.bf16.gmra.mxu0 %v3842
      %v4272 = vpop.f32.mrf.mxu0
      %v4273 = vadd.f32 %v4219, %v4272
      %v4274 = vpop.f32.mrf.mxu0
      %v4275 = vadd.f32 %v4221, %v4274
      %4276 = vdwg.mxu0
      %4277 = vmatpush.bf16.msra.mxu0 %v4056
      %4278 = vmatpush.bf16.msra.mxu0 %v4055
      %4279 = vmatpush.bf16.msra.mxu0 %v4054
      %4280 = vmatpush.bf16.msra.mxu0 %v4053
      %4281 = vmatpush.bf16.msra.mxu0 %v4052
      %4282 = vmatpush.bf16.msra.mxu0 %v4051
      %4283 = vmatpush.bf16.msra.mxu0 %v4050
      %4284 = vmatpush.bf16.msra.mxu0 %v4049
      %4285 = vmatmul.bf16.gmra.mxu0 %v3693
      %v4286 = vpop.f32.mrf.mxu0
      %v4287 = vadd.f32 %v4233, %v4286
      %v4288 = vpop.f32.mrf.mxu0
      %v4289 = vadd.f32 %v4235, %v4288
      %4290 = vmatmul.bf16.gmra.mxu0 %v3712
      %v4291 = vpop.f32.mrf.mxu0
      %v4292 = vadd.f32 %v4238, %v4291
      %v4293 = vpop.f32.mrf.mxu0
      %v4294 = vadd.f32 %v4240, %v4293
      %4295 = vmatmul.bf16.gmra.mxu0 %v3731
      %v4296 = vpop.f32.mrf.mxu0
      %v4297 = vadd.f32 %v4243, %v4296
      %v4298 = vpop.f32.mrf.mxu0
      %v4299 = vadd.f32 %v4245, %v4298
      %4300 = vmatmul.bf16.gmra.mxu0 %v3748
      %v4301 = vpop.f32.mrf.mxu0
      %v4302 = vadd.f32 %v4248, %v4301
      %v4303 = vpop.f32.mrf.mxu0
      %v4304 = vadd.f32 %v4250, %v4303
      %4305 = vmatmul.bf16.gmra.mxu0 %v3767
      %v4306 = vpop.f32.mrf.mxu0
      %v4307 = vadd.f32 %v4253, %v4306
      %v4308 = vpop.f32.mrf.mxu0
      %v4309 = vadd.f32 %v4255, %v4308
      %4310 = vmatmul.bf16.gmra.mxu0 %v3786
      %v4311 = vpop.f32.mrf.mxu0
      %v4312 = vadd.f32 %v4258, %v4311
      %v4313 = vpop.f32.mrf.mxu0
      %v4314 = vadd.f32 %v4260, %v4313
      %4315 = vmatmul.bf16.gmra.mxu0 %v3803
      %v4316 = vpop.f32.mrf.mxu0
      %v4317 = vadd.f32 %v4263, %v4316
      %v4318 = vpop.f32.mrf.mxu0
      %v4319 = vadd.f32 %v4265, %v4318
      %4320 = vmatmul.bf16.gmra.mxu0 %v3823
      %v4321 = vpop.f32.mrf.mxu0
      %v4322 = vadd.f32 %v4268, %v4321
      %v4323 = vpop.f32.mrf.mxu0
      %v4324 = vadd.f32 %v4270, %v4323
      %4325 = vmatmul.bf16.gmra.mxu0 %v3843
      %v4326 = vpop.f32.mrf.mxu0
      %v4327 = vadd.f32 %v4273, %v4326
      %v4328 = vpop.f32.mrf.mxu0
      %v4329 = vadd.f32 %v4275, %v4328
      %4330 = vdwg.mxu0
      %4331 = vmatpush.bf16.msra.mxu0 0
      %4332 = vmatpush.bf16.msra.mxu0 0
      %4333 = vmatpush.bf16.msra.mxu0 0
      %4334 = vmatpush.bf16.msra.mxu0 0
      %4335 = vmatpush.bf16.msra.mxu0 %v4060
      %4336 = vmatpush.bf16.msra.mxu0 %v4059
      %4337 = vmatpush.bf16.msra.mxu0 %v4058
      %4338 = vmatpush.bf16.msra.mxu0 %v4057
      %4339 = vmatmul.bf16.gmra.mxu0 %v4097
      %v4340 = vpop.f32.mrf.mxu0
      %v4341 = vadd.f32 %v4287, %v4340
      %v4342 = vpop.f32.mrf.mxu0
      %v4343 = vadd.f32 %v4289, %v4342
      %4344 = vmatmul.bf16.gmra.mxu0 %v4099
      %v4345 = vpop.f32.mrf.mxu0
      %v4346 = vadd.f32 %v4292, %v4345
      %v4347 = vpop.f32.mrf.mxu0
      %v4348 = vadd.f32 %v4294, %v4347
      %4349 = vmatmul.bf16.gmra.mxu0 %v4101
      %v4350 = vpop.f32.mrf.mxu0
      %v4351 = vadd.f32 %v4297, %v4350
      %v4352 = vpop.f32.mrf.mxu0
      %v4353 = vadd.f32 %v4299, %v4352
      %4354 = vmatmul.bf16.gmra.mxu0 %v4103
      %v4355 = vpop.f32.mrf.mxu0
      %v4356 = vadd.f32 %v4302, %v4355
      %v4357 = vpop.f32.mrf.mxu0
      %v4358 = vadd.f32 %v4304, %v4357
      %4359 = vmatmul.bf16.gmra.mxu0 %v4105
      %v4360 = vpop.f32.mrf.mxu0
      %v4361 = vadd.f32 %v4307, %v4360
      %v4362 = vpop.f32.mrf.mxu0
      %v4363 = vadd.f32 %v4309, %v4362
      %4364 = vmatmul.bf16.gmra.mxu0 %v4107
      %v4365 = vpop.f32.mrf.mxu0
      %v4366 = vadd.f32 %v4312, %v4365
      %v4367 = vpop.f32.mrf.mxu0
      %v4368 = vadd.f32 %v4314, %v4367
      %4369 = vmatmul.bf16.gmra.mxu0 %v4109
      %v4370 = vpop.f32.mrf.mxu0
      %v4371 = vadd.f32 %v4317, %v4370
      %v4372 = vpop.f32.mrf.mxu0
      %v4373 = vadd.f32 %v4319, %v4372
      %4374 = vmatmul.bf16.gmra.mxu0 %v4111
      %v4375 = vpop.f32.mrf.mxu0
      %v4376 = vadd.f32 %v4322, %v4375
      %v4377 = vpop.f32.mrf.mxu0
      %v4378 = vadd.f32 %v4324, %v4377
      %4379 = vmatmul.bf16.gmra.mxu0 %v4113
      %v4380 = vpop.f32.mrf.mxu0
      %v4381 = vadd.f32 %v4327, %v4380
      %v4382 = vpop.f32.mrf.mxu0
      %v4383 = vadd.f32 %v4329, %v4382
      %4384 = vdwg.mxu0
      %v4403 = vrot.slane %v4341, 4
      %v4404 = vrot.slane %v4343, 4
      %v4405 = vrot.slane %v4346, 4
      %v4406 = vrot.slane %v4348, 4
      %v4407 = vrot.slane %v4351, 4
      %v4408 = vrot.slane %v4353, 4
      %v4409 = vrot.slane %v4356, 4
      %v4410 = vrot.slane %v4358, 4
      %v4411 = vrot.slane %v4361, 4
      %v4412 = vrot.slane %v4363, 4
      %v4413 = vrot.slane %v4366, 4
      %v4414 = vrot.slane %v4368, 4
      %v4415 = vrot.slane %v4371, 4
      %v4416 = vrot.slane %v4373, 4
      %v4417 = vrot.slane %v4376, 4
      %v4418 = vrot.slane %v4378, 4
      %v4419 = vrot.slane %v4381, 4
      %v4420 = vrot.slane %v4383, 4
      %4439 = vst [vmem:[#allocation1] ss:$2 sm:$0xff] %v4341
      %s4440 = scalar_lea.vmem [#allocation1], 1
      %4441 = vst [vmem:[%s4440] ss:$2 sm:$0xff] %v4403
      %s4442 = scalar_lea.vmem [#allocation1], 16
      %4443 = vst [vmem:[%s4442] ss:$2 sm:$0xff] %v4343
      %v4444 = vld.sshfl [vmem:[#allocation1] sm:$0xff pattern:$0x75316420]
      %v4445 = vld.sshfl [vmem:[#allocation1 + $0x10] sm:$0xff pattern:$0x75316420]
      %s4446 = scalar_lea.vmem [#allocation1], 32
      %4447 = vst [vmem:[%s4446] ss:$2 sm:$0xff] %v4404
      %s4448 = scalar_lea.vmem [#allocation1], 33
      %4449 = vst [vmem:[%s4448] ss:$2 sm:$0xff] %v4346
      %s4450 = scalar_lea.vmem [#allocation1], 48
      %4451 = vst [vmem:[%s4450] ss:$2 sm:$0xff] %v4405
      %v4452 = vld.sshfl [vmem:[#allocation1 + $0x20] sm:$0xff pattern:$0x75316420]
      %v4453 = vld.sshfl [vmem:[#allocation1 + $0x30] sm:$0xff pattern:$0x75316420]
      %4454 = vst [vmem:[#allocation1] ss:$2 sm:$0xff] %v4348
      %4455 = vst [vmem:[%s4440] ss:$2 sm:$0xff] %v4406
      %4456 = vst [vmem:[%s4442] ss:$2 sm:$0xff] %v4351
      %v4457 = vld.sshfl [vmem:[#allocation1] sm:$0xff pattern:$0x75316420]
      %v4458 = vld.sshfl [vmem:[#allocation1 + $0x10] sm:$0xff pattern:$0x75316420]
      %4459 = vst [vmem:[%s4446] ss:$2 sm:$0xff] %v4407
      %4460 = vst [vmem:[%s4448] ss:$2 sm:$0xff] %v4353
      %4461 = vst [vmem:[%s4450] ss:$2 sm:$0xff] %v4408
      %v4462 = vld.sshfl [vmem:[#allocation1 + $0x20] sm:$0xff pattern:$0x75316420]
      %v4463 = vld.sshfl [vmem:[#allocation1 + $0x30] sm:$0xff pattern:$0x75316420]
      %4464 = vst [vmem:[#allocation1] ss:$2 sm:$0xff] %v4356
      %4465 = vst [vmem:[%s4440] ss:$2 sm:$0xff] %v4409
      %4466 = vst [vmem:[%s4442] ss:$2 sm:$0xff] %v4358
      %v4467 = vld.sshfl [vmem:[#allocation1] sm:$0xff pattern:$0x75316420]
      %v4468 = vld.sshfl [vmem:[#allocation1 + $0x10] sm:$0xff pattern:$0x75316420]
      %4469 = vst [vmem:[%s4446] ss:$2 sm:$0xff] %v4410
      %4470 = vst [vmem:[%s4448] ss:$2 sm:$0xff] %v4361
      %4471 = vst [vmem:[%s4450] ss:$2 sm:$0xff] %v4411
      %v4472 = vld.sshfl [vmem:[#allocation1 + $0x20] sm:$0xff pattern:$0x75316420]
      %v4473 = vld.sshfl [vmem:[#allocation1 + $0x30] sm:$0xff pattern:$0x75316420]
      %4474 = vst [vmem:[#allocation1] ss:$2 sm:$0xff] %v4363
      %4475 = vst [vmem:[%s4440] ss:$2 sm:$0xff] %v4412
      %4476 = vst [vmem:[%s4442] ss:$2 sm:$0xff] %v4366
      %v4477 = vld.sshfl [vmem:[#allocation1] sm:$0xff pattern:$0x75316420]
      %v4478 = vld.sshfl [vmem:[#allocation1 + $0x10] sm:$0xff pattern:$0x75316420]
      %4479 = vst [vmem:[%s4446] ss:$2 sm:$0xff] %v4413
      %4480 = vst [vmem:[%s4448] ss:$2 sm:$0xff] %v4368
      %4481 = vst [vmem:[%s4450] ss:$2 sm:$0xff] %v4414
      %v4482 = vld.sshfl [vmem:[#allocation1 + $0x20] sm:$0xff pattern:$0x75316420]
      %v4483 = vld.sshfl [vmem:[#allocation1 + $0x30] sm:$0xff pattern:$0x75316420]
      %4484 = vst [vmem:[#allocation1] ss:$2 sm:$0xff] %v4371
      %4485 = vst [vmem:[%s4440] ss:$2 sm:$0xff] %v4415
      %4486 = vst [vmem:[%s4442] ss:$2 sm:$0xff] %v4373
      %v4487 = vld.sshfl [vmem:[#allocation1] sm:$0xff pattern:$0x75316420]
      %v4488 = vld.sshfl [vmem:[#allocation1 + $0x10] sm:$0xff pattern:$0x75316420]
      %4489 = vst [vmem:[%s4446] ss:$2 sm:$0xff] %v4416
      %4490 = vst [vmem:[%s4448] ss:$2 sm:$0xff] %v4376
      %4491 = vst [vmem:[%s4450] ss:$2 sm:$0xff] %v4417
      %v4492 = vld.sshfl [vmem:[#allocation1 + $0x20] sm:$0xff pattern:$0x75316420]
      %v4493 = vld.sshfl [vmem:[#allocation1 + $0x30] sm:$0xff pattern:$0x75316420]
      %4494 = vst [vmem:[#allocation1] ss:$2 sm:$0xff] %v4378
      %4495 = vst [vmem:[%s4440] ss:$2 sm:$0xff] %v4418
      %4496 = vst [vmem:[%s4442] ss:$2 sm:$0xff] %v4381
      %v4497 = vld.sshfl [vmem:[#allocation1] sm:$0xff pattern:$0x75316420]
      %v4498 = vld.sshfl [vmem:[#allocation1 + $0x10] sm:$0xff pattern:$0x75316420]
      %4499 = vst [vmem:[%s4446] ss:$2 sm:$0xff] %v4419
      %4500 = vst [vmem:[%s4448] ss:$2 sm:$0xff] %v4383
      %4501 = vst [vmem:[%s4450] ss:$2 sm:$0xff] %v4420
      %v4502 = vld.sshfl [vmem:[#allocation1 + $0x20] sm:$0xff pattern:$0x75316420]
      %v4503 = vld.sshfl [vmem:[#allocation1 + $0x30] sm:$0xff pattern:$0x75316420]
      %4528 = vst [vmem:[%s262] sm:$0xff] %v4444
      %4529 = vst [vmem:[%s262 + $0x8] sm:$0xf] %v4445
      %4530 = vst [vmem:[%s262 + $0x10] sm:$0xff] %v4452
      %4531 = vst [vmem:[%s262 + $0x18] sm:$0xf] %v4453
      %4532 = vst [vmem:[%s262 + $0x20] sm:$0xff] %v4457
      %4533 = vst [vmem:[%s262 + $0x28] sm:$0xf] %v4458
      %4534 = vst [vmem:[%s262 + $0x30] sm:$0xff] %v4462
      %4535 = vst [vmem:[%s262 + $0x38] sm:$0xf] %v4463
      %4536 = vst [vmem:[%s262 + $0x40] sm:$0xff] %v4467
      %4537 = vst [vmem:[%s262 + $0x48] sm:$0xf] %v4468
      %4538 = vst [vmem:[%s262 + $0x50] sm:$0xff] %v4472
      %4539 = vst [vmem:[%s262 + $0x58] sm:$0xf] %v4473
      %4540 = vst [vmem:[%s262 + $0x60] sm:$0xff] %v4477
      %4541 = vst [vmem:[%s262 + $0x68] sm:$0xf] %v4478
      %4542 = vst [vmem:[%s262 + $0x70] sm:$0xff] %v4482
      %4543 = vst [vmem:[%s262 + $0x78] sm:$0xf] %v4483
      %4544 = vst [vmem:[%s262 + $0x80] sm:$0xff] %v4487
      %4545 = vst [vmem:[%s262 + $0x88] sm:$0xf] %v4488
      %4546 = vst [vmem:[%s262 + $0x90] sm:$0xff] %v4492
      %4547 = vst [vmem:[%s262 + $0x98] sm:$0xf] %v4493
      %4548 = vst [vmem:[%s262 + $0xa0] sm:$0xff] %v4497
      %4549 = vst [vmem:[%s262 + $0xa8] sm:$0xf] %v4498
      %4550 = vst [vmem:[%s262 + $0xb0] sm:$0xff] %v4502
      %4551 = vst [vmem:[%s262 + $0xb8] sm:$0xf] %v4503
      %4552 = vst [vmem:[#allocation1] ss:$2 sm:$0xff] %v4341
      %s4553 = scalar_lea.vmem [#allocation1], 1
      %4554 = vst [vmem:[%s4553] ss:$2 sm:$0xff] %v4403
      %s4555 = scalar_lea.vmem [#allocation1], 16
      %4556 = vst [vmem:[%s4555] ss:$2 sm:$0xff] %v4343
      %v4557 = vld.sshfl [vmem:[#allocation1] sm:$0xff pattern:$0x75316420]
      %v4558 = vld.sshfl [vmem:[#allocation1 + $0x10] sm:$0xff pattern:$0x75316420]
      %s4559 = scalar_lea.vmem [#allocation1], 32
      %4560 = vst [vmem:[%s4559] ss:$2 sm:$0xff] %v4404
      %s4561 = scalar_lea.vmem [#allocation1], 33
      %4562 = vst [vmem:[%s4561] ss:$2 sm:$0xff] %v4346
      %s4563 = scalar_lea.vmem [#allocation1], 48
      %4564 = vst [vmem:[%s4563] ss:$2 sm:$0xff] %v4405
      %v4565 = vld.sshfl [vmem:[#allocation1 + $0x20] sm:$0xff pattern:$0x75316420]
      %v4566 = vld.sshfl [vmem:[#allocation1 + $0x30] sm:$0xff pattern:$0x75316420]
      %4567 = vst [vmem:[#allocation1] ss:$2 sm:$0xff] %v4348
      %4568 = vst [vmem:[%s4553] ss:$2 sm:$0xff] %v4406
      %4569 = vst [vmem:[%s4555] ss:$2 sm:$0xff] %v4351
      %v4570 = vld.sshfl [vmem:[#allocation1] sm:$0xff pattern:$0x75316420]
      %v4571 = vld.sshfl [vmem:[#allocation1 + $0x10] sm:$0xff pattern:$0x75316420]
      %4572 = vst [vmem:[%s4559] ss:$2 sm:$0xff] %v4407
      %4573 = vst [vmem:[%s4561] ss:$2 sm:$0xff] %v4353
      %4574 = vst [vmem:[%s4563] ss:$2 sm:$0xff] %v4408
      %v4575 = vld.sshfl [vmem:[#allocation1 + $0x20] sm:$0xff pattern:$0x75316420]
      %v4576 = vld.sshfl [vmem:[#allocation1 + $0x30] sm:$0xff pattern:$0x75316420]
      %4577 = vst [vmem:[#allocation1] ss:$2 sm:$0xff] %v4356
      %4578 = vst [vmem:[%s4553] ss:$2 sm:$0xff] %v4409
      %4579 = vst [vmem:[%s4555] ss:$2 sm:$0xff] %v4358
      %v4580 = vld.sshfl [vmem:[#allocation1] sm:$0xff pattern:$0x75316420]
      %v4581 = vld.sshfl [vmem:[#allocation1 + $0x10] sm:$0xff pattern:$0x75316420]
      %4582 = vst [vmem:[%s4559] ss:$2 sm:$0xff] %v4410
      %4583 = vst [vmem:[%s4561] ss:$2 sm:$0xff] %v4361
      %4584 = vst [vmem:[%s4563] ss:$2 sm:$0xff] %v4411
      %v4585 = vld.sshfl [vmem:[#allocation1 + $0x20] sm:$0xff pattern:$0x75316420]
      %v4586 = vld.sshfl [vmem:[#allocation1 + $0x30] sm:$0xff pattern:$0x75316420]
      %4587 = vst [vmem:[#allocation1] ss:$2 sm:$0xff] %v4363
      %4588 = vst [vmem:[%s4553] ss:$2 sm:$0xff] %v4412
      %4589 = vst [vmem:[%s4555] ss:$2 sm:$0xff] %v4366
      %v4590 = vld.sshfl [vmem:[#allocation1] sm:$0xff pattern:$0x75316420]
      %v4591 = vld.sshfl [vmem:[#allocation1 + $0x10] sm:$0xff pattern:$0x75316420]
      %4592 = vst [vmem:[%s4559] ss:$2 sm:$0xff] %v4413
      %4593 = vst [vmem:[%s4561] ss:$2 sm:$0xff] %v4368
      %4594 = vst [vmem:[%s4563] ss:$2 sm:$0xff] %v4414
      %v4595 = vld.sshfl [vmem:[#allocation1 + $0x20] sm:$0xff pattern:$0x75316420]
      %v4596 = vld.sshfl [vmem:[#allocation1 + $0x30] sm:$0xff pattern:$0x75316420]
      %4597 = vst [vmem:[#allocation1] ss:$2 sm:$0xff] %v4371
      %4598 = vst [vmem:[%s4553] ss:$2 sm:$0xff] %v4415
      %4599 = vst [vmem:[%s4555] ss:$2 sm:$0xff] %v4373
      %v4600 = vld.sshfl [vmem:[#allocation1] sm:$0xff pattern:$0x75316420]
      %v4601 = vld.sshfl [vmem:[#allocation1 + $0x10] sm:$0xff pattern:$0x75316420]
      %4602 = vst [vmem:[%s4559] ss:$2 sm:$0xff] %v4416
      %4603 = vst [vmem:[%s4561] ss:$2 sm:$0xff] %v4376
      %4604 = vst [vmem:[%s4563] ss:$2 sm:$0xff] %v4417
      %v4605 = vld.sshfl [vmem:[#allocation1 + $0x20] sm:$0xff pattern:$0x75316420]
      %v4606 = vld.sshfl [vmem:[#allocation1 + $0x30] sm:$0xff pattern:$0x75316420]
      %4607 = vst [vmem:[#allocation1] ss:$2 sm:$0xff] %v4378
      %4608 = vst [vmem:[%s4553] ss:$2 sm:$0xff] %v4418
      %4609 = vst [vmem:[%s4555] ss:$2 sm:$0xff] %v4381
      %v4610 = vld.sshfl [vmem:[#allocation1] sm:$0xff pattern:$0x75316420]
      %v4611 = vld.sshfl [vmem:[#allocation1 + $0x10] sm:$0xff pattern:$0x75316420]
      %4612 = vst [vmem:[%s4559] ss:$2 sm:$0xff] %v4419
      %4613 = vst [vmem:[%s4561] ss:$2 sm:$0xff] %v4383
      %4614 = vst [vmem:[%s4563] ss:$2 sm:$0xff] %v4420
      %v4615 = vld.sshfl [vmem:[#allocation1 + $0x20] sm:$0xff pattern:$0x75316420]
      %v4616 = vld.sshfl [vmem:[#allocation1 + $0x30] sm:$0xff pattern:$0x75316420]
      %v4641 = vsel %vm3457, %v4558, 0.0
      %v4642 = vadd.f32 %v4557, %v4641
      %v4643 = vadd.f32 %v4642, %v4565
      %v4644 = vsel %vm3457, %v4566, 0.0
      %v4645 = vadd.f32 %v4643, %v4644
      %v4646 = vadd.f32 %v4645, %v4570
      %v4647 = vsel %vm3457, %v4571, 0.0
      %v4648 = vadd.f32 %v4646, %v4647
      %v4649 = vadd.f32 %v4648, %v4575
      %v4650 = vsel %vm3457, %v4576, 0.0
      %v4651 = vadd.f32 %v4649, %v4650
      %v4652 = vadd.f32 %v4651, %v4580
      %v4653 = vsel %vm3457, %v4581, 0.0
      %v4654 = vadd.f32 %v4652, %v4653
      %v4655 = vadd.f32 %v4654, %v4585
      %v4656 = vsel %vm3457, %v4586, 0.0
      %v4657 = vadd.f32 %v4655, %v4656
      %v4658 = vadd.f32 %v4657, %v4590
      %v4659 = vsel %vm3457, %v4591, 0.0
      %v4660 = vadd.f32 %v4658, %v4659
      %v4661 = vadd.f32 %v4660, %v4595
      %v4662 = vsel %vm3457, %v4596, 0.0
      %v4663 = vadd.f32 %v4661, %v4662
      %v4664 = vadd.f32 %v4663, %v4600
      %v4665 = vsel %vm3457, %v4601, 0.0
      %v4666 = vadd.f32 %v4664, %v4665
      %v4667 = vadd.f32 %v4666, %v4605
      %v4668 = vsel %vm3457, %v4606, 0.0
      %v4669 = vadd.f32 %v4667, %v4668
      %v4670 = vadd.f32 %v4669, %v4610
      %v4671 = vsel %vm3457, %v4611, 0.0
      %v4672 = vadd.f32 %v4670, %v4671
      %v4673 = vadd.f32 %v4672, %v4615
      %v4674 = vsel %vm3457, %v4616, 0.0
      %v4675 = vadd.f32 %v4673, %v4674
      %v4676 = vrot.slane %v4675, 4
      %v4677 = vadd.f32 %v4675, %v4676
      %v4678 = vrot.slane %v4677, 2
      %v4679 = vadd.f32 %v4677, %v4678
      %v4680 = vrot.slane %v4679, 1
      %v4681 = vadd.f32 %v4679, %v4680
      %v4682 = vmul.f32 %v4341, %v4341
      %v4683 = vmul.f32 %v4403, %v4403
      %v4684 = vmul.f32 %v4343, %v4343
      %v4685 = vmul.f32 %v4404, %v4404
      %v4686 = vmul.f32 %v4346, %v4346
      %v4687 = vmul.f32 %v4405, %v4405
      %v4688 = vmul.f32 %v4348, %v4348
      %v4689 = vmul.f32 %v4406, %v4406
      %v4690 = vmul.f32 %v4351, %v4351
      %v4691 = vmul.f32 %v4407, %v4407
      %v4692 = vmul.f32 %v4353, %v4353
      %v4693 = vmul.f32 %v4408, %v4408
      %v4694 = vmul.f32 %v4356, %v4356
      %v4695 = vmul.f32 %v4409, %v4409
      %v4696 = vmul.f32 %v4358, %v4358
      %v4697 = vmul.f32 %v4410, %v4410
      %v4698 = vmul.f32 %v4361, %v4361
      %v4699 = vmul.f32 %v4411, %v4411
      %v4700 = vmul.f32 %v4363, %v4363
      %v4701 = vmul.f32 %v4412, %v4412
      %v4702 = vmul.f32 %v4366, %v4366
      %v4703 = vmul.f32 %v4413, %v4413
      %v4704 = vmul.f32 %v4368, %v4368
      %v4705 = vmul.f32 %v4414, %v4414
      %v4706 = vmul.f32 %v4371, %v4371
      %v4707 = vmul.f32 %v4415, %v4415
      %v4708 = vmul.f32 %v4373, %v4373
      %v4709 = vmul.f32 %v4416, %v4416
      %v4710 = vmul.f32 %v4376, %v4376
      %v4711 = vmul.f32 %v4417, %v4417
      %v4712 = vmul.f32 %v4378, %v4378
      %v4713 = vmul.f32 %v4418, %v4418
      %v4714 = vmul.f32 %v4381, %v4381
      %v4715 = vmul.f32 %v4419, %v4419
      %v4716 = vmul.f32 %v4383, %v4383
      %v4717 = vmul.f32 %v4420, %v4420
      %4754 = vst [vmem:[#allocation1] ss:$2 sm:$0xff] %v4682
      %s4755 = scalar_lea.vmem [#allocation1], 1
      %4756 = vst [vmem:[%s4755] ss:$2 sm:$0xff] %v4683
      %s4757 = scalar_lea.vmem [#allocation1], 16
      %4758 = vst [vmem:[%s4757] ss:$2 sm:$0xff] %v4684
      %v4759 = vld.sshfl [vmem:[#allocation1] sm:$0xff pattern:$0x75316420]
      %v4760 = vld.sshfl [vmem:[#allocation1 + $0x10] sm:$0xff pattern:$0x75316420]
      %s4761 = scalar_lea.vmem [#allocation1], 32
      %4762 = vst [vmem:[%s4761] ss:$2 sm:$0xff] %v4685
      %s4763 = scalar_lea.vmem [#allocation1], 33
      %4764 = vst [vmem:[%s4763] ss:$2 sm:$0xff] %v4686
      %s4765 = scalar_lea.vmem [#allocation1], 48
      %4766 = vst [vmem:[%s4765] ss:$2 sm:$0xff] %v4687
      %v4767 = vld.sshfl [vmem:[#allocation1 + $0x20] sm:$0xff pattern:$0x75316420]
      %v4768 = vld.sshfl [vmem:[#allocation1 + $0x30] sm:$0xff pattern:$0x75316420]
      %4769 = vst [vmem:[#allocation1] ss:$2 sm:$0xff] %v4688
      %4770 = vst [vmem:[%s4755] ss:$2 sm:$0xff] %v4689
      %4771 = vst [vmem:[%s4757] ss:$2 sm:$0xff] %v4690
      %v4772 = vld.sshfl [vmem:[#allocation1] sm:$0xff pattern:$0x75316420]
      %v4773 = vld.sshfl [vmem:[#allocation1 + $0x10] sm:$0xff pattern:$0x75316420]
      %4774 = vst [vmem:[%s4761] ss:$2 sm:$0xff] %v4691
      %4775 = vst [vmem:[%s4763] ss:$2 sm:$0xff] %v4692
      %4776 = vst [vmem:[%s4765] ss:$2 sm:$0xff] %v4693
      %v4777 = vld.sshfl [vmem:[#allocation1 + $0x20] sm:$0xff pattern:$0x75316420]
      %v4778 = vld.sshfl [vmem:[#allocation1 + $0x30] sm:$0xff pattern:$0x75316420]
      %4779 = vst [vmem:[#allocation1] ss:$2 sm:$0xff] %v4694
      %4780 = vst [vmem:[%s4755] ss:$2 sm:$0xff] %v4695
      %4781 = vst [vmem:[%s4757] ss:$2 sm:$0xff] %v4696
      %v4782 = vld.sshfl [vmem:[#allocation1] sm:$0xff pattern:$0x75316420]
      %v4783 = vld.sshfl [vmem:[#allocation1 + $0x10] sm:$0xff pattern:$0x75316420]
      %4784 = vst [vmem:[%s4761] ss:$2 sm:$0xff] %v4697
      %4785 = vst [vmem:[%s4763] ss:$2 sm:$0xff] %v4698
      %4786 = vst [vmem:[%s4765] ss:$2 sm:$0xff] %v4699
      %v4787 = vld.sshfl [vmem:[#allocation1 + $0x20] sm:$0xff pattern:$0x75316420]
      %v4788 = vld.sshfl [vmem:[#allocation1 + $0x30] sm:$0xff pattern:$0x75316420]
      %4789 = vst [vmem:[#allocation1] ss:$2 sm:$0xff] %v4700
      %4790 = vst [vmem:[%s4755] ss:$2 sm:$0xff] %v4701
      %4791 = vst [vmem:[%s4757] ss:$2 sm:$0xff] %v4702
      %v4792 = vld.sshfl [vmem:[#allocation1] sm:$0xff pattern:$0x75316420]
      %v4793 = vld.sshfl [vmem:[#allocation1 + $0x10] sm:$0xff pattern:$0x75316420]
      %4794 = vst [vmem:[%s4761] ss:$2 sm:$0xff] %v4703
      %4795 = vst [vmem:[%s4763] ss:$2 sm:$0xff] %v4704
      %4796 = vst [vmem:[%s4765] ss:$2 sm:$0xff] %v4705
      %v4797 = vld.sshfl [vmem:[#allocation1 + $0x20] sm:$0xff pattern:$0x75316420]
      %v4798 = vld.sshfl [vmem:[#allocation1 + $0x30] sm:$0xff pattern:$0x75316420]
      %4799 = vst [vmem:[#allocation1] ss:$2 sm:$0xff] %v4706
      %4800 = vst [vmem:[%s4755] ss:$2 sm:$0xff] %v4707
      %4801 = vst [vmem:[%s4757] ss:$2 sm:$0xff] %v4708
      %v4802 = vld.sshfl [vmem:[#allocation1] sm:$0xff pattern:$0x75316420]
      %v4803 = vld.sshfl [vmem:[#allocation1 + $0x10] sm:$0xff pattern:$0x75316420]
      %4804 = vst [vmem:[%s4761] ss:$2 sm:$0xff] %v4709
      %4805 = vst [vmem:[%s4763] ss:$2 sm:$0xff] %v4710
      %4806 = vst [vmem:[%s4765] ss:$2 sm:$0xff] %v4711
      %v4807 = vld.sshfl [vmem:[#allocation1 + $0x20] sm:$0xff pattern:$0x75316420]
      %v4808 = vld.sshfl [vmem:[#allocation1 + $0x30] sm:$0xff pattern:$0x75316420]
      %4809 = vst [vmem:[#allocation1] ss:$2 sm:$0xff] %v4712
      %4810 = vst [vmem:[%s4755] ss:$2 sm:$0xff] %v4713
      %4811 = vst [vmem:[%s4757] ss:$2 sm:$0xff] %v4714
      %v4812 = vld.sshfl [vmem:[#allocation1] sm:$0xff pattern:$0x75316420]
      %v4813 = vld.sshfl [vmem:[#allocation1 + $0x10] sm:$0xff pattern:$0x75316420]
      %4814 = vst [vmem:[%s4761] ss:$2 sm:$0xff] %v4715
      %4815 = vst [vmem:[%s4763] ss:$2 sm:$0xff] %v4716
      %4816 = vst [vmem:[%s4765] ss:$2 sm:$0xff] %v4717
      %v4817 = vld.sshfl [vmem:[#allocation1 + $0x20] sm:$0xff pattern:$0x75316420]
      %v4818 = vld.sshfl [vmem:[#allocation1 + $0x30] sm:$0xff pattern:$0x75316420]
      %v4843 = vsel %vm3457, %v4760, 0.0
      %v4844 = vadd.f32 %v4759, %v4843
      %v4845 = vadd.f32 %v4844, %v4767
      %v4846 = vsel %vm3457, %v4768, 0.0
      %v4847 = vadd.f32 %v4845, %v4846
      %v4848 = vadd.f32 %v4847, %v4772
      %v4849 = vsel %vm3457, %v4773, 0.0
      %v4850 = vadd.f32 %v4848, %v4849
      %v4851 = vadd.f32 %v4850, %v4777
      %v4852 = vsel %vm3457, %v4778, 0.0
      %v4853 = vadd.f32 %v4851, %v4852
      %v4854 = vadd.f32 %v4853, %v4782
      %v4855 = vsel %vm3457, %v4783, 0.0
      %v4856 = vadd.f32 %v4854, %v4855
      %v4857 = vadd.f32 %v4856, %v4787
      %v4858 = vsel %vm3457, %v4788, 0.0
      %v4859 = vadd.f32 %v4857, %v4858
      %v4860 = vadd.f32 %v4859, %v4792
      %v4861 = vsel %vm3457, %v4793, 0.0
      %v4862 = vadd.f32 %v4860, %v4861
      %v4863 = vadd.f32 %v4862, %v4797
      %v4864 = vsel %vm3457, %v4798, 0.0
      %v4865 = vadd.f32 %v4863, %v4864
      %v4866 = vadd.f32 %v4865, %v4802
      %v4867 = vsel %vm3457, %v4803, 0.0
      %v4868 = vadd.f32 %v4866, %v4867
      %v4869 = vadd.f32 %v4868, %v4807
      %v4870 = vsel %vm3457, %v4808, 0.0
      %v4871 = vadd.f32 %v4869, %v4870
      %v4872 = vadd.f32 %v4871, %v4812
      %v4873 = vsel %vm3457, %v4813, 0.0
      %v4874 = vadd.f32 %v4872, %v4873
      %v4875 = vadd.f32 %v4874, %v4817
      %v4876 = vsel %vm3457, %v4818, 0.0
      %v4877 = vadd.f32 %v4875, %v4876
      %v4878 = vrot.slane %v4877, 4
      %v4879 = vadd.f32 %v4877, %v4878
      %v4880 = vrot.slane %v4879, 2
      %v4881 = vadd.f32 %v4879, %v4880
      %v4882 = vrot.slane %v4881, 1
      %v4883 = vadd.f32 %v4881, %v4882
      %4884 = vst [vmem:[%s265] sm:$0x1] %v4681
      %4885 = vst [vmem:[%s268] sm:$0x1] %v4883
      %p4886 = scmp.lt.s32.totalorder %s18, 1
      %s4887 = scalar_select %p4886, %s18, 1
      %s4888 = smul.addr %s4887, 24
      %s4889 = smul.addr %s4888, 8
      %s4890 = scalar_lea.vmem %s4, %s4889
      %p4891 = scmp.lt.s32.totalorder %s18, 1
      %s4892 = scalar_select %p4891, %s18, 1
      %s4893 = scalar_lea.vmem %s5, %s4892
      %p4894 = scmp.lt.s32.totalorder %s18, 1
      %s4895 = scalar_select %p4894, %s18, 1
      %s4896 = scalar_lea.vmem %s6, %s4895
      // Predicated region
      $region37: #{discriminator_forward.2} parent=35 // pred_check
        %p4897 = pneg %p125
      $region38: #{discriminator_forward.2} parent=35 // pred_check_branch
        %4899 = sbr.rel (%p4897) target = $region40
      $region39: #{discriminator_forward.2} parent=35 // pred_region
        _
      $region40: #{discriminator_forward.2} parent=35 // pred_fallthru
        _
      // Predicated region
      $region41: #{discriminator_forward.2} parent=35 // pred_check
        %p4900 = pneg %p151
      $region42: #{discriminator_forward.2} parent=35 // pred_check_branch
        %4902 = sbr.rel (%p4900) target = $region44
      $region43: #{discriminator_forward.2} parent=35 // pred_region
        _
      $region44: #{discriminator_forward.2} parent=35 // pred_fallthru
        _
      // Predicated region
      $region45: #{discriminator_forward.2} parent=35 // pred_check
        %p4903 = pneg %p177
      $region46: #{discriminator_forward.2} parent=35 // pred_check_branch
        %4905 = sbr.rel (%p4903) target = $region48
      $region47: #{discriminator_forward.2} parent=35 // pred_region
        _
      $region48: #{discriminator_forward.2} parent=35 // pred_fallthru
        _
    $region36: #{discriminator_forward.2} parent=5 // pred_fallthru
      _
    %p4906 = scmp.le.s32.totalorder 2, %s13
    // Predicated region
    $region49: #{discriminator_forward.2} parent=5 // pred_check
      %p4907 = pneg %p4906
    $region50: #{discriminator_forward.2} parent=5 // pred_check_branch
      %4909 = sbr.rel (%p4907) target = $region52
    $region51: #{discriminator_forward.2} parent=5 // pred_region
      %s4910 = ssub.s32 %s13, 2
      // Predicated region
      $region53: #{discriminator_forward.2} parent=51 // pred_check
        %p4911 = pneg %p131
      $region54: #{discriminator_forward.2} parent=51 // pred_check_branch
        %4913 = sbr.rel (%p4911) target = $region56
      $region55: #{discriminator_forward.2} parent=51 // pred_region
        %p4914 = scmp.lt.s32.totalorder %s19, 1
        %s4915 = scalar_select %p4914, %s19, 1
        %s4916 = smul.addr %s4915, 24
        %s4917 = smul.addr %s4916, 8
        %s4918 = scalar_lea.vmem %s4, %s4917
      $region56: #{discriminator_forward.2} parent=51 // pred_fallthru
        _
      // Predicated region
      $region57: #{discriminator_forward.2} parent=51 // pred_check
        %p4919 = pneg %p157
      $region58: #{discriminator_forward.2} parent=51 // pred_check_branch
        %4921 = sbr.rel (%p4919) target = $region60
      $region59: #{discriminator_forward.2} parent=51 // pred_region
        %p4922 = scmp.lt.s32.totalorder %s19, 1
        %s4923 = scalar_select %p4922, %s19, 1
        %s4924 = scalar_lea.vmem %s5, %s4923
      $region60: #{discriminator_forward.2} parent=51 // pred_fallthru
        _
      // Predicated region
      $region61: #{discriminator_forward.2} parent=51 // pred_check
        %p4925 = pneg %p183
      $region62: #{discriminator_forward.2} parent=51 // pred_check_branch
        %4927 = sbr.rel (%p4925) target = $region64
      $region63: #{discriminator_forward.2} parent=51 // pred_region
        %p4928 = scmp.lt.s32.totalorder %s19, 1
        %s4929 = scalar_select %p4928, %s19, 1
        %s4930 = scalar_lea.vmem %s6, %s4929
      $region64: #{discriminator_forward.2} parent=51 // pred_fallthru
        _
    $region52: #{discriminator_forward.2} parent=5 // pred_fallthru
      _
  $region6: #{discriminator_forward.2} parent=0 // loop_footer
    %s17 = sadd.s32 1, %s13
  $region7: #{discriminator_forward.2} parent=0 // loop_footer_branch
    %12 = sbr.rel target = $region3
  $region8: #{discriminator_forward.2} parent=0 // loop_exit
    _

</llo_original>
